<compile_context>
chip_gen: v7x
topology: tpu7x:2x2x1
jax: 0.10.0
libtpu: 0.0.40
codegen_flags: <defaults>
</compile_context>

<pallas_src>
import jax
import jax.numpy as jnp
from jax import lax
from jax.experimental import pallas as pl
from jax.experimental.pallas import tpu as pltpu


# -----------------------------------------------------------------------------
# Pallas kernel: 2-layer bidirectional LSTM + fc + sigmoid + mean (fully fused)
# -----------------------------------------------------------------------------
def _lstm_disc_kernel(
    xf_ref,        # (T*B, 1)    layer-0 input, forward time order   (row = t*B + b)
    xr_ref,        # (T*B, 1)    layer-0 input, reversed time order  (row = (T-1-t)*B + b)
    h0_ref,        # (2, B, 2H)  initial hidden state per layer, [fwd | bwd] along features
    c0_ref,        # (2, B, 2H)  initial cell state per layer
    wx0_ref,       # (2, 1, 8H)  layer-0 input gate weights: [0]=fwd blocks, [1]=bwd blocks
    w1_ref,        # (2, 2H, 8H) layer-1 hoisted input weights (W_A, W_B), f32
    whh_ref,       # (2, 2H, 8H) per-layer block-diagonal recurrent weights, bf16
    b_ref,         # (2, 1, 8H)  per-layer packed biases (b_ih + b_hh, both dirs)
    fcw_ref,       # (2H, 1)
    fcb_ref,       # (1, 1)
    lstm_out_ref,  # out: (T, B, 2H)
    mean_ref,      # out: (B, 1)
    gx,            # scratch (T*B, 8H)  precomputed input-side gates (both directions)
    buf0,          # scratch (T*B, 2H)  layer-0 hcat, forward-row layout
    buf0r,         # scratch (T*B, 2H)  layer-0 hcat, reversed-row layout
    buf1,          # scratch (T*B, 2H)  layer-1 hcat, forward-row layout
    buf1r,         # scratch (T*B, 2H)  layer-1 hcat, reversed-row layout
):
    T, B, H2 = lstm_out_ref.shape
    H = H2 // 2
    unroll = True if T <= 32 else 8

    # Packed gate-column order is [i | f | o | g], each block 2H = [fwd | bwd],
    # so the elementwise cell update runs on both directions at once and the
    # carried hcat/ccat align lane-for-lane with every gate block.
    def run_layer(layer, out_buf, out_buf_rev):
        w_blk = whh_ref[layer]                                 # (2H, 8H) bf16, loop-invariant

        def step(ti, carry):
            h_cat, c_cat = carry                               # (B, 2H) f32 each
            of = pl.multiple_of(ti * B, B)                     # forward-time row offset
            ob = pl.multiple_of((T - 1 - ti) * B, B)           # reversed-time row offset
            # ONE block-diagonal bf16 matmul (f32 accumulation) + ONE (B, 8H) load
            # of the precomputed input-side gates: both directions per step.
            gates = (jnp.dot(h_cat.astype(jnp.bfloat16), w_blk,
                             preferred_element_type=jnp.float32)
                     + gx[pl.ds(of, B)])                       # (B, 8H) f32
            sg = jax.nn.sigmoid(gates[:, 0:3 * H2])            # i | f | o  (both dirs)
            g = jnp.tanh(gates[:, 3 * H2:4 * H2])              # g          (both dirs)
            c_new = sg[:, H2:2 * H2] * c_cat + sg[:, 0:H2] * g
            h_new = sg[:, 2 * H2:3 * H2] * jnp.tanh(c_new)     # (B, 2H)
            # Two 64-lane stores of the same hcat: forward-row and reversed-row
            # copies (the latter feeds the layer-1 hoisted matmul / output select).
            out_buf[pl.ds(of, B)] = h_new
            out_buf_rev[pl.ds(ob, B)] = h_new
            return h_new, c_new

        lax.fori_loop(0, T, step, (h0_ref[layer], c0_ref[layer]), unroll=unroll)

    # ---- layer 0: input-side gates hoisted out of the recurrence (feature dim = 1) ----
    gx[...] = xf_ref[...] * wx0_ref[0] + xr_ref[...] * wx0_ref[1] + b_ref[0]
    run_layer(0, buf0, buf0r)

    # ---- layer 1: input-side gates hoisted as two (T*B, 2H) @ (2H, 8H) matmuls ----
    # buf0 row r = [f0[r], b0[T-1-r]], buf0r row r = [f0[T-1-r], b0[r]]; W_A / W_B
    # are packed so fwd gates land in forward-time rows and bwd gates in
    # reversed-time rows of gx (so the layer-1 step uses the same single load).
    gx[...] = (jnp.dot(buf0[...], w1_ref[0], preferred_element_type=jnp.float32)
               + jnp.dot(buf0r[...], w1_ref[1], preferred_element_type=jnp.float32)
               + b_ref[1])
    run_layer(1, buf1, buf1r)

    # ---- materialize the concatenated bidirectional output exactly once ----
    # out[t, :, :H] = layer-1 fwd h_t = buf1[t][:, :H]
    # out[t, :, H:] = layer-1 bwd h_t = buf1r[t][:, H:]
    col = lax.broadcasted_iota(jnp.int32, (T * B, H2), 1)
    out_flat = jnp.where(col < H, buf1[...], buf1r[...])       # (T*B, 2H), lane select only
    lstm_out_ref[...] = out_flat.reshape(T, B, H2)

    # ---- epilogue: fc(2H -> 1) as a matmul, sigmoid, mean over time ----
    logits = (jnp.dot(out_flat, fcw_ref[...], preferred_element_type=jnp.float32)
              + fcb_ref[...])                                   # (T*B, 1)
    probs = jax.nn.sigmoid(logits).reshape(T, B, 1)
    mean_ref[...] = jnp.mean(probs, axis=0)                     # (B, 1)


# -----------------------------------------------------------------------------
# Wrapper (glue: batch padding, weight packing, layout plumbing)
# -----------------------------------------------------------------------------
def lstm_discriminator_forward(x, state, params, hidden):
    """x: (B, seq, num_feats)   state: (h0, c0) each (4, B, hidden)."""
    H = hidden
    H2, H4, H8 = 2 * H, 4 * H, 8 * H
    B = x.shape[0]
    x_seq = x.reshape(B, -1, 1).astype(jnp.float32)     # matches torch reshape(B,-1,1)
    T = x_seq.shape[1]
    h0, c0 = state
    h0 = h0.astype(jnp.float32)
    c0 = c0.astype(jnp.float32)

    assert params["w_ih_0_0"].shape[1] == 1, "layer-0 input feature dim must be 1"

    # Pad batch to the f32 sublane height (8) so every (B, *) tile is full.
    Bp = max(8, ((B + 7) // 8) * 8)
    if Bp != B:
        x_seq = jnp.pad(x_seq, ((0, Bp - B), (0, 0), (0, 0)))
        h0 = jnp.pad(h0, ((0, 0), (0, Bp - B), (0, 0)))
        c0 = jnp.pad(c0, ((0, 0), (0, Bp - B), (0, 0)))

    # ---- packed gate-column layout: [i | f | o | g], each 2H wide = [fwd | bwd] ----
    def pack_cols(wf, wb):
        """wf/wb: (..., 4H) with PyTorch gate order [i, f, g, o] along the last axis."""
        return jnp.concatenate(
            [wf[..., 0:H], wb[..., 0:H],                       # i
             wf[..., H:2 * H], wb[..., H:2 * H],               # f
             wf[..., 3 * H:4 * H], wb[..., 3 * H:4 * H],       # o
             wf[..., 2 * H:3 * H], wb[..., 2 * H:3 * H]],      # g
            axis=-1)

    f32 = lambda a: a.astype(jnp.float32)
    z4 = jnp.zeros((H4,), jnp.float32)
    zH4 = jnp.zeros((H, H4), jnp.float32)

    # Layer-0 input gate weights (input feature dim == 1): fwd weights multiply
    # x[t] (fwd blocks), bwd weights multiply x[T-1-t] (bwd blocks).
    wx0 = jnp.stack([
        pack_cols(f32(params["w_ih_0_0"][:, 0]), z4),
        pack_cols(z4, f32(params["w_ih_0_1"][:, 0])),
    ]).reshape(2, 1, H8)

    # Per-layer combined biases (b_ih + b_hh), both directions.
    bias = jnp.stack([
        pack_cols(f32(params[f"b_ih_{l}_0"] + params[f"b_hh_{l}_0"]),
                  f32(params[f"b_ih_{l}_1"] + params[f"b_hh_{l}_1"]))
        for l in range(2)]).reshape(2, 1, H8)

    # Block-diagonal recurrent weights: rows 0:H feed only the fwd gate blocks,
    # rows H:2H feed only the bwd gate blocks -> ONE (B,2H)@(2H,8H) matmul/step.
    whh_blk = jnp.stack([
        jnp.concatenate([pack_cols(f32(params[f"w_hh_{l}_0"]).T, zH4),
                         pack_cols(zH4, f32(params[f"w_hh_{l}_1"]).T)], axis=0)
        for l in range(2)]).astype(jnp.bfloat16)               # (2, 2H, 8H)

    # Layer-1 hoisted input weights arranged so gx1 = buf0 @ W_A + buf0r @ W_B + b1
    # yields fwd gates in forward-time rows and bwd gates in reversed-time rows.
    w1f = f32(params["w_ih_1_0"]).T                            # (2H, 4H) dir 0 (forward)
    w1b = f32(params["w_ih_1_1"]).T                            # (2H, 4H) dir 1 (backward)
    W_A = jnp.concatenate([pack_cols(w1f[:H], zH4), pack_cols(zH4, w1b[H:])], axis=0)
    W_B = jnp.concatenate([pack_cols(zH4, w1b[:H]), pack_cols(w1f[H:], zH4)], axis=0)
    w1 = jnp.stack([W_A, W_B])                                 # (2, 2H, 8H) f32

    fcw = f32(params["fc_w"]).reshape(1, H2).T                 # (2H, 1)
    fcb = f32(params["fc_b"]).reshape(1, 1)

    # Initial states packed per layer as [fwd | bwd] along the feature axis.
    h0cat = jnp.stack([jnp.concatenate([h0[0], h0[1]], -1),
                       jnp.concatenate([h0[2], h0[3]], -1)])   # (2, Bp, 2H)
    c0cat = jnp.stack([jnp.concatenate([c0[0], c0[1]], -1),
                       jnp.concatenate([c0[2], c0[3]], -1)])

    # Time-major, batch-flattened layer-0 input (forward and time-reversed copies).
    x_tm = jnp.transpose(x_seq, (1, 0, 2))                     # (T, Bp, 1)
    x_fwd = x_tm.reshape(T * Bp, 1)
    x_rev = jnp.flip(x_tm, axis=0).reshape(T * Bp, 1)

    vmem = pl.BlockSpec(memory_space=pltpu.MemorySpace.VMEM)

    # VMEM budget: everything resident once (no grid pipelining); pad each array's
    # last two dims to the (8, 128) tile; cap at the actual device VMEM (v7x: 64 MiB).
    def _bytes(shape, itemsize=4):
        lead = 1
        for s in shape[:-2]:
            lead *= s
        rows = -(-shape[-2] // 8) * 8
        cols = -(-shape[-1] // 128) * 128
        return itemsize * lead * rows * cols

    resident = (
        2 * _bytes((T * Bp, 1)) + 2 * _bytes((2, Bp, H2))
        + 2 * _bytes((2, 1, H8)) + _bytes((2, H2, H8))
        + _bytes((2, H2, H8), 2)                               # bf16 recurrent weights
        + _bytes((H2, 1)) + _bytes((1, 1))
        + _bytes((T, Bp, H2)) + _bytes((Bp, 1))
        + _bytes((T * Bp, H8))                                 # gx slab
        + 4 * _bytes((T * Bp, H2)))                            # buf0/buf0r/buf1/buf1r

    hw_vmem = 64 * 1024 * 1024                                 # safe floor (v7x per-TC)
    try:
        hw_vmem = int(getattr(pltpu.get_tpu_info(), "vmem_capacity_bytes", hw_vmem))
    except Exception:
        pass
    vmem_limit = int(min(int(0.9 * hw_vmem), max(32 * 1024 * 1024, 2 * resident)))

    lstm_out_tm, mean = pl.pallas_call(
        _lstm_disc_kernel,
        out_shape=(
            jax.ShapeDtypeStruct((T, Bp, H2), jnp.float32),
            jax.ShapeDtypeStruct((Bp, 1), jnp.float32),
        ),
        in_specs=[vmem] * 10,
        out_specs=(vmem, vmem),
        scratch_shapes=[
            pltpu.VMEM((T * Bp, H8), jnp.float32),             # gx (both dirs, packed)
            pltpu.VMEM((T * Bp, H2), jnp.float32),             # buf0
            pltpu.VMEM((T * Bp, H2), jnp.float32),             # buf0_rev
            pltpu.VMEM((T * Bp, H2), jnp.float32),             # buf1
            pltpu.VMEM((T * Bp, H2), jnp.float32),             # buf1_rev
        ],
        compiler_params=pltpu.CompilerParams(vmem_limit_bytes=vmem_limit),
    )(x_fwd, x_rev, h0cat, c0cat, wx0, w1, whh_blk, bias, fcw, fcb)

    lstm_out = jnp.transpose(lstm_out_tm, (1, 0, 2))[:B]        # (B, T, 2H)
    out = mean.reshape(Bp)[:B]                                  # (B,)
    return out, lstm_out


# -----------------------------------------------------------------------------
# Deterministic parameter init (same shapes as the PyTorch module's __init__)
# -----------------------------------------------------------------------------
def make_params(key, num_feats, hidden):
    H = hidden
    k = 1.0 / float(jnp.sqrt(jnp.float32(H)))
    keys = iter(jax.random.split(key, 32))

    def u(shape):
        return jax.random.uniform(next(keys), shape, jnp.float32, -k, k)

    params = {}
    for layer in range(2):
        in_dim = num_feats if layer == 0 else 2 * H
        for d in range(2):
            params[f"w_ih_{layer}_{d}"] = u((4 * H, in_dim))
            params[f"w_hh_{layer}_{d}"] = u((4 * H, H))
            params[f"b_ih_{layer}_{d}"] = u((4 * H,))
            params[f"b_hh_{layer}_{d}"] = u((4 * H,))
    params["fc_w"] = u((1, 2 * H))
    params["fc_b"] = u((1,))
    return params


# -----------------------------------------------------------------------------
# Pure-JAX reference (mirrors PyTorch LSTM semantics) for a correctness check
# -----------------------------------------------------------------------------
def reference_forward(x, state, params, hidden):
    H = hidden
    B = x.shape[0]
    x_seq = x.reshape(B, -1, 1).astype(jnp.float32)
    T = x_seq.shape[1]
    h0, c0 = state

    def run_dir(inp, wih, whh, bih, bhh, h, c, reverse):
        outs = [None] * T
        order = range(T - 1, -1, -1) if reverse else range(T)
        for t in order:
            g = inp[:, t, :] @ wih.T + h @ whh.T + bih + bhh
            i = jax.nn.sigmoid(g[:, :H])
            f = jax.nn.sigmoid(g[:, H:2 * H])
            gg = jnp.tanh(g[:, 2 * H:3 * H])
            o = jax.nn.sigmoid(g[:, 3 * H:])
            c = f * c + i * gg
            h = o * jnp.tanh(c)
            outs[t] = h
        return jnp.stack(outs, axis=1)                   # (B, T, H)

    layer_in = x_seq
    for layer in range(2):
        outs = []
        for d in range(2):
            idx = 2 * layer + d
            outs.append(
                run_dir(
                    layer_in,
                    params[f"w_ih_{layer}_{d}"], params[f"w_hh_{layer}_{d}"],
                    params[f"b_ih_{layer}_{d}"], params[f"b_hh_{layer}_{d}"],
                    h0[idx], c0[idx], reverse=(d == 1),
                )
            )
        layer_in = jnp.concatenate(outs, axis=-1)
    lstm_out = layer_in                                   # (B, T, 2H)
    logits = lstm_out @ params["fc_w"].T + params["fc_b"] # (B, T, 1)
    probs = jax.nn.sigmoid(logits)
    out = jnp.mean(probs, axis=(1, 2))
    return out, lstm_out


if __name__ == "__main__":
    # B = 8 fills the f32 sublane height; num_feats must be 1 (the module
    # reshapes the input to a single feature per timestep).
    B, SEQ, NUM_FEATS, HIDDEN = 8, 8, 1, 32

    key = jax.random.PRNGKey(0)
    kx, kp = jax.random.split(key)
    x = jax.random.normal(kx, (B, SEQ, NUM_FEATS), jnp.float32)
    params = make_params(kp, NUM_FEATS, HIDDEN)

    # init_hidden equivalent: zero states, shape (num_layers*2, B, hidden)
    h0 = jnp.zeros((4, B, HIDDEN), jnp.float32)
    c0 = jnp.zeros((4, B, HIDDEN), jnp.float32)

    out, lstm_out = lstm_discriminator_forward(x, (h0, c0), params, HIDDEN)
    jax.block_until_ready((out, lstm_out))

    ref_out, ref_lstm = reference_forward(x, (h0, c0), params, HIDDEN)
    assert out.shape == (B,) and lstm_out.shape == (B, SEQ * NUM_FEATS, 2 * HIDDEN)
    # Recurrent matmuls run in bf16 (f32 accumulation), so tolerances are
    # slightly relaxed vs. the pure-f32 reference.
    assert jnp.allclose(out, ref_out, atol=5e-3), (out, ref_out)
    assert jnp.allclose(lstm_out, ref_lstm, atol=2e-2)

    print("KERNEL_OK")
</pallas_src>

<mosaic_0001>
module attributes {stable_mosaic.version = 11 : i64} {
  func.func @_lstm_disc_kernel(%arg0: memref<64x1xf32, #tpu.memory_space<vmem>>, %arg1: memref<64x1xf32, #tpu.memory_space<vmem>>, %arg2: memref<2x8x64xf32, #tpu.memory_space<vmem>>, %arg3: memref<2x8x64xf32, #tpu.memory_space<vmem>>, %arg4: memref<2x1x256xf32, #tpu.memory_space<vmem>>, %arg5: memref<2x64x256xf32, #tpu.memory_space<vmem>>, %arg6: memref<2x64x256xbf16, #tpu.memory_space<vmem>>, %arg7: memref<2x1x256xf32, #tpu.memory_space<vmem>>, %arg8: memref<64x1xf32, #tpu.memory_space<vmem>>, %arg9: memref<1x1xf32, #tpu.memory_space<vmem>>, %arg10: memref<8x8x64xf32, #tpu.memory_space<vmem>>, %arg11: memref<8x1xf32, #tpu.memory_space<vmem>>, %arg12: memref<64x256xf32, #tpu.memory_space<vmem>>, %arg13: memref<64x64xf32, #tpu.memory_space<vmem>>, %arg14: memref<64x64xf32, #tpu.memory_space<vmem>>, %arg15: memref<64x64xf32, #tpu.memory_space<vmem>>, %arg16: memref<64x64xf32, #tpu.memory_space<vmem>>) attributes {dimension_semantics = [], scalar_prefetch = 0 : i64, scratch_operands = 5 : i64, tpu.core_type = #tpu.core_type<tc>} {
    %c0 = arith.constant 0 : index
    %c0_0 = arith.constant 0 : index
    %0 = vector.load %arg0[%c0, %c0_0] : memref<64x1xf32, #tpu.memory_space<vmem>>, vector<64x1xf32>
    %c0_1 = arith.constant 0 : index
    %c0_2 = arith.constant 0 : index
    %c0_3 = arith.constant 0 : index
    %1 = vector.load %arg4[%c0_1, %c0_2, %c0_3] : memref<2x1x256xf32, #tpu.memory_space<vmem>>, vector<1x1x256xf32>
    %2 = vector.shape_cast %1 : vector<1x1x256xf32> to vector<1x256xf32>
    %3 = vector.broadcast %0 : vector<64x1xf32> to vector<64x256xf32>
    %4 = vector.broadcast %2 : vector<1x256xf32> to vector<64x256xf32>
    %5 = arith.mulf %3, %4 : vector<64x256xf32>
    %c0_4 = arith.constant 0 : index
    %c0_5 = arith.constant 0 : index
    %6 = vector.load %arg1[%c0_4, %c0_5] : memref<64x1xf32, #tpu.memory_space<vmem>>, vector<64x1xf32>
    %c1 = arith.constant 1 : index
    %c0_6 = arith.constant 0 : index
    %c0_7 = arith.constant 0 : index
    %7 = vector.load %arg4[%c1, %c0_6, %c0_7] : memref<2x1x256xf32, #tpu.memory_space<vmem>>, vector<1x1x256xf32>
    %8 = vector.shape_cast %7 : vector<1x1x256xf32> to vector<1x256xf32>
    %9 = vector.broadcast %6 : vector<64x1xf32> to vector<64x256xf32>
    %10 = vector.broadcast %8 : vector<1x256xf32> to vector<64x256xf32>
    %11 = arith.mulf %9, %10 : vector<64x256xf32>
    %12 = arith.addf %5, %11 : vector<64x256xf32>
    %c0_8 = arith.constant 0 : index
    %c0_9 = arith.constant 0 : index
    %c0_10 = arith.constant 0 : index
    %13 = vector.load %arg7[%c0_8, %c0_9, %c0_10] : memref<2x1x256xf32, #tpu.memory_space<vmem>>, vector<1x1x256xf32>
    %14 = vector.shape_cast %13 : vector<1x1x256xf32> to vector<1x256xf32>
    %15 = vector.broadcast %14 : vector<1x256xf32> to vector<64x256xf32>
    %16 = arith.addf %12, %15 : vector<64x256xf32>
    %c0_11 = arith.constant 0 : index
    %c0_12 = arith.constant 0 : index
    %17 = vector.load %arg12[%c0_11, %c0_12] : memref<64x256xf32, #tpu.memory_space<vmem>>, vector<64x256xf32>
    tpu.vector_store %arg12[%c0_11, %c0_12], %16 {strides = array<i32>} : memref<64x256xf32, #tpu.memory_space<vmem>>, vector<64x256xf32>,
    %c0_13 = arith.constant 0 : index
    %c0_14 = arith.constant 0 : index
    %c0_15 = arith.constant 0 : index
    %18 = vector.load %arg6[%c0_13, %c0_14, %c0_15] : memref<2x64x256xbf16, #tpu.memory_space<vmem>>, vector<1x64x256xbf16>
    %19 = vector.shape_cast %18 : vector<1x64x256xbf16> to vector<64x256xbf16>
    %c0_16 = arith.constant 0 : index
    %c0_17 = arith.constant 0 : index
    %c0_18 = arith.constant 0 : index
    %20 = vector.load %arg2[%c0_16, %c0_17, %c0_18] : memref<2x8x64xf32, #tpu.memory_space<vmem>>, vector<1x8x64xf32>
    %21 = vector.shape_cast %20 : vector<1x8x64xf32> to vector<8x64xf32>
    %c0_19 = arith.constant 0 : index
    %c0_20 = arith.constant 0 : index
    %c0_21 = arith.constant 0 : index
    %22 = vector.load %arg3[%c0_19, %c0_20, %c0_21] : memref<2x8x64xf32, #tpu.memory_space<vmem>>, vector<1x8x64xf32>
    %23 = vector.shape_cast %22 : vector<1x8x64xf32> to vector<8x64xf32>
    %c0_i32 = arith.constant 0 : i32
    %c8_i32 = arith.constant 8 : i32
    %24 = arith.muli %c0_i32, %c8_i32 : i32
    %25 = tpu.assume_multiple %24, 8 : i32
    %c7_i32 = arith.constant 7 : i32
    %26 = arith.subi %c7_i32, %c0_i32 : i32
    %c8_i32_22 = arith.constant 8 : i32
    %27 = arith.muli %26, %c8_i32_22 : i32
    %28 = tpu.assume_multiple %27, 8 : i32
    %29 = arith.truncf %21 : vector<8x64xf32> to vector<8x64xbf16>
    %cst = arith.constant dense<0.000000e+00> : vector<8x256xf32>
    %30 = tpu.matmul %29, %19, %cst {dimension_numbers = #tpu.dot_dimension_numbers<[1], [0], [0], [1], [0, 0, 1, 1], [], []>} : vector<8x64xbf16>, vector<64x256xbf16>, vector<8x256xf32> -> vector<8x256xf32>
    %31 = arith.index_cast %25 : i32 to index
    %c0_23 = arith.constant 0 : index
    %32 = vector.load %arg12[%31, %c0_23] : memref<64x256xf32, #tpu.memory_space<vmem>>, vector<8x256xf32>
    %33 = arith.addf %30, %32 : vector<8x256xf32>
    %34 = vector.extract_strided_slice %33 {offsets = [0, 0], sizes = [8, 192], strides = [1, 1]} : vector<8x256xf32> to vector<8x192xf32>
    %35 = arith.negf %34 : vector<8x192xf32>
    %36 = math.exp %35 : vector<8x192xf32>
    %cst_24 = arith.constant 1.000000e+00 : f32
    %37 = vector.broadcast %cst_24 : f32 to vector<8x192xf32>
    %38 = arith.addf %37, %36 : vector<8x192xf32>
    %39 = arith.divf %37, %38 : vector<8x192xf32>
    %40 = vector.extract_strided_slice %33 {offsets = [0, 192], sizes = [8, 64], strides = [1, 1]} : vector<8x256xf32> to vector<8x64xf32>
    %41 = math.tanh %40 : vector<8x64xf32>
    %42 = vector.extract_strided_slice %39 {offsets = [0, 64], sizes = [8, 64], strides = [1, 1]} : vector<8x192xf32> to vector<8x64xf32>
    %43 = arith.mulf %42, %23 : vector<8x64xf32>
    %44 = vector.extract_strided_slice %39 {offsets = [0, 0], sizes = [8, 64], strides = [1, 1]} : vector<8x192xf32> to vector<8x64xf32>
    %45 = arith.mulf %44, %41 : vector<8x64xf32>
    %46 = arith.addf %43, %45 : vector<8x64xf32>
    %47 = vector.extract_strided_slice %39 {offsets = [0, 128], sizes = [8, 64], strides = [1, 1]} : vector<8x192xf32> to vector<8x64xf32>
    %48 = math.tanh %46 : vector<8x64xf32>
    %49 = arith.mulf %47, %48 : vector<8x64xf32>
    %50 = arith.index_cast %25 : i32 to index
    %c0_25 = arith.constant 0 : index
    %51 = vector.load %arg13[%50, %c0_25] : memref<64x64xf32, #tpu.memory_space<vmem>>, vector<8x64xf32>
    tpu.vector_store %arg13[%50, %c0_25], %49 {strides = array<i32>} : memref<64x64xf32, #tpu.memory_space<vmem>>, vector<8x64xf32>,
    %52 = arith.index_cast %28 : i32 to index
    %c0_26 = arith.constant 0 : index
    %53 = vector.load %arg14[%52, %c0_26] : memref<64x64xf32, #tpu.memory_space<vmem>>, vector<8x64xf32>
    tpu.vector_store %arg14[%52, %c0_26], %49 {strides = array<i32>} : memref<64x64xf32, #tpu.memory_space<vmem>>, vector<8x64xf32>,
    %c1_i32 = arith.constant 1 : i32
    %c8_i32_27 = arith.constant 8 : i32
    %54 = arith.muli %c1_i32, %c8_i32_27 : i32
    %55 = tpu.assume_multiple %54, 8 : i32
    %c7_i32_28 = arith.constant 7 : i32
    %56 = arith.subi %c7_i32_28, %c1_i32 : i32
    %c8_i32_29 = arith.constant 8 : i32
    %57 = arith.muli %56, %c8_i32_29 : i32
    %58 = tpu.assume_multiple %57, 8 : i32
    %59 = arith.truncf %49 : vector<8x64xf32> to vector<8x64xbf16>
    %cst_30 = arith.constant dense<0.000000e+00> : vector<8x256xf32>
    %60 = tpu.matmul %59, %19, %cst_30 {dimension_numbers = #tpu.dot_dimension_numbers<[1], [0], [0], [1], [0, 0, 1, 1], [], []>} : vector<8x64xbf16>, vector<64x256xbf16>, vector<8x256xf32> -> vector<8x256xf32>
    %61 = arith.index_cast %55 : i32 to index
    %c0_31 = arith.constant 0 : index
    %62 = vector.load %arg12[%61, %c0_31] : memref<64x256xf32, #tpu.memory_space<vmem>>, vector<8x256xf32>
    %63 = arith.addf %60, %62 : vector<8x256xf32>
    %64 = vector.extract_strided_slice %63 {offsets = [0, 0], sizes = [8, 192], strides = [1, 1]} : vector<8x256xf32> to vector<8x192xf32>
    %65 = arith.negf %64 : vector<8x192xf32>
    %66 = math.exp %65 : vector<8x192xf32>
    %cst_32 = arith.constant 1.000000e+00 : f32
    %67 = vector.broadcast %cst_32 : f32 to vector<8x192xf32>
    %68 = arith.addf %67, %66 : vector<8x192xf32>
    %69 = arith.divf %67, %68 : vector<8x192xf32>
    %70 = vector.extract_strided_slice %63 {offsets = [0, 192], sizes = [8, 64], strides = [1, 1]} : vector<8x256xf32> to vector<8x64xf32>
    %71 = math.tanh %70 : vector<8x64xf32>
    %72 = vector.extract_strided_slice %69 {offsets = [0, 64], sizes = [8, 64], strides = [1, 1]} : vector<8x192xf32> to vector<8x64xf32>
    %73 = arith.mulf %72, %46 : vector<8x64xf32>
    %74 = vector.extract_strided_slice %69 {offsets = [0, 0], sizes = [8, 64], strides = [1, 1]} : vector<8x192xf32> to vector<8x64xf32>
    %75 = arith.mulf %74, %71 : vector<8x64xf32>
    %76 = arith.addf %73, %75 : vector<8x64xf32>
    %77 = vector.extract_strided_slice %69 {offsets = [0, 128], sizes = [8, 64], strides = [1, 1]} : vector<8x192xf32> to vector<8x64xf32>
    %78 = math.tanh %76 : vector<8x64xf32>
    %79 = arith.mulf %77, %78 : vector<8x64xf32>
    %80 = arith.index_cast %55 : i32 to index
    %c0_33 = arith.constant 0 : index
    %81 = vector.load %arg13[%80, %c0_33] : memref<64x64xf32, #tpu.memory_space<vmem>>, vector<8x64xf32>
    tpu.vector_store %arg13[%80, %c0_33], %79 {strides = array<i32>} : memref<64x64xf32, #tpu.memory_space<vmem>>, vector<8x64xf32>,
    %82 = arith.index_cast %58 : i32 to index
    %c0_34 = arith.constant 0 : index
    %83 = vector.load %arg14[%82, %c0_34] : memref<64x64xf32, #tpu.memory_space<vmem>>, vector<8x64xf32>
    tpu.vector_store %arg14[%82, %c0_34], %79 {strides = array<i32>} : memref<64x64xf32, #tpu.memory_space<vmem>>, vector<8x64xf32>,
    %c2_i32 = arith.constant 2 : i32
    %c8_i32_35 = arith.constant 8 : i32
    %84 = arith.muli %c2_i32, %c8_i32_35 : i32
    %85 = tpu.assume_multiple %84, 8 : i32
    %c7_i32_36 = arith.constant 7 : i32
    %86 = arith.subi %c7_i32_36, %c2_i32 : i32
    %c8_i32_37 = arith.constant 8 : i32
    %87 = arith.muli %86, %c8_i32_37 : i32
    %88 = tpu.assume_multiple %87, 8 : i32
    %89 = arith.truncf %79 : vector<8x64xf32> to vector<8x64xbf16>
    %cst_38 = arith.constant dense<0.000000e+00> : vector<8x256xf32>
    %90 = tpu.matmul %89, %19, %cst_38 {dimension_numbers = #tpu.dot_dimension_numbers<[1], [0], [0], [1], [0, 0, 1, 1], [], []>} : vector<8x64xbf16>, vector<64x256xbf16>, vector<8x256xf32> -> vector<8x256xf32>
    %91 = arith.index_cast %85 : i32 to index
    %c0_39 = arith.constant 0 : index
    %92 = vector.load %arg12[%91, %c0_39] : memref<64x256xf32, #tpu.memory_space<vmem>>, vector<8x256xf32>
    %93 = arith.addf %90, %92 : vector<8x256xf32>
    %94 = vector.extract_strided_slice %93 {offsets = [0, 0], sizes = [8, 192], strides = [1, 1]} : vector<8x256xf32> to vector<8x192xf32>
    %95 = arith.negf %94 : vector<8x192xf32>
    %96 = math.exp %95 : vector<8x192xf32>
    %cst_40 = arith.constant 1.000000e+00 : f32
    %97 = vector.broadcast %cst_40 : f32 to vector<8x192xf32>
    %98 = arith.addf %97, %96 : vector<8x192xf32>
    %99 = arith.divf %97, %98 : vector<8x192xf32>
    %100 = vector.extract_strided_slice %93 {offsets = [0, 192], sizes = [8, 64], strides = [1, 1]} : vector<8x256xf32> to vector<8x64xf32>
    %101 = math.tanh %100 : vector<8x64xf32>
    %102 = vector.extract_strided_slice %99 {offsets = [0, 64], sizes = [8, 64], strides = [1, 1]} : vector<8x192xf32> to vector<8x64xf32>
    %103 = arith.mulf %102, %76 : vector<8x64xf32>
    %104 = vector.extract_strided_slice %99 {offsets = [0, 0], sizes = [8, 64], strides = [1, 1]} : vector<8x192xf32> to vector<8x64xf32>
    %105 = arith.mulf %104, %101 : vector<8x64xf32>
    %106 = arith.addf %103, %105 : vector<8x64xf32>
    %107 = vector.extract_strided_slice %99 {offsets = [0, 128], sizes = [8, 64], strides = [1, 1]} : vector<8x192xf32> to vector<8x64xf32>
    %108 = math.tanh %106 : vector<8x64xf32>
    %109 = arith.mulf %107, %108 : vector<8x64xf32>
    %110 = arith.index_cast %85 : i32 to index
    %c0_41 = arith.constant 0 : index
    %111 = vector.load %arg13[%110, %c0_41] : memref<64x64xf32, #tpu.memory_space<vmem>>, vector<8x64xf32>
    tpu.vector_store %arg13[%110, %c0_41], %109 {strides = array<i32>} : memref<64x64xf32, #tpu.memory_space<vmem>>, vector<8x64xf32>,
    %112 = arith.index_cast %88 : i32 to index
    %c0_42 = arith.constant 0 : index
    %113 = vector.load %arg14[%112, %c0_42] : memref<64x64xf32, #tpu.memory_space<vmem>>, vector<8x64xf32>
    tpu.vector_store %arg14[%112, %c0_42], %109 {strides = array<i32>} : memref<64x64xf32, #tpu.memory_space<vmem>>, vector<8x64xf32>,
    %c3_i32 = arith.constant 3 : i32
    %c8_i32_43 = arith.constant 8 : i32
    %114 = arith.muli %c3_i32, %c8_i32_43 : i32
    %115 = tpu.assume_multiple %114, 8 : i32
    %c7_i32_44 = arith.constant 7 : i32
    %116 = arith.subi %c7_i32_44, %c3_i32 : i32
    %c8_i32_45 = arith.constant 8 : i32
    %117 = arith.muli %116, %c8_i32_45 : i32
    %118 = tpu.assume_multiple %117, 8 : i32
    %119 = arith.truncf %109 : vector<8x64xf32> to vector<8x64xbf16>
    %cst_46 = arith.constant dense<0.000000e+00> : vector<8x256xf32>
    %120 = tpu.matmul %119, %19, %cst_46 {dimension_numbers = #tpu.dot_dimension_numbers<[1], [0], [0], [1], [0, 0, 1, 1], [], []>} : vector<8x64xbf16>, vector<64x256xbf16>, vector<8x256xf32> -> vector<8x256xf32>
    %121 = arith.index_cast %115 : i32 to index
    %c0_47 = arith.constant 0 : index
    %122 = vector.load %arg12[%121, %c0_47] : memref<64x256xf32, #tpu.memory_space<vmem>>, vector<8x256xf32>
    %123 = arith.addf %120, %122 : vector<8x256xf32>
    %124 = vector.extract_strided_slice %123 {offsets = [0, 0], sizes = [8, 192], strides = [1, 1]} : vector<8x256xf32> to vector<8x192xf32>
    %125 = arith.negf %124 : vector<8x192xf32>
    %126 = math.exp %125 : vector<8x192xf32>
    %cst_48 = arith.constant 1.000000e+00 : f32
    %127 = vector.broadcast %cst_48 : f32 to vector<8x192xf32>
    %128 = arith.addf %127, %126 : vector<8x192xf32>
    %129 = arith.divf %127, %128 : vector<8x192xf32>
    %130 = vector.extract_strided_slice %123 {offsets = [0, 192], sizes = [8, 64], strides = [1, 1]} : vector<8x256xf32> to vector<8x64xf32>
    %131 = math.tanh %130 : vector<8x64xf32>
    %132 = vector.extract_strided_slice %129 {offsets = [0, 64], sizes = [8, 64], strides = [1, 1]} : vector<8x192xf32> to vector<8x64xf32>
    %133 = arith.mulf %132, %106 : vector<8x64xf32>
    %134 = vector.extract_strided_slice %129 {offsets = [0, 0], sizes = [8, 64], strides = [1, 1]} : vector<8x192xf32> to vector<8x64xf32>
    %135 = arith.mulf %134, %131 : vector<8x64xf32>
    %136 = arith.addf %133, %135 : vector<8x64xf32>
    %137 = vector.extract_strided_slice %129 {offsets = [0, 128], sizes = [8, 64], strides = [1, 1]} : vector<8x192xf32> to vector<8x64xf32>
    %138 = math.tanh %136 : vector<8x64xf32>
    %139 = arith.mulf %137, %138 : vector<8x64xf32>
    %140 = arith.index_cast %115 : i32 to index
    %c0_49 = arith.constant 0 : index
    %141 = vector.load %arg13[%140, %c0_49] : memref<64x64xf32, #tpu.memory_space<vmem>>, vector<8x64xf32>
    tpu.vector_store %arg13[%140, %c0_49], %139 {strides = array<i32>} : memref<64x64xf32, #tpu.memory_space<vmem>>, vector<8x64xf32>,
    %142 = arith.index_cast %118 : i32 to index
    %c0_50 = arith.constant 0 : index
    %143 = vector.load %arg14[%142, %c0_50] : memref<64x64xf32, #tpu.memory_space<vmem>>, vector<8x64xf32>
    tpu.vector_store %arg14[%142, %c0_50], %139 {strides = array<i32>} : memref<64x64xf32, #tpu.memory_space<vmem>>, vector<8x64xf32>,
    %c4_i32 = arith.constant 4 : i32
    %c8_i32_51 = arith.constant 8 : i32
    %144 = arith.muli %c4_i32, %c8_i32_51 : i32
    %145 = tpu.assume_multiple %144, 8 : i32
    %c7_i32_52 = arith.constant 7 : i32
    %146 = arith.subi %c7_i32_52, %c4_i32 : i32
    %c8_i32_53 = arith.constant 8 : i32
    %147 = arith.muli %146, %c8_i32_53 : i32
    %148 = tpu.assume_multiple %147, 8 : i32
    %149 = arith.truncf %139 : vector<8x64xf32> to vector<8x64xbf16>
    %cst_54 = arith.constant dense<0.000000e+00> : vector<8x256xf32>
    %150 = tpu.matmul %149, %19, %cst_54 {dimension_numbers = #tpu.dot_dimension_numbers<[1], [0], [0], [1], [0, 0, 1, 1], [], []>} : vector<8x64xbf16>, vector<64x256xbf16>, vector<8x256xf32> -> vector<8x256xf32>
    %151 = arith.index_cast %145 : i32 to index
    %c0_55 = arith.constant 0 : index
    %152 = vector.load %arg12[%151, %c0_55] : memref<64x256xf32, #tpu.memory_space<vmem>>, vector<8x256xf32>
    %153 = arith.addf %150, %152 : vector<8x256xf32>
    %154 = vector.extract_strided_slice %153 {offsets = [0, 0], sizes = [8, 192], strides = [1, 1]} : vector<8x256xf32> to vector<8x192xf32>
    %155 = arith.negf %154 : vector<8x192xf32>
    %156 = math.exp %155 : vector<8x192xf32>
    %cst_56 = arith.constant 1.000000e+00 : f32
    %157 = vector.broadcast %cst_56 : f32 to vector<8x192xf32>
    %158 = arith.addf %157, %156 : vector<8x192xf32>
    %159 = arith.divf %157, %158 : vector<8x192xf32>
    %160 = vector.extract_strided_slice %153 {offsets = [0, 192], sizes = [8, 64], strides = [1, 1]} : vector<8x256xf32> to vector<8x64xf32>
    %161 = math.tanh %160 : vector<8x64xf32>
    %162 = vector.extract_strided_slice %159 {offsets = [0, 64], sizes = [8, 64], strides = [1, 1]} : vector<8x192xf32> to vector<8x64xf32>
    %163 = arith.mulf %162, %136 : vector<8x64xf32>
    %164 = vector.extract_strided_slice %159 {offsets = [0, 0], sizes = [8, 64], strides = [1, 1]} : vector<8x192xf32> to vector<8x64xf32>
    %165 = arith.mulf %164, %161 : vector<8x64xf32>
    %166 = arith.addf %163, %165 : vector<8x64xf32>
    %167 = vector.extract_strided_slice %159 {offsets = [0, 128], sizes = [8, 64], strides = [1, 1]} : vector<8x192xf32> to vector<8x64xf32>
    %168 = math.tanh %166 : vector<8x64xf32>
    %169 = arith.mulf %167, %168 : vector<8x64xf32>
    %170 = arith.index_cast %145 : i32 to index
    %c0_57 = arith.constant 0 : index
    %171 = vector.load %arg13[%170, %c0_57] : memref<64x64xf32, #tpu.memory_space<vmem>>, vector<8x64xf32>
    tpu.vector_store %arg13[%170, %c0_57], %169 {strides = array<i32>} : memref<64x64xf32, #tpu.memory_space<vmem>>, vector<8x64xf32>,
    %172 = arith.index_cast %148 : i32 to index
    %c0_58 = arith.constant 0 : index
    %173 = vector.load %arg14[%172, %c0_58] : memref<64x64xf32, #tpu.memory_space<vmem>>, vector<8x64xf32>
    tpu.vector_store %arg14[%172, %c0_58], %169 {strides = array<i32>} : memref<64x64xf32, #tpu.memory_space<vmem>>, vector<8x64xf32>,
    %c5_i32 = arith.constant 5 : i32
    %c8_i32_59 = arith.constant 8 : i32
    %174 = arith.muli %c5_i32, %c8_i32_59 : i32
    %175 = tpu.assume_multiple %174, 8 : i32
    %c7_i32_60 = arith.constant 7 : i32
    %176 = arith.subi %c7_i32_60, %c5_i32 : i32
    %c8_i32_61 = arith.constant 8 : i32
    %177 = arith.muli %176, %c8_i32_61 : i32
    %178 = tpu.assume_multiple %177, 8 : i32
    %179 = arith.truncf %169 : vector<8x64xf32> to vector<8x64xbf16>
    %cst_62 = arith.constant dense<0.000000e+00> : vector<8x256xf32>
    %180 = tpu.matmul %179, %19, %cst_62 {dimension_numbers = #tpu.dot_dimension_numbers<[1], [0], [0], [1], [0, 0, 1, 1], [], []>} : vector<8x64xbf16>, vector<64x256xbf16>, vector<8x256xf32> -> vector<8x256xf32>
    %181 = arith.index_cast %175 : i32 to index
    %c0_63 = arith.constant 0 : index
    %182 = vector.load %arg12[%181, %c0_63] : memref<64x256xf32, #tpu.memory_space<vmem>>, vector<8x256xf32>
    %183 = arith.addf %180, %182 : vector<8x256xf32>
    %184 = vector.extract_strided_slice %183 {offsets = [0, 0], sizes = [8, 192], strides = [1, 1]} : vector<8x256xf32> to vector<8x192xf32>
    %185 = arith.negf %184 : vector<8x192xf32>
    %186 = math.exp %185 : vector<8x192xf32>
    %cst_64 = arith.constant 1.000000e+00 : f32
    %187 = vector.broadcast %cst_64 : f32 to vector<8x192xf32>
    %188 = arith.addf %187, %186 : vector<8x192xf32>
    %189 = arith.divf %187, %188 : vector<8x192xf32>
    %190 = vector.extract_strided_slice %183 {offsets = [0, 192], sizes = [8, 64], strides = [1, 1]} : vector<8x256xf32> to vector<8x64xf32>
    %191 = math.tanh %190 : vector<8x64xf32>
    %192 = vector.extract_strided_slice %189 {offsets = [0, 64], sizes = [8, 64], strides = [1, 1]} : vector<8x192xf32> to vector<8x64xf32>
    %193 = arith.mulf %192, %166 : vector<8x64xf32>
    %194 = vector.extract_strided_slice %189 {offsets = [0, 0], sizes = [8, 64], strides = [1, 1]} : vector<8x192xf32> to vector<8x64xf32>
    %195 = arith.mulf %194, %191 : vector<8x64xf32>
    %196 = arith.addf %193, %195 : vector<8x64xf32>
    %197 = vector.extract_strided_slice %189 {offsets = [0, 128], sizes = [8, 64], strides = [1, 1]} : vector<8x192xf32> to vector<8x64xf32>
    %198 = math.tanh %196 : vector<8x64xf32>
    %199 = arith.mulf %197, %198 : vector<8x64xf32>
    %200 = arith.index_cast %175 : i32 to index
    %c0_65 = arith.constant 0 : index
    %201 = vector.load %arg13[%200, %c0_65] : memref<64x64xf32, #tpu.memory_space<vmem>>, vector<8x64xf32>
    tpu.vector_store %arg13[%200, %c0_65], %199 {strides = array<i32>} : memref<64x64xf32, #tpu.memory_space<vmem>>, vector<8x64xf32>,
    %202 = arith.index_cast %178 : i32 to index
    %c0_66 = arith.constant 0 : index
    %203 = vector.load %arg14[%202, %c0_66] : memref<64x64xf32, #tpu.memory_space<vmem>>, vector<8x64xf32>
    tpu.vector_store %arg14[%202, %c0_66], %199 {strides = array<i32>} : memref<64x64xf32, #tpu.memory_space<vmem>>, vector<8x64xf32>,
    %c6_i32 = arith.constant 6 : i32
    %c8_i32_67 = arith.constant 8 : i32
    %204 = arith.muli %c6_i32, %c8_i32_67 : i32
    %205 = tpu.assume_multiple %204, 8 : i32
    %c7_i32_68 = arith.constant 7 : i32
    %206 = arith.subi %c7_i32_68, %c6_i32 : i32
    %c8_i32_69 = arith.constant 8 : i32
    %207 = arith.muli %206, %c8_i32_69 : i32
    %208 = tpu.assume_multiple %207, 8 : i32
    %209 = arith.truncf %199 : vector<8x64xf32> to vector<8x64xbf16>
    %cst_70 = arith.constant dense<0.000000e+00> : vector<8x256xf32>
    %210 = tpu.matmul %209, %19, %cst_70 {dimension_numbers = #tpu.dot_dimension_numbers<[1], [0], [0], [1], [0, 0, 1, 1], [], []>} : vector<8x64xbf16>, vector<64x256xbf16>, vector<8x256xf32> -> vector<8x256xf32>
    %211 = arith.index_cast %205 : i32 to index
    %c0_71 = arith.constant 0 : index
    %212 = vector.load %arg12[%211, %c0_71] : memref<64x256xf32, #tpu.memory_space<vmem>>, vector<8x256xf32>
    %213 = arith.addf %210, %212 : vector<8x256xf32>
    %214 = vector.extract_strided_slice %213 {offsets = [0, 0], sizes = [8, 192], strides = [1, 1]} : vector<8x256xf32> to vector<8x192xf32>
    %215 = arith.negf %214 : vector<8x192xf32>
    %216 = math.exp %215 : vector<8x192xf32>
    %cst_72 = arith.constant 1.000000e+00 : f32
    %217 = vector.broadcast %cst_72 : f32 to vector<8x192xf32>
    %218 = arith.addf %217, %216 : vector<8x192xf32>
    %219 = arith.divf %217, %218 : vector<8x192xf32>
    %220 = vector.extract_strided_slice %213 {offsets = [0, 192], sizes = [8, 64], strides = [1, 1]} : vector<8x256xf32> to vector<8x64xf32>
    %221 = math.tanh %220 : vector<8x64xf32>
    %222 = vector.extract_strided_slice %219 {offsets = [0, 64], sizes = [8, 64], strides = [1, 1]} : vector<8x192xf32> to vector<8x64xf32>
    %223 = arith.mulf %222, %196 : vector<8x64xf32>
    %224 = vector.extract_strided_slice %219 {offsets = [0, 0], sizes = [8, 64], strides = [1, 1]} : vector<8x192xf32> to vector<8x64xf32>
    %225 = arith.mulf %224, %221 : vector<8x64xf32>
    %226 = arith.addf %223, %225 : vector<8x64xf32>
    %227 = vector.extract_strided_slice %219 {offsets = [0, 128], sizes = [8, 64], strides = [1, 1]} : vector<8x192xf32> to vector<8x64xf32>
    %228 = math.tanh %226 : vector<8x64xf32>
    %229 = arith.mulf %227, %228 : vector<8x64xf32>
    %230 = arith.index_cast %205 : i32 to index
    %c0_73 = arith.constant 0 : index
    %231 = vector.load %arg13[%230, %c0_73] : memref<64x64xf32, #tpu.memory_space<vmem>>, vector<8x64xf32>
    tpu.vector_store %arg13[%230, %c0_73], %229 {strides = array<i32>} : memref<64x64xf32, #tpu.memory_space<vmem>>, vector<8x64xf32>,
    %232 = arith.index_cast %208 : i32 to index
    %c0_74 = arith.constant 0 : index
    %233 = vector.load %arg14[%232, %c0_74] : memref<64x64xf32, #tpu.memory_space<vmem>>, vector<8x64xf32>
    tpu.vector_store %arg14[%232, %c0_74], %229 {strides = array<i32>} : memref<64x64xf32, #tpu.memory_space<vmem>>, vector<8x64xf32>,
    %c7_i32_75 = arith.constant 7 : i32
    %c8_i32_76 = arith.constant 8 : i32
    %234 = arith.muli %c7_i32_75, %c8_i32_76 : i32
    %235 = tpu.assume_multiple %234, 8 : i32
    %c7_i32_77 = arith.constant 7 : i32
    %236 = arith.subi %c7_i32_77, %c7_i32_75 : i32
    %c8_i32_78 = arith.constant 8 : i32
    %237 = arith.muli %236, %c8_i32_78 : i32
    %238 = tpu.assume_multiple %237, 8 : i32
    %239 = arith.truncf %229 : vector<8x64xf32> to vector<8x64xbf16>
    %cst_79 = arith.constant dense<0.000000e+00> : vector<8x256xf32>
    %240 = tpu.matmul %239, %19, %cst_79 {dimension_numbers = #tpu.dot_dimension_numbers<[1], [0], [0], [1], [0, 0, 1, 1], [], []>} : vector<8x64xbf16>, vector<64x256xbf16>, vector<8x256xf32> -> vector<8x256xf32>
    %241 = arith.index_cast %235 : i32 to index
    %c0_80 = arith.constant 0 : index
    %242 = vector.load %arg12[%241, %c0_80] : memref<64x256xf32, #tpu.memory_space<vmem>>, vector<8x256xf32>
    %243 = arith.addf %240, %242 : vector<8x256xf32>
    %244 = vector.extract_strided_slice %243 {offsets = [0, 0], sizes = [8, 192], strides = [1, 1]} : vector<8x256xf32> to vector<8x192xf32>
    %245 = arith.negf %244 : vector<8x192xf32>
    %246 = math.exp %245 : vector<8x192xf32>
    %cst_81 = arith.constant 1.000000e+00 : f32
    %247 = vector.broadcast %cst_81 : f32 to vector<8x192xf32>
    %248 = arith.addf %247, %246 : vector<8x192xf32>
    %249 = arith.divf %247, %248 : vector<8x192xf32>
    %250 = vector.extract_strided_slice %243 {offsets = [0, 192], sizes = [8, 64], strides = [1, 1]} : vector<8x256xf32> to vector<8x64xf32>
    %251 = math.tanh %250 : vector<8x64xf32>
    %252 = vector.extract_strided_slice %249 {offsets = [0, 64], sizes = [8, 64], strides = [1, 1]} : vector<8x192xf32> to vector<8x64xf32>
    %253 = arith.mulf %252, %226 : vector<8x64xf32>
    %254 = vector.extract_strided_slice %249 {offsets = [0, 0], sizes = [8, 64], strides = [1, 1]} : vector<8x192xf32> to vector<8x64xf32>
    %255 = arith.mulf %254, %251 : vector<8x64xf32>
    %256 = arith.addf %253, %255 : vector<8x64xf32>
    %257 = vector.extract_strided_slice %249 {offsets = [0, 128], sizes = [8, 64], strides = [1, 1]} : vector<8x192xf32> to vector<8x64xf32>
    %258 = math.tanh %256 : vector<8x64xf32>
    %259 = arith.mulf %257, %258 : vector<8x64xf32>
    %260 = arith.index_cast %235 : i32 to index
    %c0_82 = arith.constant 0 : index
    %261 = vector.load %arg13[%260, %c0_82] : memref<64x64xf32, #tpu.memory_space<vmem>>, vector<8x64xf32>
    tpu.vector_store %arg13[%260, %c0_82], %259 {strides = array<i32>} : memref<64x64xf32, #tpu.memory_space<vmem>>, vector<8x64xf32>,
    %262 = arith.index_cast %238 : i32 to index
    %c0_83 = arith.constant 0 : index
    %263 = vector.load %arg14[%262, %c0_83] : memref<64x64xf32, #tpu.memory_space<vmem>>, vector<8x64xf32>
    tpu.vector_store %arg14[%262, %c0_83], %259 {strides = array<i32>} : memref<64x64xf32, #tpu.memory_space<vmem>>, vector<8x64xf32>,
    %c8_i32_84 = arith.constant 8 : i32
    %c0_85 = arith.constant 0 : index
    %c0_86 = arith.constant 0 : index
    %264 = vector.load %arg13[%c0_85, %c0_86] : memref<64x64xf32, #tpu.memory_space<vmem>>, vector<64x64xf32>
    %c0_87 = arith.constant 0 : index
    %c0_88 = arith.constant 0 : index
    %c0_89 = arith.constant 0 : index
    %265 = vector.load %arg5[%c0_87, %c0_88, %c0_89] : memref<2x64x256xf32, #tpu.memory_space<vmem>>, vector<1x64x256xf32>
    %266 = vector.shape_cast %265 : vector<1x64x256xf32> to vector<64x256xf32>
    %cst_90 = arith.constant dense<0.000000e+00> : vector<64x256xf32>
    %267 = tpu.matmul %264, %266, %cst_90 {dimension_numbers = #tpu.dot_dimension_numbers<[1], [0], [0], [1], [0, 0, 1, 1], [], []>} : vector<64x64xf32>, vector<64x256xf32>, vector<64x256xf32> -> vector<64x256xf32>
    %c0_91 = arith.constant 0 : index
    %c0_92 = arith.constant 0 : index
    %268 = vector.load %arg14[%c0_91, %c0_92] : memref<64x64xf32, #tpu.memory_space<vmem>>, vector<64x64xf32>
    %c1_93 = arith.constant 1 : index
    %c0_94 = arith.constant 0 : index
    %c0_95 = arith.constant 0 : index
    %269 = vector.load %arg5[%c1_93, %c0_94, %c0_95] : memref<2x64x256xf32, #tpu.memory_space<vmem>>, vector<1x64x256xf32>
    %270 = vector.shape_cast %269 : vector<1x64x256xf32> to vector<64x256xf32>
    %cst_96 = arith.constant dense<0.000000e+00> : vector<64x256xf32>
    %271 = tpu.matmul %268, %270, %cst_96 {dimension_numbers = #tpu.dot_dimension_numbers<[1], [0], [0], [1], [0, 0, 1, 1], [], []>} : vector<64x64xf32>, vector<64x256xf32>, vector<64x256xf32> -> vector<64x256xf32>
    %272 = arith.addf %267, %271 : vector<64x256xf32>
    %c1_97 = arith.constant 1 : index
    %c0_98 = arith.constant 0 : index
    %c0_99 = arith.constant 0 : index
    %273 = vector.load %arg7[%c1_97, %c0_98, %c0_99] : memref<2x1x256xf32, #tpu.memory_space<vmem>>, vector<1x1x256xf32>
    %274 = vector.shape_cast %273 : vector<1x1x256xf32> to vector<1x256xf32>
    %275 = vector.broadcast %274 : vector<1x256xf32> to vector<64x256xf32>
    %276 = arith.addf %272, %275 : vector<64x256xf32>
    %c0_100 = arith.constant 0 : index
    %c0_101 = arith.constant 0 : index
    %277 = vector.load %arg12[%c0_100, %c0_101] : memref<64x256xf32, #tpu.memory_space<vmem>>, vector<64x256xf32>
    tpu.vector_store %arg12[%c0_100, %c0_101], %276 {strides = array<i32>} : memref<64x256xf32, #tpu.memory_space<vmem>>, vector<64x256xf32>,
    %c1_102 = arith.constant 1 : index
    %c0_103 = arith.constant 0 : index
    %c0_104 = arith.constant 0 : index
    %278 = vector.load %arg6[%c1_102, %c0_103, %c0_104] : memref<2x64x256xbf16, #tpu.memory_space<vmem>>, vector<1x64x256xbf16>
    %279 = vector.shape_cast %278 : vector<1x64x256xbf16> to vector<64x256xbf16>
    %c1_105 = arith.constant 1 : index
    %c0_106 = arith.constant 0 : index
    %c0_107 = arith.constant 0 : index
    %280 = vector.load %arg2[%c1_105, %c0_106, %c0_107] : memref<2x8x64xf32, #tpu.memory_space<vmem>>, vector<1x8x64xf32>
    %281 = vector.shape_cast %280 : vector<1x8x64xf32> to vector<8x64xf32>
    %c1_108 = arith.constant 1 : index
    %c0_109 = arith.constant 0 : index
    %c0_110 = arith.constant 0 : index
    %282 = vector.load %arg3[%c1_108, %c0_109, %c0_110] : memref<2x8x64xf32, #tpu.memory_space<vmem>>, vector<1x8x64xf32>
    %283 = vector.shape_cast %282 : vector<1x8x64xf32> to vector<8x64xf32>
    %c0_i32_111 = arith.constant 0 : i32
    %c8_i32_112 = arith.constant 8 : i32
    %284 = arith.muli %c0_i32_111, %c8_i32_112 : i32
    %285 = tpu.assume_multiple %284, 8 : i32
    %c7_i32_113 = arith.constant 7 : i32
    %286 = arith.subi %c7_i32_113, %c0_i32_111 : i32
    %c8_i32_114 = arith.constant 8 : i32
    %287 = arith.muli %286, %c8_i32_114 : i32
    %288 = tpu.assume_multiple %287, 8 : i32
    %289 = arith.truncf %281 : vector<8x64xf32> to vector<8x64xbf16>
    %cst_115 = arith.constant dense<0.000000e+00> : vector<8x256xf32>
    %290 = tpu.matmul %289, %279, %cst_115 {dimension_numbers = #tpu.dot_dimension_numbers<[1], [0], [0], [1], [0, 0, 1, 1], [], []>} : vector<8x64xbf16>, vector<64x256xbf16>, vector<8x256xf32> -> vector<8x256xf32>
    %291 = arith.index_cast %285 : i32 to index
    %c0_116 = arith.constant 0 : index
    %292 = vector.load %arg12[%291, %c0_116] : memref<64x256xf32, #tpu.memory_space<vmem>>, vector<8x256xf32>
    %293 = arith.addf %290, %292 : vector<8x256xf32>
    %294 = vector.extract_strided_slice %293 {offsets = [0, 0], sizes = [8, 192], strides = [1, 1]} : vector<8x256xf32> to vector<8x192xf32>
    %295 = arith.negf %294 : vector<8x192xf32>
    %296 = math.exp %295 : vector<8x192xf32>
    %cst_117 = arith.constant 1.000000e+00 : f32
    %297 = vector.broadcast %cst_117 : f32 to vector<8x192xf32>
    %298 = arith.addf %297, %296 : vector<8x192xf32>
    %299 = arith.divf %297, %298 : vector<8x192xf32>
    %300 = vector.extract_strided_slice %293 {offsets = [0, 192], sizes = [8, 64], strides = [1, 1]} : vector<8x256xf32> to vector<8x64xf32>
    %301 = math.tanh %300 : vector<8x64xf32>
    %302 = vector.extract_strided_slice %299 {offsets = [0, 64], sizes = [8, 64], strides = [1, 1]} : vector<8x192xf32> to vector<8x64xf32>
    %303 = arith.mulf %302, %283 : vector<8x64xf32>
    %304 = vector.extract_strided_slice %299 {offsets = [0, 0], sizes = [8, 64], strides = [1, 1]} : vector<8x192xf32> to vector<8x64xf32>
    %305 = arith.mulf %304, %301 : vector<8x64xf32>
    %306 = arith.addf %303, %305 : vector<8x64xf32>
    %307 = vector.extract_strided_slice %299 {offsets = [0, 128], sizes = [8, 64], strides = [1, 1]} : vector<8x192xf32> to vector<8x64xf32>
    %308 = math.tanh %306 : vector<8x64xf32>
    %309 = arith.mulf %307, %308 : vector<8x64xf32>
    %310 = arith.index_cast %285 : i32 to index
    %c0_118 = arith.constant 0 : index
    %311 = vector.load %arg15[%310, %c0_118] : memref<64x64xf32, #tpu.memory_space<vmem>>, vector<8x64xf32>
    tpu.vector_store %arg15[%310, %c0_118], %309 {strides = array<i32>} : memref<64x64xf32, #tpu.memory_space<vmem>>, vector<8x64xf32>,
    %312 = arith.index_cast %288 : i32 to index
    %c0_119 = arith.constant 0 : index
    %313 = vector.load %arg16[%312, %c0_119] : memref<64x64xf32, #tpu.memory_space<vmem>>, vector<8x64xf32>
    tpu.vector_store %arg16[%312, %c0_119], %309 {strides = array<i32>} : memref<64x64xf32, #tpu.memory_space<vmem>>, vector<8x64xf32>,
    %c1_i32_120 = arith.constant 1 : i32
    %c8_i32_121 = arith.constant 8 : i32
    %314 = arith.muli %c1_i32_120, %c8_i32_121 : i32
    %315 = tpu.assume_multiple %314, 8 : i32
    %c7_i32_122 = arith.constant 7 : i32
    %316 = arith.subi %c7_i32_122, %c1_i32_120 : i32
    %c8_i32_123 = arith.constant 8 : i32
    %317 = arith.muli %316, %c8_i32_123 : i32
    %318 = tpu.assume_multiple %317, 8 : i32
    %319 = arith.truncf %309 : vector<8x64xf32> to vector<8x64xbf16>
    %cst_124 = arith.constant dense<0.000000e+00> : vector<8x256xf32>
    %320 = tpu.matmul %319, %279, %cst_124 {dimension_numbers = #tpu.dot_dimension_numbers<[1], [0], [0], [1], [0, 0, 1, 1], [], []>} : vector<8x64xbf16>, vector<64x256xbf16>, vector<8x256xf32> -> vector<8x256xf32>
    %321 = arith.index_cast %315 : i32 to index
    %c0_125 = arith.constant 0 : index
    %322 = vector.load %arg12[%321, %c0_125] : memref<64x256xf32, #tpu.memory_space<vmem>>, vector<8x256xf32>
    %323 = arith.addf %320, %322 : vector<8x256xf32>
    %324 = vector.extract_strided_slice %323 {offsets = [0, 0], sizes = [8, 192], strides = [1, 1]} : vector<8x256xf32> to vector<8x192xf32>
    %325 = arith.negf %324 : vector<8x192xf32>
    %326 = math.exp %325 : vector<8x192xf32>
    %cst_126 = arith.constant 1.000000e+00 : f32
    %327 = vector.broadcast %cst_126 : f32 to vector<8x192xf32>
    %328 = arith.addf %327, %326 : vector<8x192xf32>
    %329 = arith.divf %327, %328 : vector<8x192xf32>
    %330 = vector.extract_strided_slice %323 {offsets = [0, 192], sizes = [8, 64], strides = [1, 1]} : vector<8x256xf32> to vector<8x64xf32>
    %331 = math.tanh %330 : vector<8x64xf32>
    %332 = vector.extract_strided_slice %329 {offsets = [0, 64], sizes = [8, 64], strides = [1, 1]} : vector<8x192xf32> to vector<8x64xf32>
    %333 = arith.mulf %332, %306 : vector<8x64xf32>
    %334 = vector.extract_strided_slice %329 {offsets = [0, 0], sizes = [8, 64], strides = [1, 1]} : vector<8x192xf32> to vector<8x64xf32>
    %335 = arith.mulf %334, %331 : vector<8x64xf32>
    %336 = arith.addf %333, %335 : vector<8x64xf32>
    %337 = vector.extract_strided_slice %329 {offsets = [0, 128], sizes = [8, 64], strides = [1, 1]} : vector<8x192xf32> to vector<8x64xf32>
    %338 = math.tanh %336 : vector<8x64xf32>
    %339 = arith.mulf %337, %338 : vector<8x64xf32>
    %340 = arith.index_cast %315 : i32 to index
    %c0_127 = arith.constant 0 : index
    %341 = vector.load %arg15[%340, %c0_127] : memref<64x64xf32, #tpu.memory_space<vmem>>, vector<8x64xf32>
    tpu.vector_store %arg15[%340, %c0_127], %339 {strides = array<i32>} : memref<64x64xf32, #tpu.memory_space<vmem>>, vector<8x64xf32>,
    %342 = arith.index_cast %318 : i32 to index
    %c0_128 = arith.constant 0 : index
    %343 = vector.load %arg16[%342, %c0_128] : memref<64x64xf32, #tpu.memory_space<vmem>>, vector<8x64xf32>
    tpu.vector_store %arg16[%342, %c0_128], %339 {strides = array<i32>} : memref<64x64xf32, #tpu.memory_space<vmem>>, vector<8x64xf32>,
    %c2_i32_129 = arith.constant 2 : i32
    %c8_i32_130 = arith.constant 8 : i32
    %344 = arith.muli %c2_i32_129, %c8_i32_130 : i32
    %345 = tpu.assume_multiple %344, 8 : i32
    %c7_i32_131 = arith.constant 7 : i32
    %346 = arith.subi %c7_i32_131, %c2_i32_129 : i32
    %c8_i32_132 = arith.constant 8 : i32
    %347 = arith.muli %346, %c8_i32_132 : i32
    %348 = tpu.assume_multiple %347, 8 : i32
    %349 = arith.truncf %339 : vector<8x64xf32> to vector<8x64xbf16>
    %cst_133 = arith.constant dense<0.000000e+00> : vector<8x256xf32>
    %350 = tpu.matmul %349, %279, %cst_133 {dimension_numbers = #tpu.dot_dimension_numbers<[1], [0], [0], [1], [0, 0, 1, 1], [], []>} : vector<8x64xbf16>, vector<64x256xbf16>, vector<8x256xf32> -> vector<8x256xf32>
    %351 = arith.index_cast %345 : i32 to index
    %c0_134 = arith.constant 0 : index
    %352 = vector.load %arg12[%351, %c0_134] : memref<64x256xf32, #tpu.memory_space<vmem>>, vector<8x256xf32>
    %353 = arith.addf %350, %352 : vector<8x256xf32>
    %354 = vector.extract_strided_slice %353 {offsets = [0, 0], sizes = [8, 192], strides = [1, 1]} : vector<8x256xf32> to vector<8x192xf32>
    %355 = arith.negf %354 : vector<8x192xf32>
    %356 = math.exp %355 : vector<8x192xf32>
    %cst_135 = arith.constant 1.000000e+00 : f32
    %357 = vector.broadcast %cst_135 : f32 to vector<8x192xf32>
    %358 = arith.addf %357, %356 : vector<8x192xf32>
    %359 = arith.divf %357, %358 : vector<8x192xf32>
    %360 = vector.extract_strided_slice %353 {offsets = [0, 192], sizes = [8, 64], strides = [1, 1]} : vector<8x256xf32> to vector<8x64xf32>
    %361 = math.tanh %360 : vector<8x64xf32>
    %362 = vector.extract_strided_slice %359 {offsets = [0, 64], sizes = [8, 64], strides = [1, 1]} : vector<8x192xf32> to vector<8x64xf32>
    %363 = arith.mulf %362, %336 : vector<8x64xf32>
    %364 = vector.extract_strided_slice %359 {offsets = [0, 0], sizes = [8, 64], strides = [1, 1]} : vector<8x192xf32> to vector<8x64xf32>
    %365 = arith.mulf %364, %361 : vector<8x64xf32>
    %366 = arith.addf %363, %365 : vector<8x64xf32>
    %367 = vector.extract_strided_slice %359 {offsets = [0, 128], sizes = [8, 64], strides = [1, 1]} : vector<8x192xf32> to vector<8x64xf32>
    %368 = math.tanh %366 : vector<8x64xf32>
    %369 = arith.mulf %367, %368 : vector<8x64xf32>
    %370 = arith.index_cast %345 : i32 to index
    %c0_136 = arith.constant 0 : index
    %371 = vector.load %arg15[%370, %c0_136] : memref<64x64xf32, #tpu.memory_space<vmem>>, vector<8x64xf32>
    tpu.vector_store %arg15[%370, %c0_136], %369 {strides = array<i32>} : memref<64x64xf32, #tpu.memory_space<vmem>>, vector<8x64xf32>,
    %372 = arith.index_cast %348 : i32 to index
    %c0_137 = arith.constant 0 : index
    %373 = vector.load %arg16[%372, %c0_137] : memref<64x64xf32, #tpu.memory_space<vmem>>, vector<8x64xf32>
    tpu.vector_store %arg16[%372, %c0_137], %369 {strides = array<i32>} : memref<64x64xf32, #tpu.memory_space<vmem>>, vector<8x64xf32>,
    %c3_i32_138 = arith.constant 3 : i32
    %c8_i32_139 = arith.constant 8 : i32
    %374 = arith.muli %c3_i32_138, %c8_i32_139 : i32
    %375 = tpu.assume_multiple %374, 8 : i32
    %c7_i32_140 = arith.constant 7 : i32
    %376 = arith.subi %c7_i32_140, %c3_i32_138 : i32
    %c8_i32_141 = arith.constant 8 : i32
    %377 = arith.muli %376, %c8_i32_141 : i32
    %378 = tpu.assume_multiple %377, 8 : i32
    %379 = arith.truncf %369 : vector<8x64xf32> to vector<8x64xbf16>
    %cst_142 = arith.constant dense<0.000000e+00> : vector<8x256xf32>
    %380 = tpu.matmul %379, %279, %cst_142 {dimension_numbers = #tpu.dot_dimension_numbers<[1], [0], [0], [1], [0, 0, 1, 1], [], []>} : vector<8x64xbf16>, vector<64x256xbf16>, vector<8x256xf32> -> vector<8x256xf32>
    %381 = arith.index_cast %375 : i32 to index
    %c0_143 = arith.constant 0 : index
    %382 = vector.load %arg12[%381, %c0_143] : memref<64x256xf32, #tpu.memory_space<vmem>>, vector<8x256xf32>
    %383 = arith.addf %380, %382 : vector<8x256xf32>
    %384 = vector.extract_strided_slice %383 {offsets = [0, 0], sizes = [8, 192], strides = [1, 1]} : vector<8x256xf32> to vector<8x192xf32>
    %385 = arith.negf %384 : vector<8x192xf32>
    %386 = math.exp %385 : vector<8x192xf32>
    %cst_144 = arith.constant 1.000000e+00 : f32
    %387 = vector.broadcast %cst_144 : f32 to vector<8x192xf32>
    %388 = arith.addf %387, %386 : vector<8x192xf32>
    %389 = arith.divf %387, %388 : vector<8x192xf32>
    %390 = vector.extract_strided_slice %383 {offsets = [0, 192], sizes = [8, 64], strides = [1, 1]} : vector<8x256xf32> to vector<8x64xf32>
    %391 = math.tanh %390 : vector<8x64xf32>
    %392 = vector.extract_strided_slice %389 {offsets = [0, 64], sizes = [8, 64], strides = [1, 1]} : vector<8x192xf32> to vector<8x64xf32>
    %393 = arith.mulf %392, %366 : vector<8x64xf32>
    %394 = vector.extract_strided_slice %389 {offsets = [0, 0], sizes = [8, 64], strides = [1, 1]} : vector<8x192xf32> to vector<8x64xf32>
    %395 = arith.mulf %394, %391 : vector<8x64xf32>
    %396 = arith.addf %393, %395 : vector<8x64xf32>
    %397 = vector.extract_strided_slice %389 {offsets = [0, 128], sizes = [8, 64], strides = [1, 1]} : vector<8x192xf32> to vector<8x64xf32>
    %398 = math.tanh %396 : vector<8x64xf32>
    %399 = arith.mulf %397, %398 : vector<8x64xf32>
    %400 = arith.index_cast %375 : i32 to index
    %c0_145 = arith.constant 0 : index
    %401 = vector.load %arg15[%400, %c0_145] : memref<64x64xf32, #tpu.memory_space<vmem>>, vector<8x64xf32>
    tpu.vector_store %arg15[%400, %c0_145], %399 {strides = array<i32>} : memref<64x64xf32, #tpu.memory_space<vmem>>, vector<8x64xf32>,
    %402 = arith.index_cast %378 : i32 to index
    %c0_146 = arith.constant 0 : index
    %403 = vector.load %arg16[%402, %c0_146] : memref<64x64xf32, #tpu.memory_space<vmem>>, vector<8x64xf32>
    tpu.vector_store %arg16[%402, %c0_146], %399 {strides = array<i32>} : memref<64x64xf32, #tpu.memory_space<vmem>>, vector<8x64xf32>,
    %c4_i32_147 = arith.constant 4 : i32
    %c8_i32_148 = arith.constant 8 : i32
    %404 = arith.muli %c4_i32_147, %c8_i32_148 : i32
    %405 = tpu.assume_multiple %404, 8 : i32
    %c7_i32_149 = arith.constant 7 : i32
    %406 = arith.subi %c7_i32_149, %c4_i32_147 : i32
    %c8_i32_150 = arith.constant 8 : i32
    %407 = arith.muli %406, %c8_i32_150 : i32
    %408 = tpu.assume_multiple %407, 8 : i32
    %409 = arith.truncf %399 : vector<8x64xf32> to vector<8x64xbf16>
    %cst_151 = arith.constant dense<0.000000e+00> : vector<8x256xf32>
    %410 = tpu.matmul %409, %279, %cst_151 {dimension_numbers = #tpu.dot_dimension_numbers<[1], [0], [0], [1], [0, 0, 1, 1], [], []>} : vector<8x64xbf16>, vector<64x256xbf16>, vector<8x256xf32> -> vector<8x256xf32>
    %411 = arith.index_cast %405 : i32 to index
    %c0_152 = arith.constant 0 : index
    %412 = vector.load %arg12[%411, %c0_152] : memref<64x256xf32, #tpu.memory_space<vmem>>, vector<8x256xf32>
    %413 = arith.addf %410, %412 : vector<8x256xf32>
    %414 = vector.extract_strided_slice %413 {offsets = [0, 0], sizes = [8, 192], strides = [1, 1]} : vector<8x256xf32> to vector<8x192xf32>
    %415 = arith.negf %414 : vector<8x192xf32>
    %416 = math.exp %415 : vector<8x192xf32>
    %cst_153 = arith.constant 1.000000e+00 : f32
    %417 = vector.broadcast %cst_153 : f32 to vector<8x192xf32>
    %418 = arith.addf %417, %416 : vector<8x192xf32>
    %419 = arith.divf %417, %418 : vector<8x192xf32>
    %420 = vector.extract_strided_slice %413 {offsets = [0, 192], sizes = [8, 64], strides = [1, 1]} : vector<8x256xf32> to vector<8x64xf32>
    %421 = math.tanh %420 : vector<8x64xf32>
    %422 = vector.extract_strided_slice %419 {offsets = [0, 64], sizes = [8, 64], strides = [1, 1]} : vector<8x192xf32> to vector<8x64xf32>
    %423 = arith.mulf %422, %396 : vector<8x64xf32>
    %424 = vector.extract_strided_slice %419 {offsets = [0, 0], sizes = [8, 64], strides = [1, 1]} : vector<8x192xf32> to vector<8x64xf32>
    %425 = arith.mulf %424, %421 : vector<8x64xf32>
    %426 = arith.addf %423, %425 : vector<8x64xf32>
    %427 = vector.extract_strided_slice %419 {offsets = [0, 128], sizes = [8, 64], strides = [1, 1]} : vector<8x192xf32> to vector<8x64xf32>
    %428 = math.tanh %426 : vector<8x64xf32>
    %429 = arith.mulf %427, %428 : vector<8x64xf32>
    %430 = arith.index_cast %405 : i32 to index
    %c0_154 = arith.constant 0 : index
    %431 = vector.load %arg15[%430, %c0_154] : memref<64x64xf32, #tpu.memory_space<vmem>>, vector<8x64xf32>
    tpu.vector_store %arg15[%430, %c0_154], %429 {strides = array<i32>} : memref<64x64xf32, #tpu.memory_space<vmem>>, vector<8x64xf32>,
    %432 = arith.index_cast %408 : i32 to index
    %c0_155 = arith.constant 0 : index
    %433 = vector.load %arg16[%432, %c0_155] : memref<64x64xf32, #tpu.memory_space<vmem>>, vector<8x64xf32>
    tpu.vector_store %arg16[%432, %c0_155], %429 {strides = array<i32>} : memref<64x64xf32, #tpu.memory_space<vmem>>, vector<8x64xf32>,
    %c5_i32_156 = arith.constant 5 : i32
    %c8_i32_157 = arith.constant 8 : i32
    %434 = arith.muli %c5_i32_156, %c8_i32_157 : i32
    %435 = tpu.assume_multiple %434, 8 : i32
    %c7_i32_158 = arith.constant 7 : i32
    %436 = arith.subi %c7_i32_158, %c5_i32_156 : i32
    %c8_i32_159 = arith.constant 8 : i32
    %437 = arith.muli %436, %c8_i32_159 : i32
    %438 = tpu.assume_multiple %437, 8 : i32
    %439 = arith.truncf %429 : vector<8x64xf32> to vector<8x64xbf16>
    %cst_160 = arith.constant dense<0.000000e+00> : vector<8x256xf32>
    %440 = tpu.matmul %439, %279, %cst_160 {dimension_numbers = #tpu.dot_dimension_numbers<[1], [0], [0], [1], [0, 0, 1, 1], [], []>} : vector<8x64xbf16>, vector<64x256xbf16>, vector<8x256xf32> -> vector<8x256xf32>
    %441 = arith.index_cast %435 : i32 to index
    %c0_161 = arith.constant 0 : index
    %442 = vector.load %arg12[%441, %c0_161] : memref<64x256xf32, #tpu.memory_space<vmem>>, vector<8x256xf32>
    %443 = arith.addf %440, %442 : vector<8x256xf32>
    %444 = vector.extract_strided_slice %443 {offsets = [0, 0], sizes = [8, 192], strides = [1, 1]} : vector<8x256xf32> to vector<8x192xf32>
    %445 = arith.negf %444 : vector<8x192xf32>
    %446 = math.exp %445 : vector<8x192xf32>
    %cst_162 = arith.constant 1.000000e+00 : f32
    %447 = vector.broadcast %cst_162 : f32 to vector<8x192xf32>
    %448 = arith.addf %447, %446 : vector<8x192xf32>
    %449 = arith.divf %447, %448 : vector<8x192xf32>
    %450 = vector.extract_strided_slice %443 {offsets = [0, 192], sizes = [8, 64], strides = [1, 1]} : vector<8x256xf32> to vector<8x64xf32>
    %451 = math.tanh %450 : vector<8x64xf32>
    %452 = vector.extract_strided_slice %449 {offsets = [0, 64], sizes = [8, 64], strides = [1, 1]} : vector<8x192xf32> to vector<8x64xf32>
    %453 = arith.mulf %452, %426 : vector<8x64xf32>
    %454 = vector.extract_strided_slice %449 {offsets = [0, 0], sizes = [8, 64], strides = [1, 1]} : vector<8x192xf32> to vector<8x64xf32>
    %455 = arith.mulf %454, %451 : vector<8x64xf32>
    %456 = arith.addf %453, %455 : vector<8x64xf32>
    %457 = vector.extract_strided_slice %449 {offsets = [0, 128], sizes = [8, 64], strides = [1, 1]} : vector<8x192xf32> to vector<8x64xf32>
    %458 = math.tanh %456 : vector<8x64xf32>
    %459 = arith.mulf %457, %458 : vector<8x64xf32>
    %460 = arith.index_cast %435 : i32 to index
    %c0_163 = arith.constant 0 : index
    %461 = vector.load %arg15[%460, %c0_163] : memref<64x64xf32, #tpu.memory_space<vmem>>, vector<8x64xf32>
    tpu.vector_store %arg15[%460, %c0_163], %459 {strides = array<i32>} : memref<64x64xf32, #tpu.memory_space<vmem>>, vector<8x64xf32>,
    %462 = arith.index_cast %438 : i32 to index
    %c0_164 = arith.constant 0 : index
    %463 = vector.load %arg16[%462, %c0_164] : memref<64x64xf32, #tpu.memory_space<vmem>>, vector<8x64xf32>
    tpu.vector_store %arg16[%462, %c0_164], %459 {strides = array<i32>} : memref<64x64xf32, #tpu.memory_space<vmem>>, vector<8x64xf32>,
    %c6_i32_165 = arith.constant 6 : i32
    %c8_i32_166 = arith.constant 8 : i32
    %464 = arith.muli %c6_i32_165, %c8_i32_166 : i32
    %465 = tpu.assume_multiple %464, 8 : i32
    %c7_i32_167 = arith.constant 7 : i32
    %466 = arith.subi %c7_i32_167, %c6_i32_165 : i32
    %c8_i32_168 = arith.constant 8 : i32
    %467 = arith.muli %466, %c8_i32_168 : i32
    %468 = tpu.assume_multiple %467, 8 : i32
    %469 = arith.truncf %459 : vector<8x64xf32> to vector<8x64xbf16>
    %cst_169 = arith.constant dense<0.000000e+00> : vector<8x256xf32>
    %470 = tpu.matmul %469, %279, %cst_169 {dimension_numbers = #tpu.dot_dimension_numbers<[1], [0], [0], [1], [0, 0, 1, 1], [], []>} : vector<8x64xbf16>, vector<64x256xbf16>, vector<8x256xf32> -> vector<8x256xf32>
    %471 = arith.index_cast %465 : i32 to index
    %c0_170 = arith.constant 0 : index
    %472 = vector.load %arg12[%471, %c0_170] : memref<64x256xf32, #tpu.memory_space<vmem>>, vector<8x256xf32>
    %473 = arith.addf %470, %472 : vector<8x256xf32>
    %474 = vector.extract_strided_slice %473 {offsets = [0, 0], sizes = [8, 192], strides = [1, 1]} : vector<8x256xf32> to vector<8x192xf32>
    %475 = arith.negf %474 : vector<8x192xf32>
    %476 = math.exp %475 : vector<8x192xf32>
    %cst_171 = arith.constant 1.000000e+00 : f32
    %477 = vector.broadcast %cst_171 : f32 to vector<8x192xf32>
    %478 = arith.addf %477, %476 : vector<8x192xf32>
    %479 = arith.divf %477, %478 : vector<8x192xf32>
    %480 = vector.extract_strided_slice %473 {offsets = [0, 192], sizes = [8, 64], strides = [1, 1]} : vector<8x256xf32> to vector<8x64xf32>
    %481 = math.tanh %480 : vector<8x64xf32>
    %482 = vector.extract_strided_slice %479 {offsets = [0, 64], sizes = [8, 64], strides = [1, 1]} : vector<8x192xf32> to vector<8x64xf32>
    %483 = arith.mulf %482, %456 : vector<8x64xf32>
    %484 = vector.extract_strided_slice %479 {offsets = [0, 0], sizes = [8, 64], strides = [1, 1]} : vector<8x192xf32> to vector<8x64xf32>
    %485 = arith.mulf %484, %481 : vector<8x64xf32>
    %486 = arith.addf %483, %485 : vector<8x64xf32>
    %487 = vector.extract_strided_slice %479 {offsets = [0, 128], sizes = [8, 64], strides = [1, 1]} : vector<8x192xf32> to vector<8x64xf32>
    %488 = math.tanh %486 : vector<8x64xf32>
    %489 = arith.mulf %487, %488 : vector<8x64xf32>
    %490 = arith.index_cast %465 : i32 to index
    %c0_172 = arith.constant 0 : index
    %491 = vector.load %arg15[%490, %c0_172] : memref<64x64xf32, #tpu.memory_space<vmem>>, vector<8x64xf32>
    tpu.vector_store %arg15[%490, %c0_172], %489 {strides = array<i32>} : memref<64x64xf32, #tpu.memory_space<vmem>>, vector<8x64xf32>,
    %492 = arith.index_cast %468 : i32 to index
    %c0_173 = arith.constant 0 : index
    %493 = vector.load %arg16[%492, %c0_173] : memref<64x64xf32, #tpu.memory_space<vmem>>, vector<8x64xf32>
    tpu.vector_store %arg16[%492, %c0_173], %489 {strides = array<i32>} : memref<64x64xf32, #tpu.memory_space<vmem>>, vector<8x64xf32>,
    %c7_i32_174 = arith.constant 7 : i32
    %c8_i32_175 = arith.constant 8 : i32
    %494 = arith.muli %c7_i32_174, %c8_i32_175 : i32
    %495 = tpu.assume_multiple %494, 8 : i32
    %c7_i32_176 = arith.constant 7 : i32
    %496 = arith.subi %c7_i32_176, %c7_i32_174 : i32
    %c8_i32_177 = arith.constant 8 : i32
    %497 = arith.muli %496, %c8_i32_177 : i32
    %498 = tpu.assume_multiple %497, 8 : i32
    %499 = arith.truncf %489 : vector<8x64xf32> to vector<8x64xbf16>
    %cst_178 = arith.constant dense<0.000000e+00> : vector<8x256xf32>
    %500 = tpu.matmul %499, %279, %cst_178 {dimension_numbers = #tpu.dot_dimension_numbers<[1], [0], [0], [1], [0, 0, 1, 1], [], []>} : vector<8x64xbf16>, vector<64x256xbf16>, vector<8x256xf32> -> vector<8x256xf32>
    %501 = arith.index_cast %495 : i32 to index
    %c0_179 = arith.constant 0 : index
    %502 = vector.load %arg12[%501, %c0_179] : memref<64x256xf32, #tpu.memory_space<vmem>>, vector<8x256xf32>
    %503 = arith.addf %500, %502 : vector<8x256xf32>
    %504 = vector.extract_strided_slice %503 {offsets = [0, 0], sizes = [8, 192], strides = [1, 1]} : vector<8x256xf32> to vector<8x192xf32>
    %505 = arith.negf %504 : vector<8x192xf32>
    %506 = math.exp %505 : vector<8x192xf32>
    %cst_180 = arith.constant 1.000000e+00 : f32
    %507 = vector.broadcast %cst_180 : f32 to vector<8x192xf32>
    %508 = arith.addf %507, %506 : vector<8x192xf32>
    %509 = arith.divf %507, %508 : vector<8x192xf32>
    %510 = vector.extract_strided_slice %503 {offsets = [0, 192], sizes = [8, 64], strides = [1, 1]} : vector<8x256xf32> to vector<8x64xf32>
    %511 = math.tanh %510 : vector<8x64xf32>
    %512 = vector.extract_strided_slice %509 {offsets = [0, 64], sizes = [8, 64], strides = [1, 1]} : vector<8x192xf32> to vector<8x64xf32>
    %513 = arith.mulf %512, %486 : vector<8x64xf32>
    %514 = vector.extract_strided_slice %509 {offsets = [0, 0], sizes = [8, 64], strides = [1, 1]} : vector<8x192xf32> to vector<8x64xf32>
    %515 = arith.mulf %514, %511 : vector<8x64xf32>
    %516 = arith.addf %513, %515 : vector<8x64xf32>
    %517 = vector.extract_strided_slice %509 {offsets = [0, 128], sizes = [8, 64], strides = [1, 1]} : vector<8x192xf32> to vector<8x64xf32>
    %518 = math.tanh %516 : vector<8x64xf32>
    %519 = arith.mulf %517, %518 : vector<8x64xf32>
    %520 = arith.index_cast %495 : i32 to index
    %c0_181 = arith.constant 0 : index
    %521 = vector.load %arg15[%520, %c0_181] : memref<64x64xf32, #tpu.memory_space<vmem>>, vector<8x64xf32>
    tpu.vector_store %arg15[%520, %c0_181], %519 {strides = array<i32>} : memref<64x64xf32, #tpu.memory_space<vmem>>, vector<8x64xf32>,
    %522 = arith.index_cast %498 : i32 to index
    %c0_182 = arith.constant 0 : index
    %523 = vector.load %arg16[%522, %c0_182] : memref<64x64xf32, #tpu.memory_space<vmem>>, vector<8x64xf32>
    tpu.vector_store %arg16[%522, %c0_182], %519 {strides = array<i32>} : memref<64x64xf32, #tpu.memory_space<vmem>>, vector<8x64xf32>,
    %c8_i32_183 = arith.constant 8 : i32
    %524 = tpu.iota {dimensions = array<i32: 1>} : vector<64x64xi32>
    %c32_i32 = arith.constant 32 : i32
    %525 = vector.broadcast %c32_i32 : i32 to vector<64x64xi32>
    %526 = arith.cmpi slt, %524, %525 : vector<64x64xi32>
    %c0_184 = arith.constant 0 : index
    %c0_185 = arith.constant 0 : index
    %527 = vector.load %arg15[%c0_184, %c0_185] : memref<64x64xf32, #tpu.memory_space<vmem>>, vector<64x64xf32>
    %c0_186 = arith.constant 0 : index
    %c0_187 = arith.constant 0 : index
    %528 = vector.load %arg16[%c0_186, %c0_187] : memref<64x64xf32, #tpu.memory_space<vmem>>, vector<64x64xf32>
    %529 = arith.select %526, %527, %528 : vector<64x64xi1>, vector<64x64xf32>
    %530 = vector.shape_cast %529 : vector<64x64xf32> to vector<8x8x64xf32>
    %c0_188 = arith.constant 0 : index
    %c0_189 = arith.constant 0 : index
    %c0_190 = arith.constant 0 : index
    %531 = vector.load %arg10[%c0_188, %c0_189, %c0_190] : memref<8x8x64xf32, #tpu.memory_space<vmem>>, vector<8x8x64xf32>
    tpu.vector_store %arg10[%c0_188, %c0_189, %c0_190], %530 {strides = array<i32>} : memref<8x8x64xf32, #tpu.memory_space<vmem>>, vector<8x8x64xf32>,
    %c0_191 = arith.constant 0 : index
    %c0_192 = arith.constant 0 : index
    %532 = vector.load %arg8[%c0_191, %c0_192] : memref<64x1xf32, #tpu.memory_space<vmem>>, vector<64x1xf32>
    %cst_193 = arith.constant dense<0.000000e+00> : vector<64x1xf32>
    %533 = tpu.matmul %529, %532, %cst_193 {dimension_numbers = #tpu.dot_dimension_numbers<[1], [0], [0], [1], [0, 0, 1, 1], [], []>} : vector<64x64xf32>, vector<64x1xf32>, vector<64x1xf32> -> vector<64x1xf32>
    %c0_194 = arith.constant 0 : index
    %c0_195 = arith.constant 0 : index
    %534 = vector.load %arg9[%c0_194, %c0_195] : memref<1x1xf32, #tpu.memory_space<vmem>>, vector<1x1xf32>
    %535 = vector.broadcast %534 : vector<1x1xf32> to vector<64x1xf32>
    %536 = arith.addf %533, %535 : vector<64x1xf32>
    %537 = arith.negf %536 : vector<64x1xf32>
    %538 = math.exp %537 : vector<64x1xf32>
    %cst_196 = arith.constant 1.000000e+00 : f32
    %539 = vector.broadcast %cst_196 : f32 to vector<64x1xf32>
    %540 = arith.addf %539, %538 : vector<64x1xf32>
    %541 = arith.divf %539, %540 : vector<64x1xf32>
    %542 = vector.shape_cast %541 : vector<64x1xf32> to vector<8x8x1xf32>
    %cst_197 = arith.constant dense<0.000000e+00> : vector<8x1xf32>
    %543 = vector.multi_reduction <add>, %542, %cst_197 [0] : vector<8x8x1xf32> to vector<8x1xf32>
    %cst_198 = arith.constant 8.000000e+00 : f32
    %544 = vector.broadcast %cst_198 : f32 to vector<8x1xf32>
    %545 = arith.divf %543, %544 : vector<8x1xf32>
    %c0_199 = arith.constant 0 : index
    %c0_200 = arith.constant 0 : index
    %546 = vector.load %arg11[%c0_199, %c0_200] : memref<8x1xf32, #tpu.memory_space<vmem>>, vector<8x1xf32>
    tpu.vector_store %arg11[%c0_199, %c0_200], %545 {strides = array<i32>} : memref<8x1xf32, #tpu.memory_space<vmem>>, vector<8x1xf32>,
    return
  }
}

</mosaic_0001>

<llo_original>
// kernel: tpu_custom_call.1
$region0: #{tpu_custom_call.1}
  #allocation0 [shape = 'u32[]', space=smem, size = 0x4, offset = 0x4, fixed_abs, tag = 'smem constant byte address 0x4 - core index']
  #allocation1 [shape = 'u32[144,128]{1,0:T(1,128)}', space=vmem, size = 0x12000, scoped, tag = 'internal scratch']
  #allocation2 [shape = 'f32[64,256]{1,0:T(8,128)}', space=vmem, size = 0x10000, scoped, tag = 'scratch operand']
  #allocation3 [shape = 'f32[64,64]{1,0:T(8,128)}', space=vmem, size = 0x8000, scoped, tag = 'scratch operand']
  #allocation4 [shape = 'f32[64,64]{1,0:T(8,128)}', space=vmem, size = 0x8000, scoped, tag = 'scratch operand']
  #allocation5 [shape = 'f32[64,64]{1,0:T(8,128)}', space=vmem, size = 0x8000, scoped, tag = 'scratch operand']
  #allocation6 [shape = 'f32[64,64]{1,0:T(8,128)}', space=vmem, size = 0x8000, scoped, tag = 'scratch operand']
  #allocation7 [shape = 'f32[1,1]{1,0:T(1,128)S(1)}', space=vmem, size = 0x200, scoped, tag = 'scoped memory for tpu_custom_call.1']
  %s0 = inlined_call_operand.vmem [shape: f32[64,1], index: 0, kind: input, shape index: {}]
  %s1 = inlined_call_operand.vmem [shape: f32[64,1], index: 1, kind: input, shape index: {}]
  %s2 = inlined_call_operand.vmem [shape: f32[2,8,64], index: 2, kind: input, shape index: {}]
  %s3 = inlined_call_operand.vmem [shape: f32[2,8,64], index: 3, kind: input, shape index: {}]
  %s4 = inlined_call_operand.vmem [shape: f32[2,1,256], index: 4, kind: input, shape index: {}]
  %s5 = inlined_call_operand.hbm [shape: f32[2,64,256], index: 5, kind: input, shape index: {}]
  %s6 = inlined_call_operand.vmem [shape: bf16[2,64,256], index: 6, kind: input, shape index: {}]
  %s7 = inlined_call_operand.vmem [shape: f32[2,1,256], index: 7, kind: input, shape index: {}]
  %s8 = inlined_call_operand.vmem [shape: f32[64,1], index: 8, kind: input, shape index: {}]
  %s9 = inlined_call_operand.<no memory space> [shape: f32[1,1], index: 9, kind: input, shape index: {}]
  %s10 = inlined_call_operand.hbm [shape: f32[8,8,64], index: 10, kind: output, shape index: {0}]
  %s11 = inlined_call_operand.vmem [shape: f32[8,1], index: 11, kind: output, shape index: {1}]
  %12 = xla_tuple %s10, %s11
  %s13 = sld [smem:[#allocation0]]
  $region62: #{tpu_custom_call.1} parent=0
    _
  %s15 = ssub.s32 1, %s13
  %s16 = scalar_select 0, %s15, %s13
  %v17 = vstv %s9
  %18 = vst [vmem:[#allocation7] sm:$0x1] %v17
  $region1: #{tpu_custom_call.1} parent=0
    #allocation8 [shape = 'u8[131072]{0}', space=vmem, size = 0x20000, scoped, tag = 'input window, operand 5, single buffered']
    #allocation9 [shape = 's32[1]{0}', space=sflag, size = 0x4, scoped, tag = 'scoped memory for tpu_custom_call.1']
    #allocation10 [shape = 's32[1]{0}', space=sflag, size = 0x4, scoped, tag = 'scoped memory for tpu_custom_call.1']
    #allocation11 [shape = 'u8[32768]{0}', space=vmem, size = 0x8000, scoped, tag = 'output window, operand 0, single buffered']
    %19 = vsyncpa [#allocation9], 0
    %20 = vsyncpa [#allocation10], 0
    // Predicated region
    $region2: #{tpu_custom_call.1} parent=1 // pred_check
      _
    $region3: #{tpu_custom_call.1} parent=1 // pred_check_branch
      %22 = sbr.rel (0) target = $region5
    $region4: #{tpu_custom_call.1} parent=1 // pred_region
      _
    $region5: #{tpu_custom_call.1} parent=1 // pred_fallthru
      _
    // Predicated region
    $region6: #{tpu_custom_call.1} parent=1 // pred_check
      _
    $region7: #{tpu_custom_call.1} parent=1 // pred_check_branch
      %24 = sbr.rel (0) target = $region9
    $region8: #{tpu_custom_call.1} parent=1 // pred_region
      _
    $region9: #{tpu_custom_call.1} parent=1 // pred_fallthru
      _
    // Predicated region
    $region10: #{tpu_custom_call.1} parent=1 // pred_check
      _
    $region11: #{tpu_custom_call.1} parent=1 // pred_check_branch
      %26 = sbr.rel (0) target = $region13
    $region12: #{tpu_custom_call.1} parent=1 // pred_region
      _
    $region13: #{tpu_custom_call.1} parent=1 // pred_fallthru
      _
    // Predicated region
    $region14: #{tpu_custom_call.1} parent=1 // pred_check
      _
    $region15: #{tpu_custom_call.1} parent=1 // pred_check_branch
      %28 = sbr.rel (0) target = $region17
    $region16: #{tpu_custom_call.1} parent=1 // pred_region
      _
    $region17: #{tpu_custom_call.1} parent=1 // pred_fallthru
      _
    // Predicated region
    $region18: #{tpu_custom_call.1} parent=1 // pred_check
      _
    $region19: #{tpu_custom_call.1} parent=1 // pred_check_branch
      %30 = sbr.rel (0) target = $region21
    $region20: #{tpu_custom_call.1} parent=1 // pred_region
      _
    $region21: #{tpu_custom_call.1} parent=1 // pred_fallthru
      _
    // Predicated region
    $region22: #{tpu_custom_call.1} parent=1 // pred_check
      _
    $region23: #{tpu_custom_call.1} parent=1 // pred_check_branch
      %32 = sbr.rel (0) target = $region25
    $region24: #{tpu_custom_call.1} parent=1 // pred_region
      %s34 = ssub.s32 4096, 4096
      %35 = vsyncadd [#allocation9], %s34
      %s36 = sshll.u32 [#allocation8], 4
      %s37 = int_to_ptr.vmem [resolvable:$true] %s36
      %42 = dma.hbm_to_vmem [thread:$0]  %s5, 4096, %s37, [#allocation9], 256, 256, 16
    $region25: #{tpu_custom_call.1} parent=1 // pred_fallthru
      _
    // Predicated region
    $region26: #{tpu_custom_call.1} parent=1 // pred_check
      _
    $region27: #{tpu_custom_call.1} parent=1 // pred_check_branch
      %44 = sbr.rel (0) target = $region29
    $region28: #{tpu_custom_call.1} parent=1 // pred_region
      _
    $region29: #{tpu_custom_call.1} parent=1 // pred_fallthru
      _
    // Predicated region
    $region30: #{tpu_custom_call.1} parent=1 // pred_check
      _
    $region31: #{tpu_custom_call.1} parent=1 // pred_check_branch
      %46 = sbr.rel (0) target = $region33
    $region32: #{tpu_custom_call.1} parent=1 // pred_region
      _
    $region33: #{tpu_custom_call.1} parent=1 // pred_fallthru
      _
    // Predicated region
    $region34: #{tpu_custom_call.1} parent=1 // pred_check
      _
    $region35: #{tpu_custom_call.1} parent=1 // pred_check_branch
      %48 = sbr.rel (0) target = $region37
    $region36: #{tpu_custom_call.1} parent=1 // pred_region
      _
    $region37: #{tpu_custom_call.1} parent=1 // pred_fallthru
      _
    // Predicated region
    $region38: #{tpu_custom_call.1} parent=1 // pred_check
      _
    $region39: #{tpu_custom_call.1} parent=1 // pred_check_branch
      %50 = sbr.rel (0) target = $region41
    $region40: #{tpu_custom_call.1} parent=1 // pred_region
      _
    $region41: #{tpu_custom_call.1} parent=1 // pred_fallthru
      _
    // Predicated region
    $region42: #{tpu_custom_call.1} parent=1 // pred_check
      _
    $region43: #{tpu_custom_call.1} parent=1 // pred_check_branch
      %52 = sbr.rel (0) target = $region45
    $region44: #{tpu_custom_call.1} parent=1 // pred_region
      %53 = dma.done [#allocation9], 4096
    $region45: #{tpu_custom_call.1} parent=1 // pred_fallthru
      _
    %v55 = vld [vmem:[%s0] sm:$0xff]
    %v56 = vld [vmem:[%s0 + $0x8] sm:$0xff]
    %v57 = vld [vmem:[%s0 + $0x10] sm:$0xff]
    %v58 = vld [vmem:[%s0 + $0x18] sm:$0xff]
    %v59 = vld [vmem:[%s0 + $0x20] sm:$0xff]
    %v60 = vld [vmem:[%s0 + $0x28] sm:$0xff]
    %v61 = vld [vmem:[%s0 + $0x30] sm:$0xff]
    %v62 = vld [vmem:[%s0 + $0x38] sm:$0xff]
    %v63 = vld [vmem:[%s4] sm:$0x3]
    %65 = vset.pattern.permute.xlu0 0
    %66 = vperm.xlu0 %65, %v55
    %v67 = vpop.permute.xlu0 %66
    %70 = vset.pattern.permute.xlu0 0
    %71 = vperm.xlu0 %70, %v56
    %v72 = vpop.permute.xlu0 %71
    %75 = vset.pattern.permute.xlu0 0
    %76 = vperm.xlu0 %75, %v57
    %v77 = vpop.permute.xlu0 %76
    %80 = vset.pattern.permute.xlu0 0
    %81 = vperm.xlu0 %80, %v58
    %v82 = vpop.permute.xlu0 %81
    %85 = vset.pattern.permute.xlu0 0
    %86 = vperm.xlu0 %85, %v59
    %v87 = vpop.permute.xlu0 %86
    %90 = vset.pattern.permute.xlu0 0
    %91 = vperm.xlu0 %90, %v60
    %v92 = vpop.permute.xlu0 %91
    %95 = vset.pattern.permute.xlu0 0
    %96 = vperm.xlu0 %95, %v61
    %v97 = vpop.permute.xlu0 %96
    %100 = vset.pattern.permute.xlu0 0
    %101 = vperm.xlu0 %100, %v62
    %v102 = vpop.permute.xlu0 %101
    %v105 = vlaneseq
    %v106 = vshrl.u32 %v105, 7
    %v107 = vsub.s32 0, %v106
    %v108 = vrot.slane %v63, %v107
    %v109 = vlaneseq
    %v110 = vshrl.u32 %v109, 7
    %v111 = vsub.s32 1, %v110
    %v112 = vrot.slane %v63, %v111
    %v115 = vmul.f32 %v67, %v108
    %v116 = vmul.f32 %v67, %v112
    %v117 = vmul.f32 %v72, %v108
    %v118 = vmul.f32 %v72, %v112
    %v119 = vmul.f32 %v77, %v108
    %v120 = vmul.f32 %v77, %v112
    %v121 = vmul.f32 %v82, %v108
    %v122 = vmul.f32 %v82, %v112
    %v123 = vmul.f32 %v87, %v108
    %v124 = vmul.f32 %v87, %v112
    %v125 = vmul.f32 %v92, %v108
    %v126 = vmul.f32 %v92, %v112
    %v127 = vmul.f32 %v97, %v108
    %v128 = vmul.f32 %v97, %v112
    %v129 = vmul.f32 %v102, %v108
    %v130 = vmul.f32 %v102, %v112
    %v131 = vld [vmem:[%s1] sm:$0xff]
    %v132 = vld [vmem:[%s1 + $0x8] sm:$0xff]
    %v133 = vld [vmem:[%s1 + $0x10] sm:$0xff]
    %v134 = vld [vmem:[%s1 + $0x18] sm:$0xff]
    %v135 = vld [vmem:[%s1 + $0x20] sm:$0xff]
    %v136 = vld [vmem:[%s1 + $0x28] sm:$0xff]
    %v137 = vld [vmem:[%s1 + $0x30] sm:$0xff]
    %v138 = vld [vmem:[%s1 + $0x38] sm:$0xff]
    %s139 = scalar_lea.vmem %s4, 2
    %v140 = vld [vmem:[%s139] sm:$0x3]
    %142 = vset.pattern.permute.xlu0 0
    %143 = vperm.xlu0 %142, %v131
    %v144 = vpop.permute.xlu0 %143
    %147 = vset.pattern.permute.xlu0 0
    %148 = vperm.xlu0 %147, %v132
    %v149 = vpop.permute.xlu0 %148
    %152 = vset.pattern.permute.xlu0 0
    %153 = vperm.xlu0 %152, %v133
    %v154 = vpop.permute.xlu0 %153
    %157 = vset.pattern.permute.xlu0 0
    %158 = vperm.xlu0 %157, %v134
    %v159 = vpop.permute.xlu0 %158
    %162 = vset.pattern.permute.xlu0 0
    %163 = vperm.xlu0 %162, %v135
    %v164 = vpop.permute.xlu0 %163
    %167 = vset.pattern.permute.xlu0 0
    %168 = vperm.xlu0 %167, %v136
    %v169 = vpop.permute.xlu0 %168
    %172 = vset.pattern.permute.xlu0 0
    %173 = vperm.xlu0 %172, %v137
    %v174 = vpop.permute.xlu0 %173
    %177 = vset.pattern.permute.xlu0 0
    %178 = vperm.xlu0 %177, %v138
    %v179 = vpop.permute.xlu0 %178
    %v182 = vlaneseq
    %v183 = vshrl.u32 %v182, 7
    %v184 = vsub.s32 0, %v183
    %v185 = vrot.slane %v140, %v184
    %v186 = vlaneseq
    %v187 = vshrl.u32 %v186, 7
    %v188 = vsub.s32 1, %v187
    %v189 = vrot.slane %v140, %v188
    %v192 = vmul.f32 %v144, %v185
    %v193 = vmul.f32 %v144, %v189
    %v194 = vmul.f32 %v149, %v185
    %v195 = vmul.f32 %v149, %v189
    %v196 = vmul.f32 %v154, %v185
    %v197 = vmul.f32 %v154, %v189
    %v198 = vmul.f32 %v159, %v185
    %v199 = vmul.f32 %v159, %v189
    %v200 = vmul.f32 %v164, %v185
    %v201 = vmul.f32 %v164, %v189
    %v202 = vmul.f32 %v169, %v185
    %v203 = vmul.f32 %v169, %v189
    %v204 = vmul.f32 %v174, %v185
    %v205 = vmul.f32 %v174, %v189
    %v206 = vmul.f32 %v179, %v185
    %v207 = vmul.f32 %v179, %v189
    %v208 = vadd.f32 %v115, %v192
    %v209 = vadd.f32 %v116, %v193
    %v210 = vadd.f32 %v117, %v194
    %v211 = vadd.f32 %v118, %v195
    %v212 = vadd.f32 %v119, %v196
    %v213 = vadd.f32 %v120, %v197
    %v214 = vadd.f32 %v121, %v198
    %v215 = vadd.f32 %v122, %v199
    %v216 = vadd.f32 %v123, %v200
    %v217 = vadd.f32 %v124, %v201
    %v218 = vadd.f32 %v125, %v202
    %v219 = vadd.f32 %v126, %v203
    %v220 = vadd.f32 %v127, %v204
    %v221 = vadd.f32 %v128, %v205
    %v222 = vadd.f32 %v129, %v206
    %v223 = vadd.f32 %v130, %v207
    %v224 = vld [vmem:[%s7] sm:$0x3]
    %v226 = vlaneseq
    %v227 = vshrl.u32 %v226, 7
    %v228 = vsub.s32 0, %v227
    %v229 = vrot.slane %v224, %v228
    %v230 = vlaneseq
    %v231 = vshrl.u32 %v230, 7
    %v232 = vsub.s32 1, %v231
    %v233 = vrot.slane %v224, %v232
    %v236 = vadd.f32 %v208, %v229
    %v237 = vadd.f32 %v209, %v233
    %v238 = vadd.f32 %v210, %v229
    %v239 = vadd.f32 %v211, %v233
    %v240 = vadd.f32 %v212, %v229
    %v241 = vadd.f32 %v213, %v233
    %v242 = vadd.f32 %v214, %v229
    %v243 = vadd.f32 %v215, %v233
    %v244 = vadd.f32 %v216, %v229
    %v245 = vadd.f32 %v217, %v233
    %v246 = vadd.f32 %v218, %v229
    %v247 = vadd.f32 %v219, %v233
    %v248 = vadd.f32 %v220, %v229
    %v249 = vadd.f32 %v221, %v233
    %v250 = vadd.f32 %v222, %v229
    %v251 = vadd.f32 %v223, %v233
    %252 = vst [vmem:[#allocation2] sm:$0xff] %v236
    %253 = vst [vmem:[#allocation2 + $0x8] sm:$0xff] %v237
    %254 = vst [vmem:[#allocation2 + $0x10] sm:$0xff] %v238
    %255 = vst [vmem:[#allocation2 + $0x18] sm:$0xff] %v239
    %256 = vst [vmem:[#allocation2 + $0x20] sm:$0xff] %v240
    %257 = vst [vmem:[#allocation2 + $0x28] sm:$0xff] %v241
    %258 = vst [vmem:[#allocation2 + $0x30] sm:$0xff] %v242
    %259 = vst [vmem:[#allocation2 + $0x38] sm:$0xff] %v243
    %260 = vst [vmem:[#allocation2 + $0x40] sm:$0xff] %v244
    %261 = vst [vmem:[#allocation2 + $0x48] sm:$0xff] %v245
    %262 = vst [vmem:[#allocation2 + $0x50] sm:$0xff] %v246
    %263 = vst [vmem:[#allocation2 + $0x58] sm:$0xff] %v247
    %264 = vst [vmem:[#allocation2 + $0x60] sm:$0xff] %v248
    %265 = vst [vmem:[#allocation2 + $0x68] sm:$0xff] %v249
    %266 = vst [vmem:[#allocation2 + $0x70] sm:$0xff] %v250
    %267 = vst [vmem:[#allocation2 + $0x78] sm:$0xff] %v251
    %v268 = vld [vmem:[%s6] sm:$0xff]
    %v269 = vld [vmem:[%s6 + $0x8] sm:$0xff]
    %v270 = vld [vmem:[%s6 + $0x10] sm:$0xff]
    %v271 = vld [vmem:[%s6 + $0x18] sm:$0xff]
    %v272 = vld [vmem:[%s6 + $0x20] sm:$0xff]
    %v273 = vld [vmem:[%s6 + $0x28] sm:$0xff]
    %v274 = vld [vmem:[%s6 + $0x30] sm:$0xff]
    %v275 = vld [vmem:[%s6 + $0x38] sm:$0xff]
    %v276 = vld [vmem:[%s2] sm:$0xff]
    %v277 = vld [vmem:[%s3] sm:$0xff]
    %v278 = vpack.c.bf16 %v276, %v276
    %s279 = smul.u32 0, 2
    %s280 = smul.addr %s279, 8
    %s281 = scalar_lea.vmem [#allocation2], %s280
    %v282 = vld [vmem:[%s281] sm:$0xff]
    %v283 = vld [vmem:[%s281 + $0x8] sm:$0xff]
    %v292 = vunpack.c.l.b16 %v268
    %v293 = vunpack.c.h.b16 %v268
    %v294 = vunpack.c.l.b16 %v269
    %v295 = vunpack.c.h.b16 %v269
    %v296 = vunpack.c.l.b16 %v270
    %v297 = vunpack.c.h.b16 %v270
    %v298 = vunpack.c.l.b16 %v271
    %v299 = vunpack.c.h.b16 %v271
    %v300 = vunpack.c.l.b16 %v272
    %v301 = vunpack.c.h.b16 %v272
    %v302 = vunpack.c.l.b16 %v273
    %v303 = vunpack.c.h.b16 %v273
    %v304 = vunpack.c.l.b16 %v274
    %v305 = vunpack.c.h.b16 %v274
    %v306 = vunpack.c.l.b16 %v275
    %v307 = vunpack.c.h.b16 %v275
    %v308 = vpack.c.b16 %v294, %v292
    %v309 = vpack.c.b16 %v295, %v293
    %v310 = vpack.c.b16 %v298, %v296
    %v311 = vpack.c.b16 %v299, %v297
    %v312 = vpack.c.b16 %v302, %v300
    %v313 = vpack.c.b16 %v303, %v301
    %v314 = vpack.c.b16 %v306, %v304
    %v315 = vpack.c.b16 %v307, %v305
    %vm324 = vcmask 523264
    %v326 = vsel %vm324, %v278, 0
    %328 = vmatprep.subr.bf16.mxu0 %v309
    %329 = vmatpush1.bf16.msra.mxu0 %v308
    %330 = vmatprep.subr.bf16.mxu0 %v311
    %331 = vmatpush1.bf16.msra.mxu0 %v310
    %332 = vmatprep.subr.bf16.mxu0 %v313
    %333 = vmatpush1.bf16.msra.mxu0 %v312
    %334 = vmatprep.subr.bf16.mxu0 %v315
    %335 = vmatpush1.bf16.msra.mxu0 %v314
    %336 = vmatprep.subr.bf16.mxu0 0
    %337 = vmatpush1.bf16.msra.mxu0 0
    %338 = vmatprep.subr.bf16.mxu0 0
    %339 = vmatpush1.bf16.msra.mxu0 0
    %340 = vmatprep.subr.bf16.mxu0 0
    %341 = vmatpush1.bf16.msra.mxu0 0
    %342 = vmatprep.subr.bf16.mxu0 0
    %343 = vmatpush1.bf16.msra.mxu0 0
    %344 = vmatprep.subr.bf16.mxu0 0
    %345 = vmatpush1.bf16.msra.mxu0 0
    %346 = vmatprep.subr.bf16.mxu0 0
    %347 = vmatpush1.bf16.msra.mxu0 0
    %348 = vmatprep.subr.bf16.mxu0 0
    %349 = vmatpush1.bf16.msra.mxu0 0
    %350 = vmatprep.subr.bf16.mxu0 0
    %351 = vmatpush1.bf16.msra.mxu0 0
    %352 = vmatprep.subr.bf16.mxu0 0
    %353 = vmatpush1.bf16.msra.mxu0 0
    %354 = vmatprep.subr.bf16.mxu0 0
    %355 = vmatpush1.bf16.msra.mxu0 0
    %356 = vmatprep.subr.bf16.mxu0 0
    %357 = vmatpush1.bf16.msra.mxu0 0
    %358 = vmatprep.subr.bf16.mxu0 0
    %359 = vmatpush1.bf16.msra.mxu0 0
    %360 = vmatprep.mubr.bf16.mxu0 0
    %361 = vmatmul.mubr.bf16.gmra.mrb[0].mxu0 %v326
    %v362 = vpop.f32.mrb[0].mxu0
    %v363 = vadd.f32 %v282, %v362
    %v364 = vpop.f32.mrb[0].mxu0
    %v365 = vadd.f32 %v283, %v364
    %v366 = vpop.f32.mrb[0].mxu0
    %v367 = vpop.f32.mrb[0].mxu0
    %368 = vdwg.mxu0
    %v369 = vxor.u32 %v363, 2147483648
    %v370 = vxor.u32 %v365, 2147483648
    %v371 = vmul.f32 %v369, 1.442695
    %v372 = vpow.pop %v371
    %v373 = vmul.f32 %v370, 1.442695
    %v374 = vpow.pop %v373
    %v375 = vadd.f32 %v372, 1.0
    %v376 = vadd.f32 %v374, 1.0
    %v377 = vrcp.pop %v375
    %v378 = vmul.f32 1.0, %v377
    %v379 = vrcp.pop %v376
    %v380 = vmul.f32 1.0, %v379
    %v381 = vtanh.pop %v365
    %383 = vrot.lane.b32.xlu0 %v277, 64
    %v384 = vpop.permute.xlu0 %383
    %v386 = vmul.f32 %v378, %v384
    %388 = vrot.lane.b32.xlu0 %v381, 64
    %v389 = vpop.permute.xlu0 %388
    %v391 = vmul.f32 %v378, %v389
    %393 = vrot.lane.b32.xlu0 %v391, 64
    %v394 = vpop.permute.xlu0 %393
    %v396 = vadd.f32 %v386, %v394
    %v397 = vtanh.pop %v396
    %399 = vrot.lane.b32.xlu0 %v397, 64
    %v400 = vpop.permute.xlu0 %399
    %v402 = vmul.f32 %v380, %v400
    %403 = vst.msk [vmem:[#allocation3] sm:$0xff] %vm324, %v402
    %s404 = scalar_lea.vmem [#allocation4], 56
    %405 = vst.msk [vmem:[%s404] sm:$0xff] %vm324, %v402
    %v406 = vpack.c.bf16 %v402, %v402
    %s407 = smul.u32 1, 2
    %s408 = smul.addr %s407, 8
    %s409 = scalar_lea.vmem [#allocation2], %s408
    %v410 = vld [vmem:[%s409] sm:$0xff]
    %v411 = vld [vmem:[%s409 + $0x8] sm:$0xff]
    %v413 = vsel %vm324, %v406, 0
    %415 = vmatprep.subr.bf16.mxu0 %v309
    %416 = vmatpush1.bf16.msra.mxu0 %v308
    %417 = vmatprep.subr.bf16.mxu0 %v311
    %418 = vmatpush1.bf16.msra.mxu0 %v310
    %419 = vmatprep.subr.bf16.mxu0 %v313
    %420 = vmatpush1.bf16.msra.mxu0 %v312
    %421 = vmatprep.subr.bf16.mxu0 %v315
    %422 = vmatpush1.bf16.msra.mxu0 %v314
    %423 = vmatprep.subr.bf16.mxu0 0
    %424 = vmatpush1.bf16.msra.mxu0 0
    %425 = vmatprep.subr.bf16.mxu0 0
    %426 = vmatpush1.bf16.msra.mxu0 0
    %427 = vmatprep.subr.bf16.mxu0 0
    %428 = vmatpush1.bf16.msra.mxu0 0
    %429 = vmatprep.subr.bf16.mxu0 0
    %430 = vmatpush1.bf16.msra.mxu0 0
    %431 = vmatprep.subr.bf16.mxu0 0
    %432 = vmatpush1.bf16.msra.mxu0 0
    %433 = vmatprep.subr.bf16.mxu0 0
    %434 = vmatpush1.bf16.msra.mxu0 0
    %435 = vmatprep.subr.bf16.mxu0 0
    %436 = vmatpush1.bf16.msra.mxu0 0
    %437 = vmatprep.subr.bf16.mxu0 0
    %438 = vmatpush1.bf16.msra.mxu0 0
    %439 = vmatprep.subr.bf16.mxu0 0
    %440 = vmatpush1.bf16.msra.mxu0 0
    %441 = vmatprep.subr.bf16.mxu0 0
    %442 = vmatpush1.bf16.msra.mxu0 0
    %443 = vmatprep.subr.bf16.mxu0 0
    %444 = vmatpush1.bf16.msra.mxu0 0
    %445 = vmatprep.subr.bf16.mxu0 0
    %446 = vmatpush1.bf16.msra.mxu0 0
    %447 = vmatprep.mubr.bf16.mxu0 0
    %448 = vmatmul.mubr.bf16.gmra.mrb[0].mxu0 %v413
    %v449 = vpop.f32.mrb[0].mxu0
    %v450 = vadd.f32 %v410, %v449
    %v451 = vpop.f32.mrb[0].mxu0
    %v452 = vadd.f32 %v411, %v451
    %v453 = vpop.f32.mrb[0].mxu0
    %v454 = vpop.f32.mrb[0].mxu0
    %455 = vdwg.mxu0
    %v456 = vxor.u32 %v450, 2147483648
    %v457 = vxor.u32 %v452, 2147483648
    %v458 = vmul.f32 %v456, 1.442695
    %v459 = vpow.pop %v458
    %v460 = vmul.f32 %v457, 1.442695
    %v461 = vpow.pop %v460
    %v462 = vadd.f32 %v459, 1.0
    %v463 = vadd.f32 %v461, 1.0
    %v464 = vrcp.pop %v462
    %v465 = vmul.f32 1.0, %v464
    %v466 = vrcp.pop %v463
    %v467 = vmul.f32 1.0, %v466
    %v468 = vtanh.pop %v452
    %v469 = vmul.f32 %v465, %v396
    %471 = vrot.lane.b32.xlu0 %v468, 64
    %v472 = vpop.permute.xlu0 %471
    %v474 = vmul.f32 %v465, %v472
    %476 = vrot.lane.b32.xlu0 %v474, 64
    %v477 = vpop.permute.xlu0 %476
    %v479 = vadd.f32 %v469, %v477
    %v480 = vtanh.pop %v479
    %482 = vrot.lane.b32.xlu0 %v480, 64
    %v483 = vpop.permute.xlu0 %482
    %v485 = vmul.f32 %v467, %v483
    %s486 = scalar_lea.vmem [#allocation3], 8
    %487 = vst.msk [vmem:[%s486] sm:$0xff] %vm324, %v485
    %s488 = scalar_lea.vmem [#allocation4], 48
    %489 = vst.msk [vmem:[%s488] sm:$0xff] %vm324, %v485
    %v490 = vpack.c.bf16 %v485, %v485
    %s491 = smul.u32 2, 2
    %s492 = smul.addr %s491, 8
    %s493 = scalar_lea.vmem [#allocation2], %s492
    %v494 = vld [vmem:[%s493] sm:$0xff]
    %v495 = vld [vmem:[%s493 + $0x8] sm:$0xff]
    %v497 = vsel %vm324, %v490, 0
    %499 = vmatprep.subr.bf16.mxu0 %v309
    %500 = vmatpush1.bf16.msra.mxu0 %v308
    %501 = vmatprep.subr.bf16.mxu0 %v311
    %502 = vmatpush1.bf16.msra.mxu0 %v310
    %503 = vmatprep.subr.bf16.mxu0 %v313
    %504 = vmatpush1.bf16.msra.mxu0 %v312
    %505 = vmatprep.subr.bf16.mxu0 %v315
    %506 = vmatpush1.bf16.msra.mxu0 %v314
    %507 = vmatprep.subr.bf16.mxu0 0
    %508 = vmatpush1.bf16.msra.mxu0 0
    %509 = vmatprep.subr.bf16.mxu0 0
    %510 = vmatpush1.bf16.msra.mxu0 0
    %511 = vmatprep.subr.bf16.mxu0 0
    %512 = vmatpush1.bf16.msra.mxu0 0
    %513 = vmatprep.subr.bf16.mxu0 0
    %514 = vmatpush1.bf16.msra.mxu0 0
    %515 = vmatprep.subr.bf16.mxu0 0
    %516 = vmatpush1.bf16.msra.mxu0 0
    %517 = vmatprep.subr.bf16.mxu0 0
    %518 = vmatpush1.bf16.msra.mxu0 0
    %519 = vmatprep.subr.bf16.mxu0 0
    %520 = vmatpush1.bf16.msra.mxu0 0
    %521 = vmatprep.subr.bf16.mxu0 0
    %522 = vmatpush1.bf16.msra.mxu0 0
    %523 = vmatprep.subr.bf16.mxu0 0
    %524 = vmatpush1.bf16.msra.mxu0 0
    %525 = vmatprep.subr.bf16.mxu0 0
    %526 = vmatpush1.bf16.msra.mxu0 0
    %527 = vmatprep.subr.bf16.mxu0 0
    %528 = vmatpush1.bf16.msra.mxu0 0
    %529 = vmatprep.subr.bf16.mxu0 0
    %530 = vmatpush1.bf16.msra.mxu0 0
    %531 = vmatprep.mubr.bf16.mxu0 0
    %532 = vmatmul.mubr.bf16.gmra.mrb[0].mxu0 %v497
    %v533 = vpop.f32.mrb[0].mxu0
    %v534 = vadd.f32 %v494, %v533
    %v535 = vpop.f32.mrb[0].mxu0
    %v536 = vadd.f32 %v495, %v535
    %v537 = vpop.f32.mrb[0].mxu0
    %v538 = vpop.f32.mrb[0].mxu0
    %539 = vdwg.mxu0
    %v540 = vxor.u32 %v534, 2147483648
    %v541 = vxor.u32 %v536, 2147483648
    %v542 = vmul.f32 %v540, 1.442695
    %v543 = vpow.pop %v542
    %v544 = vmul.f32 %v541, 1.442695
    %v545 = vpow.pop %v544
    %v546 = vadd.f32 %v543, 1.0
    %v547 = vadd.f32 %v545, 1.0
    %v548 = vrcp.pop %v546
    %v549 = vmul.f32 1.0, %v548
    %v550 = vrcp.pop %v547
    %v551 = vmul.f32 1.0, %v550
    %v552 = vtanh.pop %v536
    %v553 = vmul.f32 %v549, %v479
    %555 = vrot.lane.b32.xlu0 %v552, 64
    %v556 = vpop.permute.xlu0 %555
    %v558 = vmul.f32 %v549, %v556
    %560 = vrot.lane.b32.xlu0 %v558, 64
    %v561 = vpop.permute.xlu0 %560
    %v563 = vadd.f32 %v553, %v561
    %v564 = vtanh.pop %v563
    %566 = vrot.lane.b32.xlu0 %v564, 64
    %v567 = vpop.permute.xlu0 %566
    %v569 = vmul.f32 %v551, %v567
    %s570 = scalar_lea.vmem [#allocation3], 16
    %571 = vst.msk [vmem:[%s570] sm:$0xff] %vm324, %v569
    %s572 = scalar_lea.vmem [#allocation4], 40
    %573 = vst.msk [vmem:[%s572] sm:$0xff] %vm324, %v569
    %v574 = vpack.c.bf16 %v569, %v569
    %s575 = smul.u32 3, 2
    %s576 = smul.addr %s575, 8
    %s577 = scalar_lea.vmem [#allocation2], %s576
    %v578 = vld [vmem:[%s577] sm:$0xff]
    %v579 = vld [vmem:[%s577 + $0x8] sm:$0xff]
    %v581 = vsel %vm324, %v574, 0
    %583 = vmatprep.subr.bf16.mxu0 %v309
    %584 = vmatpush1.bf16.msra.mxu0 %v308
    %585 = vmatprep.subr.bf16.mxu0 %v311
    %586 = vmatpush1.bf16.msra.mxu0 %v310
    %587 = vmatprep.subr.bf16.mxu0 %v313
    %588 = vmatpush1.bf16.msra.mxu0 %v312
    %589 = vmatprep.subr.bf16.mxu0 %v315
    %590 = vmatpush1.bf16.msra.mxu0 %v314
    %591 = vmatprep.subr.bf16.mxu0 0
    %592 = vmatpush1.bf16.msra.mxu0 0
    %593 = vmatprep.subr.bf16.mxu0 0
    %594 = vmatpush1.bf16.msra.mxu0 0
    %595 = vmatprep.subr.bf16.mxu0 0
    %596 = vmatpush1.bf16.msra.mxu0 0
    %597 = vmatprep.subr.bf16.mxu0 0
    %598 = vmatpush1.bf16.msra.mxu0 0
    %599 = vmatprep.subr.bf16.mxu0 0
    %600 = vmatpush1.bf16.msra.mxu0 0
    %601 = vmatprep.subr.bf16.mxu0 0
    %602 = vmatpush1.bf16.msra.mxu0 0
    %603 = vmatprep.subr.bf16.mxu0 0
    %604 = vmatpush1.bf16.msra.mxu0 0
    %605 = vmatprep.subr.bf16.mxu0 0
    %606 = vmatpush1.bf16.msra.mxu0 0
    %607 = vmatprep.subr.bf16.mxu0 0
    %608 = vmatpush1.bf16.msra.mxu0 0
    %609 = vmatprep.subr.bf16.mxu0 0
    %610 = vmatpush1.bf16.msra.mxu0 0
    %611 = vmatprep.subr.bf16.mxu0 0
    %612 = vmatpush1.bf16.msra.mxu0 0
    %613 = vmatprep.subr.bf16.mxu0 0
    %614 = vmatpush1.bf16.msra.mxu0 0
    %615 = vmatprep.mubr.bf16.mxu0 0
    %616 = vmatmul.mubr.bf16.gmra.mrb[0].mxu0 %v581
    %v617 = vpop.f32.mrb[0].mxu0
    %v618 = vadd.f32 %v578, %v617
    %v619 = vpop.f32.mrb[0].mxu0
    %v620 = vadd.f32 %v579, %v619
    %v621 = vpop.f32.mrb[0].mxu0
    %v622 = vpop.f32.mrb[0].mxu0
    %623 = vdwg.mxu0
    %v624 = vxor.u32 %v618, 2147483648
    %v625 = vxor.u32 %v620, 2147483648
    %v626 = vmul.f32 %v624, 1.442695
    %v627 = vpow.pop %v626
    %v628 = vmul.f32 %v625, 1.442695
    %v629 = vpow.pop %v628
    %v630 = vadd.f32 %v627, 1.0
    %v631 = vadd.f32 %v629, 1.0
    %v632 = vrcp.pop %v630
    %v633 = vmul.f32 1.0, %v632
    %v634 = vrcp.pop %v631
    %v635 = vmul.f32 1.0, %v634
    %v636 = vtanh.pop %v620
    %v637 = vmul.f32 %v633, %v563
    %639 = vrot.lane.b32.xlu0 %v636, 64
    %v640 = vpop.permute.xlu0 %639
    %v642 = vmul.f32 %v633, %v640
    %644 = vrot.lane.b32.xlu0 %v642, 64
    %v645 = vpop.permute.xlu0 %644
    %v647 = vadd.f32 %v637, %v645
    %v648 = vtanh.pop %v647
    %650 = vrot.lane.b32.xlu0 %v648, 64
    %v651 = vpop.permute.xlu0 %650
    %v653 = vmul.f32 %v635, %v651
    %s654 = scalar_lea.vmem [#allocation3], 24
    %655 = vst.msk [vmem:[%s654] sm:$0xff] %vm324, %v653
    %s656 = scalar_lea.vmem [#allocation4], 32
    %657 = vst.msk [vmem:[%s656] sm:$0xff] %vm324, %v653
    %v658 = vpack.c.bf16 %v653, %v653
    %s659 = smul.u32 4, 2
    %s660 = smul.addr %s659, 8
    %s661 = scalar_lea.vmem [#allocation2], %s660
    %v662 = vld [vmem:[%s661] sm:$0xff]
    %v663 = vld [vmem:[%s661 + $0x8] sm:$0xff]
    %v665 = vsel %vm324, %v658, 0
    %667 = vmatprep.subr.bf16.mxu0 %v309
    %668 = vmatpush1.bf16.msra.mxu0 %v308
    %669 = vmatprep.subr.bf16.mxu0 %v311
    %670 = vmatpush1.bf16.msra.mxu0 %v310
    %671 = vmatprep.subr.bf16.mxu0 %v313
    %672 = vmatpush1.bf16.msra.mxu0 %v312
    %673 = vmatprep.subr.bf16.mxu0 %v315
    %674 = vmatpush1.bf16.msra.mxu0 %v314
    %675 = vmatprep.subr.bf16.mxu0 0
    %676 = vmatpush1.bf16.msra.mxu0 0
    %677 = vmatprep.subr.bf16.mxu0 0
    %678 = vmatpush1.bf16.msra.mxu0 0
    %679 = vmatprep.subr.bf16.mxu0 0
    %680 = vmatpush1.bf16.msra.mxu0 0
    %681 = vmatprep.subr.bf16.mxu0 0
    %682 = vmatpush1.bf16.msra.mxu0 0
    %683 = vmatprep.subr.bf16.mxu0 0
    %684 = vmatpush1.bf16.msra.mxu0 0
    %685 = vmatprep.subr.bf16.mxu0 0
    %686 = vmatpush1.bf16.msra.mxu0 0
    %687 = vmatprep.subr.bf16.mxu0 0
    %688 = vmatpush1.bf16.msra.mxu0 0
    %689 = vmatprep.subr.bf16.mxu0 0
    %690 = vmatpush1.bf16.msra.mxu0 0
    %691 = vmatprep.subr.bf16.mxu0 0
    %692 = vmatpush1.bf16.msra.mxu0 0
    %693 = vmatprep.subr.bf16.mxu0 0
    %694 = vmatpush1.bf16.msra.mxu0 0
    %695 = vmatprep.subr.bf16.mxu0 0
    %696 = vmatpush1.bf16.msra.mxu0 0
    %697 = vmatprep.subr.bf16.mxu0 0
    %698 = vmatpush1.bf16.msra.mxu0 0
    %699 = vmatprep.mubr.bf16.mxu0 0
    %700 = vmatmul.mubr.bf16.gmra.mrb[0].mxu0 %v665
    %v701 = vpop.f32.mrb[0].mxu0
    %v702 = vadd.f32 %v662, %v701
    %v703 = vpop.f32.mrb[0].mxu0
    %v704 = vadd.f32 %v663, %v703
    %v705 = vpop.f32.mrb[0].mxu0
    %v706 = vpop.f32.mrb[0].mxu0
    %707 = vdwg.mxu0
    %v708 = vxor.u32 %v702, 2147483648
    %v709 = vxor.u32 %v704, 2147483648
    %v710 = vmul.f32 %v708, 1.442695
    %v711 = vpow.pop %v710
    %v712 = vmul.f32 %v709, 1.442695
    %v713 = vpow.pop %v712
    %v714 = vadd.f32 %v711, 1.0
    %v715 = vadd.f32 %v713, 1.0
    %v716 = vrcp.pop %v714
    %v717 = vmul.f32 1.0, %v716
    %v718 = vrcp.pop %v715
    %v719 = vmul.f32 1.0, %v718
    %v720 = vtanh.pop %v704
    %v721 = vmul.f32 %v717, %v647
    %723 = vrot.lane.b32.xlu0 %v720, 64
    %v724 = vpop.permute.xlu0 %723
    %v726 = vmul.f32 %v717, %v724
    %728 = vrot.lane.b32.xlu0 %v726, 64
    %v729 = vpop.permute.xlu0 %728
    %v731 = vadd.f32 %v721, %v729
    %v732 = vtanh.pop %v731
    %734 = vrot.lane.b32.xlu0 %v732, 64
    %v735 = vpop.permute.xlu0 %734
    %v737 = vmul.f32 %v719, %v735
    %s738 = scalar_lea.vmem [#allocation3], 32
    %739 = vst.msk [vmem:[%s738] sm:$0xff] %vm324, %v737
    %s740 = scalar_lea.vmem [#allocation4], 24
    %741 = vst.msk [vmem:[%s740] sm:$0xff] %vm324, %v737
    %v742 = vpack.c.bf16 %v737, %v737
    %s743 = smul.u32 5, 2
    %s744 = smul.addr %s743, 8
    %s745 = scalar_lea.vmem [#allocation2], %s744
    %v746 = vld [vmem:[%s745] sm:$0xff]
    %v747 = vld [vmem:[%s745 + $0x8] sm:$0xff]
    %v749 = vsel %vm324, %v742, 0
    %751 = vmatprep.subr.bf16.mxu0 %v309
    %752 = vmatpush1.bf16.msra.mxu0 %v308
    %753 = vmatprep.subr.bf16.mxu0 %v311
    %754 = vmatpush1.bf16.msra.mxu0 %v310
    %755 = vmatprep.subr.bf16.mxu0 %v313
    %756 = vmatpush1.bf16.msra.mxu0 %v312
    %757 = vmatprep.subr.bf16.mxu0 %v315
    %758 = vmatpush1.bf16.msra.mxu0 %v314
    %759 = vmatprep.subr.bf16.mxu0 0
    %760 = vmatpush1.bf16.msra.mxu0 0
    %761 = vmatprep.subr.bf16.mxu0 0
    %762 = vmatpush1.bf16.msra.mxu0 0
    %763 = vmatprep.subr.bf16.mxu0 0
    %764 = vmatpush1.bf16.msra.mxu0 0
    %765 = vmatprep.subr.bf16.mxu0 0
    %766 = vmatpush1.bf16.msra.mxu0 0
    %767 = vmatprep.subr.bf16.mxu0 0
    %768 = vmatpush1.bf16.msra.mxu0 0
    %769 = vmatprep.subr.bf16.mxu0 0
    %770 = vmatpush1.bf16.msra.mxu0 0
    %771 = vmatprep.subr.bf16.mxu0 0
    %772 = vmatpush1.bf16.msra.mxu0 0
    %773 = vmatprep.subr.bf16.mxu0 0
    %774 = vmatpush1.bf16.msra.mxu0 0
    %775 = vmatprep.subr.bf16.mxu0 0
    %776 = vmatpush1.bf16.msra.mxu0 0
    %777 = vmatprep.subr.bf16.mxu0 0
    %778 = vmatpush1.bf16.msra.mxu0 0
    %779 = vmatprep.subr.bf16.mxu0 0
    %780 = vmatpush1.bf16.msra.mxu0 0
    %781 = vmatprep.subr.bf16.mxu0 0
    %782 = vmatpush1.bf16.msra.mxu0 0
    %783 = vmatprep.mubr.bf16.mxu0 0
    %784 = vmatmul.mubr.bf16.gmra.mrb[0].mxu0 %v749
    %v785 = vpop.f32.mrb[0].mxu0
    %v786 = vadd.f32 %v746, %v785
    %v787 = vpop.f32.mrb[0].mxu0
    %v788 = vadd.f32 %v747, %v787
    %v789 = vpop.f32.mrb[0].mxu0
    %v790 = vpop.f32.mrb[0].mxu0
    %791 = vdwg.mxu0
    %v792 = vxor.u32 %v786, 2147483648
    %v793 = vxor.u32 %v788, 2147483648
    %v794 = vmul.f32 %v792, 1.442695
    %v795 = vpow.pop %v794
    %v796 = vmul.f32 %v793, 1.442695
    %v797 = vpow.pop %v796
    %v798 = vadd.f32 %v795, 1.0
    %v799 = vadd.f32 %v797, 1.0
    %v800 = vrcp.pop %v798
    %v801 = vmul.f32 1.0, %v800
    %v802 = vrcp.pop %v799
    %v803 = vmul.f32 1.0, %v802
    %v804 = vtanh.pop %v788
    %v805 = vmul.f32 %v801, %v731
    %807 = vrot.lane.b32.xlu0 %v804, 64
    %v808 = vpop.permute.xlu0 %807
    %v810 = vmul.f32 %v801, %v808
    %812 = vrot.lane.b32.xlu0 %v810, 64
    %v813 = vpop.permute.xlu0 %812
    %v815 = vadd.f32 %v805, %v813
    %v816 = vtanh.pop %v815
    %818 = vrot.lane.b32.xlu0 %v816, 64
    %v819 = vpop.permute.xlu0 %818
    %v821 = vmul.f32 %v803, %v819
    %s822 = scalar_lea.vmem [#allocation3], 40
    %823 = vst.msk [vmem:[%s822] sm:$0xff] %vm324, %v821
    %s824 = scalar_lea.vmem [#allocation4], 16
    %825 = vst.msk [vmem:[%s824] sm:$0xff] %vm324, %v821
    %v826 = vpack.c.bf16 %v821, %v821
    %s827 = smul.u32 6, 2
    %s828 = smul.addr %s827, 8
    %s829 = scalar_lea.vmem [#allocation2], %s828
    %v830 = vld [vmem:[%s829] sm:$0xff]
    %v831 = vld [vmem:[%s829 + $0x8] sm:$0xff]
    %v833 = vsel %vm324, %v826, 0
    %835 = vmatprep.subr.bf16.mxu0 %v309
    %836 = vmatpush1.bf16.msra.mxu0 %v308
    %837 = vmatprep.subr.bf16.mxu0 %v311
    %838 = vmatpush1.bf16.msra.mxu0 %v310
    %839 = vmatprep.subr.bf16.mxu0 %v313
    %840 = vmatpush1.bf16.msra.mxu0 %v312
    %841 = vmatprep.subr.bf16.mxu0 %v315
    %842 = vmatpush1.bf16.msra.mxu0 %v314
    %843 = vmatprep.subr.bf16.mxu0 0
    %844 = vmatpush1.bf16.msra.mxu0 0
    %845 = vmatprep.subr.bf16.mxu0 0
    %846 = vmatpush1.bf16.msra.mxu0 0
    %847 = vmatprep.subr.bf16.mxu0 0
    %848 = vmatpush1.bf16.msra.mxu0 0
    %849 = vmatprep.subr.bf16.mxu0 0
    %850 = vmatpush1.bf16.msra.mxu0 0
    %851 = vmatprep.subr.bf16.mxu0 0
    %852 = vmatpush1.bf16.msra.mxu0 0
    %853 = vmatprep.subr.bf16.mxu0 0
    %854 = vmatpush1.bf16.msra.mxu0 0
    %855 = vmatprep.subr.bf16.mxu0 0
    %856 = vmatpush1.bf16.msra.mxu0 0
    %857 = vmatprep.subr.bf16.mxu0 0
    %858 = vmatpush1.bf16.msra.mxu0 0
    %859 = vmatprep.subr.bf16.mxu0 0
    %860 = vmatpush1.bf16.msra.mxu0 0
    %861 = vmatprep.subr.bf16.mxu0 0
    %862 = vmatpush1.bf16.msra.mxu0 0
    %863 = vmatprep.subr.bf16.mxu0 0
    %864 = vmatpush1.bf16.msra.mxu0 0
    %865 = vmatprep.subr.bf16.mxu0 0
    %866 = vmatpush1.bf16.msra.mxu0 0
    %867 = vmatprep.mubr.bf16.mxu0 0
    %868 = vmatmul.mubr.bf16.gmra.mrb[0].mxu0 %v833
    %v869 = vpop.f32.mrb[0].mxu0
    %v870 = vadd.f32 %v830, %v869
    %v871 = vpop.f32.mrb[0].mxu0
    %v872 = vadd.f32 %v831, %v871
    %v873 = vpop.f32.mrb[0].mxu0
    %v874 = vpop.f32.mrb[0].mxu0
    %875 = vdwg.mxu0
    %v876 = vxor.u32 %v870, 2147483648
    %v877 = vxor.u32 %v872, 2147483648
    %v878 = vmul.f32 %v876, 1.442695
    %v879 = vpow.pop %v878
    %v880 = vmul.f32 %v877, 1.442695
    %v881 = vpow.pop %v880
    %v882 = vadd.f32 %v879, 1.0
    %v883 = vadd.f32 %v881, 1.0
    %v884 = vrcp.pop %v882
    %v885 = vmul.f32 1.0, %v884
    %v886 = vrcp.pop %v883
    %v887 = vmul.f32 1.0, %v886
    %v888 = vtanh.pop %v872
    %v889 = vmul.f32 %v885, %v815
    %891 = vrot.lane.b32.xlu0 %v888, 64
    %v892 = vpop.permute.xlu0 %891
    %v894 = vmul.f32 %v885, %v892
    %896 = vrot.lane.b32.xlu0 %v894, 64
    %v897 = vpop.permute.xlu0 %896
    %v899 = vadd.f32 %v889, %v897
    %v900 = vtanh.pop %v899
    %902 = vrot.lane.b32.xlu0 %v900, 64
    %v903 = vpop.permute.xlu0 %902
    %v905 = vmul.f32 %v887, %v903
    %s906 = scalar_lea.vmem [#allocation3], 48
    %907 = vst.msk [vmem:[%s906] sm:$0xff] %vm324, %v905
    %s908 = scalar_lea.vmem [#allocation4], 8
    %909 = vst.msk [vmem:[%s908] sm:$0xff] %vm324, %v905
    %v910 = vpack.c.bf16 %v905, %v905
    %s911 = smul.u32 7, 2
    %s912 = smul.addr %s911, 8
    %s913 = scalar_lea.vmem [#allocation2], %s912
    %v914 = vld [vmem:[%s913] sm:$0xff]
    %v915 = vld [vmem:[%s913 + $0x8] sm:$0xff]
    %v917 = vsel %vm324, %v910, 0
    %919 = vmatprep.subr.bf16.mxu0 %v309
    %920 = vmatpush1.bf16.msra.mxu0 %v308
    %921 = vmatprep.subr.bf16.mxu0 %v311
    %922 = vmatpush1.bf16.msra.mxu0 %v310
    %923 = vmatprep.subr.bf16.mxu0 %v313
    %924 = vmatpush1.bf16.msra.mxu0 %v312
    %925 = vmatprep.subr.bf16.mxu0 %v315
    %926 = vmatpush1.bf16.msra.mxu0 %v314
    %927 = vmatprep.subr.bf16.mxu0 0
    %928 = vmatpush1.bf16.msra.mxu0 0
    %929 = vmatprep.subr.bf16.mxu0 0
    %930 = vmatpush1.bf16.msra.mxu0 0
    %931 = vmatprep.subr.bf16.mxu0 0
    %932 = vmatpush1.bf16.msra.mxu0 0
    %933 = vmatprep.subr.bf16.mxu0 0
    %934 = vmatpush1.bf16.msra.mxu0 0
    %935 = vmatprep.subr.bf16.mxu0 0
    %936 = vmatpush1.bf16.msra.mxu0 0
    %937 = vmatprep.subr.bf16.mxu0 0
    %938 = vmatpush1.bf16.msra.mxu0 0
    %939 = vmatprep.subr.bf16.mxu0 0
    %940 = vmatpush1.bf16.msra.mxu0 0
    %941 = vmatprep.subr.bf16.mxu0 0
    %942 = vmatpush1.bf16.msra.mxu0 0
    %943 = vmatprep.subr.bf16.mxu0 0
    %944 = vmatpush1.bf16.msra.mxu0 0
    %945 = vmatprep.subr.bf16.mxu0 0
    %946 = vmatpush1.bf16.msra.mxu0 0
    %947 = vmatprep.subr.bf16.mxu0 0
    %948 = vmatpush1.bf16.msra.mxu0 0
    %949 = vmatprep.subr.bf16.mxu0 0
    %950 = vmatpush1.bf16.msra.mxu0 0
    %951 = vmatprep.mubr.bf16.mxu0 0
    %952 = vmatmul.mubr.bf16.gmra.mrb[0].mxu0 %v917
    %v953 = vpop.f32.mrb[0].mxu0
    %v954 = vadd.f32 %v914, %v953
    %v955 = vpop.f32.mrb[0].mxu0
    %v956 = vadd.f32 %v915, %v955
    %v957 = vpop.f32.mrb[0].mxu0
    %v958 = vpop.f32.mrb[0].mxu0
    %959 = vdwg.mxu0
    %v960 = vxor.u32 %v954, 2147483648
    %v961 = vxor.u32 %v956, 2147483648
    %v962 = vmul.f32 %v960, 1.442695
    %v963 = vpow.pop %v962
    %v964 = vmul.f32 %v961, 1.442695
    %v965 = vpow.pop %v964
    %v966 = vadd.f32 %v963, 1.0
    %v967 = vadd.f32 %v965, 1.0
    %v968 = vrcp.pop %v966
    %v969 = vmul.f32 1.0, %v968
    %v970 = vrcp.pop %v967
    %v971 = vmul.f32 1.0, %v970
    %v972 = vtanh.pop %v956
    %v973 = vmul.f32 %v969, %v899
    %975 = vrot.lane.b32.xlu0 %v972, 64
    %v976 = vpop.permute.xlu0 %975
    %v978 = vmul.f32 %v969, %v976
    %980 = vrot.lane.b32.xlu0 %v978, 64
    %v981 = vpop.permute.xlu0 %980
    %v983 = vadd.f32 %v973, %v981
    %v984 = vtanh.pop %v983
    %986 = vrot.lane.b32.xlu0 %v984, 64
    %v987 = vpop.permute.xlu0 %986
    %v989 = vmul.f32 %v971, %v987
    %s990 = scalar_lea.vmem [#allocation3], 56
    %991 = vst.msk [vmem:[%s990] sm:$0xff] %vm324, %v989
    %992 = vst.msk [vmem:[#allocation4] sm:$0xff] %vm324, %v989
    %v993 = vld [vmem:[#allocation3] sm:$0xff]
    %v994 = vld [vmem:[#allocation3 + $0x8] sm:$0xff]
    %v995 = vld [vmem:[#allocation3 + $0x10] sm:$0xff]
    %v996 = vld [vmem:[#allocation3 + $0x18] sm:$0xff]
    %v997 = vld [vmem:[#allocation3 + $0x20] sm:$0xff]
    %v998 = vld [vmem:[#allocation3 + $0x28] sm:$0xff]
    %v999 = vld [vmem:[#allocation3 + $0x30] sm:$0xff]
    %v1000 = vld [vmem:[#allocation3 + $0x38] sm:$0xff]
    %v1001 = vld [vmem:[#allocation8] sm:$0xff]
    %v1002 = vld [vmem:[#allocation8 + $0x8] sm:$0xff]
    %v1003 = vld [vmem:[#allocation8 + $0x10] sm:$0xff]
    %v1004 = vld [vmem:[#allocation8 + $0x18] sm:$0xff]
    %v1005 = vld [vmem:[#allocation8 + $0x20] sm:$0xff]
    %v1006 = vld [vmem:[#allocation8 + $0x28] sm:$0xff]
    %v1007 = vld [vmem:[#allocation8 + $0x30] sm:$0xff]
    %v1008 = vld [vmem:[#allocation8 + $0x38] sm:$0xff]
    %v1009 = vld [vmem:[#allocation8 + $0x40] sm:$0xff]
    %v1010 = vld [vmem:[#allocation8 + $0x48] sm:$0xff]
    %v1011 = vld [vmem:[#allocation8 + $0x50] sm:$0xff]
    %v1012 = vld [vmem:[#allocation8 + $0x58] sm:$0xff]
    %v1013 = vld [vmem:[#allocation8 + $0x60] sm:$0xff]
    %v1014 = vld [vmem:[#allocation8 + $0x68] sm:$0xff]
    %v1015 = vld [vmem:[#allocation8 + $0x70] sm:$0xff]
    %v1016 = vld [vmem:[#allocation8 + $0x78] sm:$0xff]
    %v1017 = vld [vmem:[#allocation4] sm:$0xff]
    %v1018 = vld [vmem:[#allocation4 + $0x8] sm:$0xff]
    %v1019 = vld [vmem:[#allocation4 + $0x10] sm:$0xff]
    %v1020 = vld [vmem:[#allocation4 + $0x18] sm:$0xff]
    %v1021 = vld [vmem:[#allocation4 + $0x20] sm:$0xff]
    %v1022 = vld [vmem:[#allocation4 + $0x28] sm:$0xff]
    %v1023 = vld [vmem:[#allocation4 + $0x30] sm:$0xff]
    %v1024 = vld [vmem:[#allocation4 + $0x38] sm:$0xff]
    %s1025 = scalar_lea.vmem [#allocation8], 128
    %v1026 = vld [vmem:[%s1025] sm:$0xff]
    %v1027 = vld [vmem:[%s1025 + $0x8] sm:$0xff]
    %v1028 = vld [vmem:[%s1025 + $0x10] sm:$0xff]
    %v1029 = vld [vmem:[%s1025 + $0x18] sm:$0xff]
    %v1030 = vld [vmem:[%s1025 + $0x20] sm:$0xff]
    %v1031 = vld [vmem:[%s1025 + $0x28] sm:$0xff]
    %v1032 = vld [vmem:[%s1025 + $0x30] sm:$0xff]
    %v1033 = vld [vmem:[%s1025 + $0x38] sm:$0xff]
    %v1034 = vld [vmem:[%s1025 + $0x40] sm:$0xff]
    %v1035 = vld [vmem:[%s1025 + $0x48] sm:$0xff]
    %v1036 = vld [vmem:[%s1025 + $0x50] sm:$0xff]
    %v1037 = vld [vmem:[%s1025 + $0x58] sm:$0xff]
    %v1038 = vld [vmem:[%s1025 + $0x60] sm:$0xff]
    %v1039 = vld [vmem:[%s1025 + $0x68] sm:$0xff]
    %v1040 = vld [vmem:[%s1025 + $0x70] sm:$0xff]
    %v1041 = vld [vmem:[%s1025 + $0x78] sm:$0xff]
    %v1043 = vsel %vm324, %v1017, 0
    %v1046 = vsel %vm324, %v1018, 0
    %v1049 = vsel %vm324, %v1019, 0
    %v1052 = vsel %vm324, %v1020, 0
    %v1055 = vsel %vm324, %v1021, 0
    %v1058 = vsel %vm324, %v1022, 0
    %v1061 = vsel %vm324, %v1023, 0
    %v1064 = vsel %vm324, %v1024, 0
    %1066 = vmatprep.subr.mxu0 %v1027
    %1067 = vmatpush1.msra.mxu0 %v1026
    %1068 = vmatprep.subr.mxu0 %v1029
    %1069 = vmatpush1.msra.mxu0 %v1028
    %1070 = vmatprep.subr.mxu0 %v1031
    %1071 = vmatpush1.msra.mxu0 %v1030
    %1072 = vmatprep.subr.mxu0 %v1033
    %1073 = vmatpush1.msra.mxu0 %v1032
    %1074 = vmatprep.subr.mxu0 %v1035
    %1075 = vmatpush1.msra.mxu0 %v1034
    %1076 = vmatprep.subr.mxu0 %v1037
    %1077 = vmatpush1.msra.mxu0 %v1036
    %1078 = vmatprep.subr.mxu0 %v1039
    %1079 = vmatpush1.msra.mxu0 %v1038
    %1080 = vmatprep.subr.mxu0 %v1041
    %1081 = vmatpush1.msra.mxu0 %v1040
    %1082 = vmatprep.subr.mxu0 0.0
    %1083 = vmatpush1.msra.mxu0 0.0
    %1084 = vmatprep.subr.mxu0 0.0
    %1085 = vmatpush1.msra.mxu0 0.0
    %1086 = vmatprep.subr.mxu0 0.0
    %1087 = vmatpush1.msra.mxu0 0.0
    %1088 = vmatprep.subr.mxu0 0.0
    %1089 = vmatpush1.msra.mxu0 0.0
    %1090 = vmatprep.subr.mxu0 0.0
    %1091 = vmatpush1.msra.mxu0 0.0
    %1092 = vmatprep.subr.mxu0 0.0
    %1093 = vmatpush1.msra.mxu0 0.0
    %1094 = vmatprep.subr.mxu0 0.0
    %1095 = vmatpush1.msra.mxu0 0.0
    %1096 = vmatprep.subr.mxu0 0.0
    %1097 = vmatpush1.msra.mxu0 0.0
    %1098 = vmatprep.subr.mxu0 0.0
    %1099 = vmatpush1.msra.mxu0 0.0
    %1100 = vmatprep.subr.mxu0 0.0
    %1101 = vmatpush1.msra.mxu0 0.0
    %1102 = vmatprep.subr.mxu0 0.0
    %1103 = vmatpush1.msra.mxu0 0.0
    %1104 = vmatprep.subr.mxu0 0.0
    %1105 = vmatpush1.msra.mxu0 0.0
    %1106 = vmatprep.subr.mxu0 0.0
    %1107 = vmatpush1.msra.mxu0 0.0
    %1108 = vmatprep.subr.mxu0 0.0
    %1109 = vmatpush1.msra.mxu0 0.0
    %1110 = vmatprep.subr.mxu0 0.0
    %1111 = vmatpush1.msra.mxu0 0.0
    %1112 = vmatprep.subr.mxu0 0.0
    %1113 = vmatpush1.msra.mxu0 0.0
    %1114 = vmatprep.subr.mxu0 0.0
    %1115 = vmatpush1.msra.mxu0 0.0
    %1116 = vmatprep.subr.mxu0 0.0
    %1117 = vmatpush1.msra.mxu0 0.0
    %1118 = vmatprep.subr.mxu0 0.0
    %1119 = vmatpush1.msra.mxu0 0.0
    %1120 = vmatprep.subr.mxu0 0.0
    %1121 = vmatpush1.msra.mxu0 0.0
    %1122 = vmatprep.subr.mxu0 0.0
    %1123 = vmatpush1.msra.mxu0 0.0
    %1124 = vmatprep.subr.mxu0 0.0
    %1125 = vmatpush1.msra.mxu0 0.0
    %1126 = vmatprep.subr.mxu0 0.0
    %1127 = vmatpush1.msra.mxu0 0.0
    %1128 = vmatprep.subr.mxu0 0.0
    %1129 = vmatpush1.msra.mxu0 0.0
    %1130 = vmatprep.mubr.f32.mxu0 0.0
    %1131 = vmatmul.mubr.f32.gmra.mrb[0].mxu0 %v1043
    %v1132 = vpop.f32.mrb[0].mxu0
    %v1133 = vadd.f32 0.0, %v1132
    %v1134 = vpop.f32.mrb[0].mxu0
    %v1135 = vadd.f32 0.0, %v1134
    %1136 = vmatprep.mubr.f32.mxu0 0.0
    %1137 = vmatmul.mubr.f32.gmra.mrb[0].mxu0 %v1046
    %v1138 = vpop.f32.mrb[0].mxu0
    %v1139 = vadd.f32 0.0, %v1138
    %v1140 = vpop.f32.mrb[0].mxu0
    %v1141 = vadd.f32 0.0, %v1140
    %1142 = vmatprep.mubr.f32.mxu0 0.0
    %1143 = vmatmul.mubr.f32.gmra.mrb[0].mxu0 %v1049
    %v1144 = vpop.f32.mrb[0].mxu0
    %v1145 = vadd.f32 0.0, %v1144
    %v1146 = vpop.f32.mrb[0].mxu0
    %v1147 = vadd.f32 0.0, %v1146
    %1148 = vmatprep.mubr.f32.mxu0 0.0
    %1149 = vmatmul.mubr.f32.gmra.mrb[0].mxu0 %v1052
    %v1150 = vpop.f32.mrb[0].mxu0
    %v1151 = vadd.f32 0.0, %v1150
    %v1152 = vpop.f32.mrb[0].mxu0
    %v1153 = vadd.f32 0.0, %v1152
    %1154 = vmatprep.mubr.f32.mxu0 0.0
    %1155 = vmatmul.mubr.f32.gmra.mrb[0].mxu0 %v1055
    %v1156 = vpop.f32.mrb[0].mxu0
    %v1157 = vadd.f32 0.0, %v1156
    %v1158 = vpop.f32.mrb[0].mxu0
    %v1159 = vadd.f32 0.0, %v1158
    %1160 = vmatprep.mubr.f32.mxu0 0.0
    %1161 = vmatmul.mubr.f32.gmra.mrb[0].mxu0 %v1058
    %v1162 = vpop.f32.mrb[0].mxu0
    %v1163 = vadd.f32 0.0, %v1162
    %v1164 = vpop.f32.mrb[0].mxu0
    %v1165 = vadd.f32 0.0, %v1164
    %1166 = vmatprep.mubr.f32.mxu0 0.0
    %1167 = vmatmul.mubr.f32.gmra.mrb[0].mxu0 %v1061
    %v1168 = vpop.f32.mrb[0].mxu0
    %v1169 = vadd.f32 0.0, %v1168
    %v1170 = vpop.f32.mrb[0].mxu0
    %v1171 = vadd.f32 0.0, %v1170
    %1172 = vmatprep.mubr.f32.mxu0 0.0
    %1173 = vmatmul.mubr.f32.gmra.mrb[0].mxu0 %v1064
    %v1174 = vpop.f32.mrb[0].mxu0
    %v1175 = vadd.f32 0.0, %v1174
    %v1176 = vpop.f32.mrb[0].mxu0
    %v1177 = vadd.f32 0.0, %v1176
    %1178 = vdwg.mxu0
    %v1180 = vsel %vm324, %v993, 0
    %v1183 = vsel %vm324, %v994, 0
    %v1186 = vsel %vm324, %v995, 0
    %v1189 = vsel %vm324, %v996, 0
    %v1192 = vsel %vm324, %v997, 0
    %v1195 = vsel %vm324, %v998, 0
    %v1198 = vsel %vm324, %v999, 0
    %v1201 = vsel %vm324, %v1000, 0
    %1203 = vmatprep.subr.mxu0 %v1002
    %1204 = vmatpush1.msra.mxu0 %v1001
    %1205 = vmatprep.subr.mxu0 %v1004
    %1206 = vmatpush1.msra.mxu0 %v1003
    %1207 = vmatprep.subr.mxu0 %v1006
    %1208 = vmatpush1.msra.mxu0 %v1005
    %1209 = vmatprep.subr.mxu0 %v1008
    %1210 = vmatpush1.msra.mxu0 %v1007
    %1211 = vmatprep.subr.mxu0 %v1010
    %1212 = vmatpush1.msra.mxu0 %v1009
    %1213 = vmatprep.subr.mxu0 %v1012
    %1214 = vmatpush1.msra.mxu0 %v1011
    %1215 = vmatprep.subr.mxu0 %v1014
    %1216 = vmatpush1.msra.mxu0 %v1013
    %1217 = vmatprep.subr.mxu0 %v1016
    %1218 = vmatpush1.msra.mxu0 %v1015
    %1219 = vmatprep.subr.mxu0 0.0
    %1220 = vmatpush1.msra.mxu0 0.0
    %1221 = vmatprep.subr.mxu0 0.0
    %1222 = vmatpush1.msra.mxu0 0.0
    %1223 = vmatprep.subr.mxu0 0.0
    %1224 = vmatpush1.msra.mxu0 0.0
    %1225 = vmatprep.subr.mxu0 0.0
    %1226 = vmatpush1.msra.mxu0 0.0
    %1227 = vmatprep.subr.mxu0 0.0
    %1228 = vmatpush1.msra.mxu0 0.0
    %1229 = vmatprep.subr.mxu0 0.0
    %1230 = vmatpush1.msra.mxu0 0.0
    %1231 = vmatprep.subr.mxu0 0.0
    %1232 = vmatpush1.msra.mxu0 0.0
    %1233 = vmatprep.subr.mxu0 0.0
    %1234 = vmatpush1.msra.mxu0 0.0
    %1235 = vmatprep.subr.mxu0 0.0
    %1236 = vmatpush1.msra.mxu0 0.0
    %1237 = vmatprep.subr.mxu0 0.0
    %1238 = vmatpush1.msra.mxu0 0.0
    %1239 = vmatprep.subr.mxu0 0.0
    %1240 = vmatpush1.msra.mxu0 0.0
    %1241 = vmatprep.subr.mxu0 0.0
    %1242 = vmatpush1.msra.mxu0 0.0
    %1243 = vmatprep.subr.mxu0 0.0
    %1244 = vmatpush1.msra.mxu0 0.0
    %1245 = vmatprep.subr.mxu0 0.0
    %1246 = vmatpush1.msra.mxu0 0.0
    %1247 = vmatprep.subr.mxu0 0.0
    %1248 = vmatpush1.msra.mxu0 0.0
    %1249 = vmatprep.subr.mxu0 0.0
    %1250 = vmatpush1.msra.mxu0 0.0
    %1251 = vmatprep.subr.mxu0 0.0
    %1252 = vmatpush1.msra.mxu0 0.0
    %1253 = vmatprep.subr.mxu0 0.0
    %1254 = vmatpush1.msra.mxu0 0.0
    %1255 = vmatprep.subr.mxu0 0.0
    %1256 = vmatpush1.msra.mxu0 0.0
    %1257 = vmatprep.subr.mxu0 0.0
    %1258 = vmatpush1.msra.mxu0 0.0
    %1259 = vmatprep.subr.mxu0 0.0
    %1260 = vmatpush1.msra.mxu0 0.0
    %1261 = vmatprep.subr.mxu0 0.0
    %1262 = vmatpush1.msra.mxu0 0.0
    %1263 = vmatprep.subr.mxu0 0.0
    %1264 = vmatpush1.msra.mxu0 0.0
    %1265 = vmatprep.subr.mxu0 0.0
    %1266 = vmatpush1.msra.mxu0 0.0
    %1267 = vmatprep.mubr.f32.mxu0 0.0
    %1268 = vmatmul.mubr.f32.gmra.mrb[0].mxu0 %v1180
    %v1269 = vpop.f32.mrb[0].mxu0
    %v1270 = vadd.f32 %v1133, %v1269
    %v1271 = vpop.f32.mrb[0].mxu0
    %v1272 = vadd.f32 %v1135, %v1271
    %1273 = vmatprep.mubr.f32.mxu0 0.0
    %1274 = vmatmul.mubr.f32.gmra.mrb[0].mxu0 %v1183
    %v1275 = vpop.f32.mrb[0].mxu0
    %v1276 = vadd.f32 %v1139, %v1275
    %v1277 = vpop.f32.mrb[0].mxu0
    %v1278 = vadd.f32 %v1141, %v1277
    %1279 = vmatprep.mubr.f32.mxu0 0.0
    %1280 = vmatmul.mubr.f32.gmra.mrb[0].mxu0 %v1186
    %v1281 = vpop.f32.mrb[0].mxu0
    %v1282 = vadd.f32 %v1145, %v1281
    %v1283 = vpop.f32.mrb[0].mxu0
    %v1284 = vadd.f32 %v1147, %v1283
    %1285 = vmatprep.mubr.f32.mxu0 0.0
    %1286 = vmatmul.mubr.f32.gmra.mrb[0].mxu0 %v1189
    %v1287 = vpop.f32.mrb[0].mxu0
    %v1288 = vadd.f32 %v1151, %v1287
    %v1289 = vpop.f32.mrb[0].mxu0
    %v1290 = vadd.f32 %v1153, %v1289
    %1291 = vmatprep.mubr.f32.mxu0 0.0
    %1292 = vmatmul.mubr.f32.gmra.mrb[0].mxu0 %v1192
    %v1293 = vpop.f32.mrb[0].mxu0
    %v1294 = vadd.f32 %v1157, %v1293
    %v1295 = vpop.f32.mrb[0].mxu0
    %v1296 = vadd.f32 %v1159, %v1295
    %1297 = vmatprep.mubr.f32.mxu0 0.0
    %1298 = vmatmul.mubr.f32.gmra.mrb[0].mxu0 %v1195
    %v1299 = vpop.f32.mrb[0].mxu0
    %v1300 = vadd.f32 %v1163, %v1299
    %v1301 = vpop.f32.mrb[0].mxu0
    %v1302 = vadd.f32 %v1165, %v1301
    %1303 = vmatprep.mubr.f32.mxu0 0.0
    %1304 = vmatmul.mubr.f32.gmra.mrb[0].mxu0 %v1198
    %v1305 = vpop.f32.mrb[0].mxu0
    %v1306 = vadd.f32 %v1169, %v1305
    %v1307 = vpop.f32.mrb[0].mxu0
    %v1308 = vadd.f32 %v1171, %v1307
    %1309 = vmatprep.mubr.f32.mxu0 0.0
    %1310 = vmatmul.mubr.f32.gmra.mrb[0].mxu0 %v1201
    %v1311 = vpop.f32.mrb[0].mxu0
    %v1312 = vadd.f32 %v1175, %v1311
    %v1313 = vpop.f32.mrb[0].mxu0
    %v1314 = vadd.f32 %v1177, %v1313
    %1315 = vdwg.mxu0
    %s1316 = scalar_lea.vmem %s7, 2
    %v1317 = vld [vmem:[%s1316] sm:$0x3]
    %v1319 = vlaneseq
    %v1320 = vshrl.u32 %v1319, 7
    %v1321 = vsub.s32 0, %v1320
    %v1322 = vrot.slane %v1317, %v1321
    %v1323 = vlaneseq
    %v1324 = vshrl.u32 %v1323, 7
    %v1325 = vsub.s32 1, %v1324
    %v1326 = vrot.slane %v1317, %v1325
    %v1329 = vadd.f32 %v1270, %v1322
    %v1330 = vadd.f32 %v1272, %v1326
    %v1331 = vadd.f32 %v1276, %v1322
    %v1332 = vadd.f32 %v1278, %v1326
    %v1333 = vadd.f32 %v1282, %v1322
    %v1334 = vadd.f32 %v1284, %v1326
    %v1335 = vadd.f32 %v1288, %v1322
    %v1336 = vadd.f32 %v1290, %v1326
    %v1337 = vadd.f32 %v1294, %v1322
    %v1338 = vadd.f32 %v1296, %v1326
    %v1339 = vadd.f32 %v1300, %v1322
    %v1340 = vadd.f32 %v1302, %v1326
    %v1341 = vadd.f32 %v1306, %v1322
    %v1342 = vadd.f32 %v1308, %v1326
    %v1343 = vadd.f32 %v1312, %v1322
    %v1344 = vadd.f32 %v1314, %v1326
    %1345 = vst [vmem:[#allocation2] sm:$0xff] %v1329
    %1346 = vst [vmem:[#allocation2 + $0x8] sm:$0xff] %v1330
    %1347 = vst [vmem:[#allocation2 + $0x10] sm:$0xff] %v1331
    %1348 = vst [vmem:[#allocation2 + $0x18] sm:$0xff] %v1332
    %1349 = vst [vmem:[#allocation2 + $0x20] sm:$0xff] %v1333
    %1350 = vst [vmem:[#allocation2 + $0x28] sm:$0xff] %v1334
    %1351 = vst [vmem:[#allocation2 + $0x30] sm:$0xff] %v1335
    %1352 = vst [vmem:[#allocation2 + $0x38] sm:$0xff] %v1336
    %1353 = vst [vmem:[#allocation2 + $0x40] sm:$0xff] %v1337
    %1354 = vst [vmem:[#allocation2 + $0x48] sm:$0xff] %v1338
    %1355 = vst [vmem:[#allocation2 + $0x50] sm:$0xff] %v1339
    %1356 = vst [vmem:[#allocation2 + $0x58] sm:$0xff] %v1340
    %1357 = vst [vmem:[#allocation2 + $0x60] sm:$0xff] %v1341
    %1358 = vst [vmem:[#allocation2 + $0x68] sm:$0xff] %v1342
    %1359 = vst [vmem:[#allocation2 + $0x70] sm:$0xff] %v1343
    %1360 = vst [vmem:[#allocation2 + $0x78] sm:$0xff] %v1344
    %s1361 = scalar_lea.vmem %s6, 64
    %v1362 = vld [vmem:[%s1361] sm:$0xff]
    %v1363 = vld [vmem:[%s1361 + $0x8] sm:$0xff]
    %v1364 = vld [vmem:[%s1361 + $0x10] sm:$0xff]
    %v1365 = vld [vmem:[%s1361 + $0x18] sm:$0xff]
    %v1366 = vld [vmem:[%s1361 + $0x20] sm:$0xff]
    %v1367 = vld [vmem:[%s1361 + $0x28] sm:$0xff]
    %v1368 = vld [vmem:[%s1361 + $0x30] sm:$0xff]
    %v1369 = vld [vmem:[%s1361 + $0x38] sm:$0xff]
    %s1370 = scalar_lea.vmem %s2, 8
    %v1371 = vld [vmem:[%s1370] sm:$0xff]
    %s1372 = scalar_lea.vmem %s3, 8
    %v1373 = vld [vmem:[%s1372] sm:$0xff]
    %v1374 = vpack.c.bf16 %v1371, %v1371
    %v1375 = vld [vmem:[%s281] sm:$0xff]
    %v1376 = vld [vmem:[%s281 + $0x8] sm:$0xff]
    %v1385 = vunpack.c.l.b16 %v1362
    %v1386 = vunpack.c.h.b16 %v1362
    %v1387 = vunpack.c.l.b16 %v1363
    %v1388 = vunpack.c.h.b16 %v1363
    %v1389 = vunpack.c.l.b16 %v1364
    %v1390 = vunpack.c.h.b16 %v1364
    %v1391 = vunpack.c.l.b16 %v1365
    %v1392 = vunpack.c.h.b16 %v1365
    %v1393 = vunpack.c.l.b16 %v1366
    %v1394 = vunpack.c.h.b16 %v1366
    %v1395 = vunpack.c.l.b16 %v1367
    %v1396 = vunpack.c.h.b16 %v1367
    %v1397 = vunpack.c.l.b16 %v1368
    %v1398 = vunpack.c.h.b16 %v1368
    %v1399 = vunpack.c.l.b16 %v1369
    %v1400 = vunpack.c.h.b16 %v1369
    %v1401 = vpack.c.b16 %v1387, %v1385
    %v1402 = vpack.c.b16 %v1388, %v1386
    %v1403 = vpack.c.b16 %v1391, %v1389
    %v1404 = vpack.c.b16 %v1392, %v1390
    %v1405 = vpack.c.b16 %v1395, %v1393
    %v1406 = vpack.c.b16 %v1396, %v1394
    %v1407 = vpack.c.b16 %v1399, %v1397
    %v1408 = vpack.c.b16 %v1400, %v1398
    %v1418 = vsel %vm324, %v1374, 0
    %1420 = vmatprep.subr.bf16.mxu0 %v1402
    %1421 = vmatpush1.bf16.msra.mxu0 %v1401
    %1422 = vmatprep.subr.bf16.mxu0 %v1404
    %1423 = vmatpush1.bf16.msra.mxu0 %v1403
    %1424 = vmatprep.subr.bf16.mxu0 %v1406
    %1425 = vmatpush1.bf16.msra.mxu0 %v1405
    %1426 = vmatprep.subr.bf16.mxu0 %v1408
    %1427 = vmatpush1.bf16.msra.mxu0 %v1407
    %1428 = vmatprep.subr.bf16.mxu0 0
    %1429 = vmatpush1.bf16.msra.mxu0 0
    %1430 = vmatprep.subr.bf16.mxu0 0
    %1431 = vmatpush1.bf16.msra.mxu0 0
    %1432 = vmatprep.subr.bf16.mxu0 0
    %1433 = vmatpush1.bf16.msra.mxu0 0
    %1434 = vmatprep.subr.bf16.mxu0 0
    %1435 = vmatpush1.bf16.msra.mxu0 0
    %1436 = vmatprep.subr.bf16.mxu0 0
    %1437 = vmatpush1.bf16.msra.mxu0 0
    %1438 = vmatprep.subr.bf16.mxu0 0
    %1439 = vmatpush1.bf16.msra.mxu0 0
    %1440 = vmatprep.subr.bf16.mxu0 0
    %1441 = vmatpush1.bf16.msra.mxu0 0
    %1442 = vmatprep.subr.bf16.mxu0 0
    %1443 = vmatpush1.bf16.msra.mxu0 0
    %1444 = vmatprep.subr.bf16.mxu0 0
    %1445 = vmatpush1.bf16.msra.mxu0 0
    %1446 = vmatprep.subr.bf16.mxu0 0
    %1447 = vmatpush1.bf16.msra.mxu0 0
    %1448 = vmatprep.subr.bf16.mxu0 0
    %1449 = vmatpush1.bf16.msra.mxu0 0
    %1450 = vmatprep.subr.bf16.mxu0 0
    %1451 = vmatpush1.bf16.msra.mxu0 0
    %1452 = vmatprep.mubr.bf16.mxu0 0
    %1453 = vmatmul.mubr.bf16.gmra.mrb[0].mxu0 %v1418
    %v1454 = vpop.f32.mrb[0].mxu0
    %v1455 = vadd.f32 %v1375, %v1454
    %v1456 = vpop.f32.mrb[0].mxu0
    %v1457 = vadd.f32 %v1376, %v1456
    %v1458 = vpop.f32.mrb[0].mxu0
    %v1459 = vpop.f32.mrb[0].mxu0
    %1460 = vdwg.mxu0
    %v1461 = vxor.u32 %v1455, 2147483648
    %v1462 = vxor.u32 %v1457, 2147483648
    %v1463 = vmul.f32 %v1461, 1.442695
    %v1464 = vpow.pop %v1463
    %v1465 = vmul.f32 %v1462, 1.442695
    %v1466 = vpow.pop %v1465
    %v1467 = vadd.f32 %v1464, 1.0
    %v1468 = vadd.f32 %v1466, 1.0
    %v1469 = vrcp.pop %v1467
    %v1470 = vmul.f32 1.0, %v1469
    %v1471 = vrcp.pop %v1468
    %v1472 = vmul.f32 1.0, %v1471
    %v1473 = vtanh.pop %v1457
    %1475 = vrot.lane.b32.xlu0 %v1373, 64
    %v1476 = vpop.permute.xlu0 %1475
    %v1478 = vmul.f32 %v1470, %v1476
    %1480 = vrot.lane.b32.xlu0 %v1473, 64
    %v1481 = vpop.permute.xlu0 %1480
    %v1483 = vmul.f32 %v1470, %v1481
    %1485 = vrot.lane.b32.xlu0 %v1483, 64
    %v1486 = vpop.permute.xlu0 %1485
    %v1488 = vadd.f32 %v1478, %v1486
    %v1489 = vtanh.pop %v1488
    %1491 = vrot.lane.b32.xlu0 %v1489, 64
    %v1492 = vpop.permute.xlu0 %1491
    %v1494 = vmul.f32 %v1472, %v1492
    %1495 = vst.msk [vmem:[#allocation5] sm:$0xff] %vm324, %v1494
    %s1496 = scalar_lea.vmem [#allocation6], 56
    %1497 = vst.msk [vmem:[%s1496] sm:$0xff] %vm324, %v1494
    %v1498 = vpack.c.bf16 %v1494, %v1494
    %v1499 = vld [vmem:[%s409] sm:$0xff]
    %v1500 = vld [vmem:[%s409 + $0x8] sm:$0xff]
    %v1502 = vsel %vm324, %v1498, 0
    %1504 = vmatprep.subr.bf16.mxu0 %v1402
    %1505 = vmatpush1.bf16.msra.mxu0 %v1401
    %1506 = vmatprep.subr.bf16.mxu0 %v1404
    %1507 = vmatpush1.bf16.msra.mxu0 %v1403
    %1508 = vmatprep.subr.bf16.mxu0 %v1406
    %1509 = vmatpush1.bf16.msra.mxu0 %v1405
    %1510 = vmatprep.subr.bf16.mxu0 %v1408
    %1511 = vmatpush1.bf16.msra.mxu0 %v1407
    %1512 = vmatprep.subr.bf16.mxu0 0
    %1513 = vmatpush1.bf16.msra.mxu0 0
    %1514 = vmatprep.subr.bf16.mxu0 0
    %1515 = vmatpush1.bf16.msra.mxu0 0
    %1516 = vmatprep.subr.bf16.mxu0 0
    %1517 = vmatpush1.bf16.msra.mxu0 0
    %1518 = vmatprep.subr.bf16.mxu0 0
    %1519 = vmatpush1.bf16.msra.mxu0 0
    %1520 = vmatprep.subr.bf16.mxu0 0
    %1521 = vmatpush1.bf16.msra.mxu0 0
    %1522 = vmatprep.subr.bf16.mxu0 0
    %1523 = vmatpush1.bf16.msra.mxu0 0
    %1524 = vmatprep.subr.bf16.mxu0 0
    %1525 = vmatpush1.bf16.msra.mxu0 0
    %1526 = vmatprep.subr.bf16.mxu0 0
    %1527 = vmatpush1.bf16.msra.mxu0 0
    %1528 = vmatprep.subr.bf16.mxu0 0
    %1529 = vmatpush1.bf16.msra.mxu0 0
    %1530 = vmatprep.subr.bf16.mxu0 0
    %1531 = vmatpush1.bf16.msra.mxu0 0
    %1532 = vmatprep.subr.bf16.mxu0 0
    %1533 = vmatpush1.bf16.msra.mxu0 0
    %1534 = vmatprep.subr.bf16.mxu0 0
    %1535 = vmatpush1.bf16.msra.mxu0 0
    %1536 = vmatprep.mubr.bf16.mxu0 0
    %1537 = vmatmul.mubr.bf16.gmra.mrb[0].mxu0 %v1502
    %v1538 = vpop.f32.mrb[0].mxu0
    %v1539 = vadd.f32 %v1499, %v1538
    %v1540 = vpop.f32.mrb[0].mxu0
    %v1541 = vadd.f32 %v1500, %v1540
    %v1542 = vpop.f32.mrb[0].mxu0
    %v1543 = vpop.f32.mrb[0].mxu0
    %1544 = vdwg.mxu0
    %v1545 = vxor.u32 %v1539, 2147483648
    %v1546 = vxor.u32 %v1541, 2147483648
    %v1547 = vmul.f32 %v1545, 1.442695
    %v1548 = vpow.pop %v1547
    %v1549 = vmul.f32 %v1546, 1.442695
    %v1550 = vpow.pop %v1549
    %v1551 = vadd.f32 %v1548, 1.0
    %v1552 = vadd.f32 %v1550, 1.0
    %v1553 = vrcp.pop %v1551
    %v1554 = vmul.f32 1.0, %v1553
    %v1555 = vrcp.pop %v1552
    %v1556 = vmul.f32 1.0, %v1555
    %v1557 = vtanh.pop %v1541
    %v1558 = vmul.f32 %v1554, %v1488
    %1560 = vrot.lane.b32.xlu0 %v1557, 64
    %v1561 = vpop.permute.xlu0 %1560
    %v1563 = vmul.f32 %v1554, %v1561
    %1565 = vrot.lane.b32.xlu0 %v1563, 64
    %v1566 = vpop.permute.xlu0 %1565
    %v1568 = vadd.f32 %v1558, %v1566
    %v1569 = vtanh.pop %v1568
    %1571 = vrot.lane.b32.xlu0 %v1569, 64
    %v1572 = vpop.permute.xlu0 %1571
    %v1574 = vmul.f32 %v1556, %v1572
    %s1575 = scalar_lea.vmem [#allocation5], 8
    %1576 = vst.msk [vmem:[%s1575] sm:$0xff] %vm324, %v1574
    %s1577 = scalar_lea.vmem [#allocation6], 48
    %1578 = vst.msk [vmem:[%s1577] sm:$0xff] %vm324, %v1574
    %v1579 = vpack.c.bf16 %v1574, %v1574
    %v1580 = vld [vmem:[%s493] sm:$0xff]
    %v1581 = vld [vmem:[%s493 + $0x8] sm:$0xff]
    %v1583 = vsel %vm324, %v1579, 0
    %1585 = vmatprep.subr.bf16.mxu0 %v1402
    %1586 = vmatpush1.bf16.msra.mxu0 %v1401
    %1587 = vmatprep.subr.bf16.mxu0 %v1404
    %1588 = vmatpush1.bf16.msra.mxu0 %v1403
    %1589 = vmatprep.subr.bf16.mxu0 %v1406
    %1590 = vmatpush1.bf16.msra.mxu0 %v1405
    %1591 = vmatprep.subr.bf16.mxu0 %v1408
    %1592 = vmatpush1.bf16.msra.mxu0 %v1407
    %1593 = vmatprep.subr.bf16.mxu0 0
    %1594 = vmatpush1.bf16.msra.mxu0 0
    %1595 = vmatprep.subr.bf16.mxu0 0
    %1596 = vmatpush1.bf16.msra.mxu0 0
    %1597 = vmatprep.subr.bf16.mxu0 0
    %1598 = vmatpush1.bf16.msra.mxu0 0
    %1599 = vmatprep.subr.bf16.mxu0 0
    %1600 = vmatpush1.bf16.msra.mxu0 0
    %1601 = vmatprep.subr.bf16.mxu0 0
    %1602 = vmatpush1.bf16.msra.mxu0 0
    %1603 = vmatprep.subr.bf16.mxu0 0
    %1604 = vmatpush1.bf16.msra.mxu0 0
    %1605 = vmatprep.subr.bf16.mxu0 0
    %1606 = vmatpush1.bf16.msra.mxu0 0
    %1607 = vmatprep.subr.bf16.mxu0 0
    %1608 = vmatpush1.bf16.msra.mxu0 0
    %1609 = vmatprep.subr.bf16.mxu0 0
    %1610 = vmatpush1.bf16.msra.mxu0 0
    %1611 = vmatprep.subr.bf16.mxu0 0
    %1612 = vmatpush1.bf16.msra.mxu0 0
    %1613 = vmatprep.subr.bf16.mxu0 0
    %1614 = vmatpush1.bf16.msra.mxu0 0
    %1615 = vmatprep.subr.bf16.mxu0 0
    %1616 = vmatpush1.bf16.msra.mxu0 0
    %1617 = vmatprep.mubr.bf16.mxu0 0
    %1618 = vmatmul.mubr.bf16.gmra.mrb[0].mxu0 %v1583
    %v1619 = vpop.f32.mrb[0].mxu0
    %v1620 = vadd.f32 %v1580, %v1619
    %v1621 = vpop.f32.mrb[0].mxu0
    %v1622 = vadd.f32 %v1581, %v1621
    %v1623 = vpop.f32.mrb[0].mxu0
    %v1624 = vpop.f32.mrb[0].mxu0
    %1625 = vdwg.mxu0
    %v1626 = vxor.u32 %v1620, 2147483648
    %v1627 = vxor.u32 %v1622, 2147483648
    %v1628 = vmul.f32 %v1626, 1.442695
    %v1629 = vpow.pop %v1628
    %v1630 = vmul.f32 %v1627, 1.442695
    %v1631 = vpow.pop %v1630
    %v1632 = vadd.f32 %v1629, 1.0
    %v1633 = vadd.f32 %v1631, 1.0
    %v1634 = vrcp.pop %v1632
    %v1635 = vmul.f32 1.0, %v1634
    %v1636 = vrcp.pop %v1633
    %v1637 = vmul.f32 1.0, %v1636
    %v1638 = vtanh.pop %v1622
    %v1639 = vmul.f32 %v1635, %v1568
    %1641 = vrot.lane.b32.xlu0 %v1638, 64
    %v1642 = vpop.permute.xlu0 %1641
    %v1644 = vmul.f32 %v1635, %v1642
    %1646 = vrot.lane.b32.xlu0 %v1644, 64
    %v1647 = vpop.permute.xlu0 %1646
    %v1649 = vadd.f32 %v1639, %v1647
    %v1650 = vtanh.pop %v1649
    %1652 = vrot.lane.b32.xlu0 %v1650, 64
    %v1653 = vpop.permute.xlu0 %1652
    %v1655 = vmul.f32 %v1637, %v1653
    %s1656 = scalar_lea.vmem [#allocation5], 16
    %1657 = vst.msk [vmem:[%s1656] sm:$0xff] %vm324, %v1655
    %s1658 = scalar_lea.vmem [#allocation6], 40
    %1659 = vst.msk [vmem:[%s1658] sm:$0xff] %vm324, %v1655
    %v1660 = vpack.c.bf16 %v1655, %v1655
    %v1661 = vld [vmem:[%s577] sm:$0xff]
    %v1662 = vld [vmem:[%s577 + $0x8] sm:$0xff]
    %v1664 = vsel %vm324, %v1660, 0
    %1666 = vmatprep.subr.bf16.mxu0 %v1402
    %1667 = vmatpush1.bf16.msra.mxu0 %v1401
    %1668 = vmatprep.subr.bf16.mxu0 %v1404
    %1669 = vmatpush1.bf16.msra.mxu0 %v1403
    %1670 = vmatprep.subr.bf16.mxu0 %v1406
    %1671 = vmatpush1.bf16.msra.mxu0 %v1405
    %1672 = vmatprep.subr.bf16.mxu0 %v1408
    %1673 = vmatpush1.bf16.msra.mxu0 %v1407
    %1674 = vmatprep.subr.bf16.mxu0 0
    %1675 = vmatpush1.bf16.msra.mxu0 0
    %1676 = vmatprep.subr.bf16.mxu0 0
    %1677 = vmatpush1.bf16.msra.mxu0 0
    %1678 = vmatprep.subr.bf16.mxu0 0
    %1679 = vmatpush1.bf16.msra.mxu0 0
    %1680 = vmatprep.subr.bf16.mxu0 0
    %1681 = vmatpush1.bf16.msra.mxu0 0
    %1682 = vmatprep.subr.bf16.mxu0 0
    %1683 = vmatpush1.bf16.msra.mxu0 0
    %1684 = vmatprep.subr.bf16.mxu0 0
    %1685 = vmatpush1.bf16.msra.mxu0 0
    %1686 = vmatprep.subr.bf16.mxu0 0
    %1687 = vmatpush1.bf16.msra.mxu0 0
    %1688 = vmatprep.subr.bf16.mxu0 0
    %1689 = vmatpush1.bf16.msra.mxu0 0
    %1690 = vmatprep.subr.bf16.mxu0 0
    %1691 = vmatpush1.bf16.msra.mxu0 0
    %1692 = vmatprep.subr.bf16.mxu0 0
    %1693 = vmatpush1.bf16.msra.mxu0 0
    %1694 = vmatprep.subr.bf16.mxu0 0
    %1695 = vmatpush1.bf16.msra.mxu0 0
    %1696 = vmatprep.subr.bf16.mxu0 0
    %1697 = vmatpush1.bf16.msra.mxu0 0
    %1698 = vmatprep.mubr.bf16.mxu0 0
    %1699 = vmatmul.mubr.bf16.gmra.mrb[0].mxu0 %v1664
    %v1700 = vpop.f32.mrb[0].mxu0
    %v1701 = vadd.f32 %v1661, %v1700
    %v1702 = vpop.f32.mrb[0].mxu0
    %v1703 = vadd.f32 %v1662, %v1702
    %v1704 = vpop.f32.mrb[0].mxu0
    %v1705 = vpop.f32.mrb[0].mxu0
    %1706 = vdwg.mxu0
    %v1707 = vxor.u32 %v1701, 2147483648
    %v1708 = vxor.u32 %v1703, 2147483648
    %v1709 = vmul.f32 %v1707, 1.442695
    %v1710 = vpow.pop %v1709
    %v1711 = vmul.f32 %v1708, 1.442695
    %v1712 = vpow.pop %v1711
    %v1713 = vadd.f32 %v1710, 1.0
    %v1714 = vadd.f32 %v1712, 1.0
    %v1715 = vrcp.pop %v1713
    %v1716 = vmul.f32 1.0, %v1715
    %v1717 = vrcp.pop %v1714
    %v1718 = vmul.f32 1.0, %v1717
    %v1719 = vtanh.pop %v1703
    %v1720 = vmul.f32 %v1716, %v1649
    %1722 = vrot.lane.b32.xlu0 %v1719, 64
    %v1723 = vpop.permute.xlu0 %1722
    %v1725 = vmul.f32 %v1716, %v1723
    %1727 = vrot.lane.b32.xlu0 %v1725, 64
    %v1728 = vpop.permute.xlu0 %1727
    %v1730 = vadd.f32 %v1720, %v1728
    %v1731 = vtanh.pop %v1730
    %1733 = vrot.lane.b32.xlu0 %v1731, 64
    %v1734 = vpop.permute.xlu0 %1733
    %v1736 = vmul.f32 %v1718, %v1734
    %s1737 = scalar_lea.vmem [#allocation5], 24
    %1738 = vst.msk [vmem:[%s1737] sm:$0xff] %vm324, %v1736
    %s1739 = scalar_lea.vmem [#allocation6], 32
    %1740 = vst.msk [vmem:[%s1739] sm:$0xff] %vm324, %v1736
    %v1741 = vpack.c.bf16 %v1736, %v1736
    %v1742 = vld [vmem:[%s661] sm:$0xff]
    %v1743 = vld [vmem:[%s661 + $0x8] sm:$0xff]
    %v1745 = vsel %vm324, %v1741, 0
    %1747 = vmatprep.subr.bf16.mxu0 %v1402
    %1748 = vmatpush1.bf16.msra.mxu0 %v1401
    %1749 = vmatprep.subr.bf16.mxu0 %v1404
    %1750 = vmatpush1.bf16.msra.mxu0 %v1403
    %1751 = vmatprep.subr.bf16.mxu0 %v1406
    %1752 = vmatpush1.bf16.msra.mxu0 %v1405
    %1753 = vmatprep.subr.bf16.mxu0 %v1408
    %1754 = vmatpush1.bf16.msra.mxu0 %v1407
    %1755 = vmatprep.subr.bf16.mxu0 0
    %1756 = vmatpush1.bf16.msra.mxu0 0
    %1757 = vmatprep.subr.bf16.mxu0 0
    %1758 = vmatpush1.bf16.msra.mxu0 0
    %1759 = vmatprep.subr.bf16.mxu0 0
    %1760 = vmatpush1.bf16.msra.mxu0 0
    %1761 = vmatprep.subr.bf16.mxu0 0
    %1762 = vmatpush1.bf16.msra.mxu0 0
    %1763 = vmatprep.subr.bf16.mxu0 0
    %1764 = vmatpush1.bf16.msra.mxu0 0
    %1765 = vmatprep.subr.bf16.mxu0 0
    %1766 = vmatpush1.bf16.msra.mxu0 0
    %1767 = vmatprep.subr.bf16.mxu0 0
    %1768 = vmatpush1.bf16.msra.mxu0 0
    %1769 = vmatprep.subr.bf16.mxu0 0
    %1770 = vmatpush1.bf16.msra.mxu0 0
    %1771 = vmatprep.subr.bf16.mxu0 0
    %1772 = vmatpush1.bf16.msra.mxu0 0
    %1773 = vmatprep.subr.bf16.mxu0 0
    %1774 = vmatpush1.bf16.msra.mxu0 0
    %1775 = vmatprep.subr.bf16.mxu0 0
    %1776 = vmatpush1.bf16.msra.mxu0 0
    %1777 = vmatprep.subr.bf16.mxu0 0
    %1778 = vmatpush1.bf16.msra.mxu0 0
    %1779 = vmatprep.mubr.bf16.mxu0 0
    %1780 = vmatmul.mubr.bf16.gmra.mrb[0].mxu0 %v1745
    %v1781 = vpop.f32.mrb[0].mxu0
    %v1782 = vadd.f32 %v1742, %v1781
    %v1783 = vpop.f32.mrb[0].mxu0
    %v1784 = vadd.f32 %v1743, %v1783
    %v1785 = vpop.f32.mrb[0].mxu0
    %v1786 = vpop.f32.mrb[0].mxu0
    %1787 = vdwg.mxu0
    %v1788 = vxor.u32 %v1782, 2147483648
    %v1789 = vxor.u32 %v1784, 2147483648
    %v1790 = vmul.f32 %v1788, 1.442695
    %v1791 = vpow.pop %v1790
    %v1792 = vmul.f32 %v1789, 1.442695
    %v1793 = vpow.pop %v1792
    %v1794 = vadd.f32 %v1791, 1.0
    %v1795 = vadd.f32 %v1793, 1.0
    %v1796 = vrcp.pop %v1794
    %v1797 = vmul.f32 1.0, %v1796
    %v1798 = vrcp.pop %v1795
    %v1799 = vmul.f32 1.0, %v1798
    %v1800 = vtanh.pop %v1784
    %v1801 = vmul.f32 %v1797, %v1730
    %1803 = vrot.lane.b32.xlu0 %v1800, 64
    %v1804 = vpop.permute.xlu0 %1803
    %v1806 = vmul.f32 %v1797, %v1804
    %1808 = vrot.lane.b32.xlu0 %v1806, 64
    %v1809 = vpop.permute.xlu0 %1808
    %v1811 = vadd.f32 %v1801, %v1809
    %v1812 = vtanh.pop %v1811
    %1814 = vrot.lane.b32.xlu0 %v1812, 64
    %v1815 = vpop.permute.xlu0 %1814
    %v1817 = vmul.f32 %v1799, %v1815
    %s1818 = scalar_lea.vmem [#allocation5], 32
    %1819 = vst.msk [vmem:[%s1818] sm:$0xff] %vm324, %v1817
    %s1820 = scalar_lea.vmem [#allocation6], 24
    %1821 = vst.msk [vmem:[%s1820] sm:$0xff] %vm324, %v1817
    %v1822 = vpack.c.bf16 %v1817, %v1817
    %v1823 = vld [vmem:[%s745] sm:$0xff]
    %v1824 = vld [vmem:[%s745 + $0x8] sm:$0xff]
    %v1826 = vsel %vm324, %v1822, 0
    %1828 = vmatprep.subr.bf16.mxu0 %v1402
    %1829 = vmatpush1.bf16.msra.mxu0 %v1401
    %1830 = vmatprep.subr.bf16.mxu0 %v1404
    %1831 = vmatpush1.bf16.msra.mxu0 %v1403
    %1832 = vmatprep.subr.bf16.mxu0 %v1406
    %1833 = vmatpush1.bf16.msra.mxu0 %v1405
    %1834 = vmatprep.subr.bf16.mxu0 %v1408
    %1835 = vmatpush1.bf16.msra.mxu0 %v1407
    %1836 = vmatprep.subr.bf16.mxu0 0
    %1837 = vmatpush1.bf16.msra.mxu0 0
    %1838 = vmatprep.subr.bf16.mxu0 0
    %1839 = vmatpush1.bf16.msra.mxu0 0
    %1840 = vmatprep.subr.bf16.mxu0 0
    %1841 = vmatpush1.bf16.msra.mxu0 0
    %1842 = vmatprep.subr.bf16.mxu0 0
    %1843 = vmatpush1.bf16.msra.mxu0 0
    %1844 = vmatprep.subr.bf16.mxu0 0
    %1845 = vmatpush1.bf16.msra.mxu0 0
    %1846 = vmatprep.subr.bf16.mxu0 0
    %1847 = vmatpush1.bf16.msra.mxu0 0
    %1848 = vmatprep.subr.bf16.mxu0 0
    %1849 = vmatpush1.bf16.msra.mxu0 0
    %1850 = vmatprep.subr.bf16.mxu0 0
    %1851 = vmatpush1.bf16.msra.mxu0 0
    %1852 = vmatprep.subr.bf16.mxu0 0
    %1853 = vmatpush1.bf16.msra.mxu0 0
    %1854 = vmatprep.subr.bf16.mxu0 0
    %1855 = vmatpush1.bf16.msra.mxu0 0
    %1856 = vmatprep.subr.bf16.mxu0 0
    %1857 = vmatpush1.bf16.msra.mxu0 0
    %1858 = vmatprep.subr.bf16.mxu0 0
    %1859 = vmatpush1.bf16.msra.mxu0 0
    %1860 = vmatprep.mubr.bf16.mxu0 0
    %1861 = vmatmul.mubr.bf16.gmra.mrb[0].mxu0 %v1826
    %v1862 = vpop.f32.mrb[0].mxu0
    %v1863 = vadd.f32 %v1823, %v1862
    %v1864 = vpop.f32.mrb[0].mxu0
    %v1865 = vadd.f32 %v1824, %v1864
    %v1866 = vpop.f32.mrb[0].mxu0
    %v1867 = vpop.f32.mrb[0].mxu0
    %1868 = vdwg.mxu0
    %v1869 = vxor.u32 %v1863, 2147483648
    %v1870 = vxor.u32 %v1865, 2147483648
    %v1871 = vmul.f32 %v1869, 1.442695
    %v1872 = vpow.pop %v1871
    %v1873 = vmul.f32 %v1870, 1.442695
    %v1874 = vpow.pop %v1873
    %v1875 = vadd.f32 %v1872, 1.0
    %v1876 = vadd.f32 %v1874, 1.0
    %v1877 = vrcp.pop %v1875
    %v1878 = vmul.f32 1.0, %v1877
    %v1879 = vrcp.pop %v1876
    %v1880 = vmul.f32 1.0, %v1879
    %v1881 = vtanh.pop %v1865
    %v1882 = vmul.f32 %v1878, %v1811
    %1884 = vrot.lane.b32.xlu0 %v1881, 64
    %v1885 = vpop.permute.xlu0 %1884
    %v1887 = vmul.f32 %v1878, %v1885
    %1889 = vrot.lane.b32.xlu0 %v1887, 64
    %v1890 = vpop.permute.xlu0 %1889
    %v1892 = vadd.f32 %v1882, %v1890
    %v1893 = vtanh.pop %v1892
    %1895 = vrot.lane.b32.xlu0 %v1893, 64
    %v1896 = vpop.permute.xlu0 %1895
    %v1898 = vmul.f32 %v1880, %v1896
    %s1899 = scalar_lea.vmem [#allocation5], 40
    %1900 = vst.msk [vmem:[%s1899] sm:$0xff] %vm324, %v1898
    %s1901 = scalar_lea.vmem [#allocation6], 16
    %1902 = vst.msk [vmem:[%s1901] sm:$0xff] %vm324, %v1898
    %v1903 = vpack.c.bf16 %v1898, %v1898
    %v1904 = vld [vmem:[%s829] sm:$0xff]
    %v1905 = vld [vmem:[%s829 + $0x8] sm:$0xff]
    %v1907 = vsel %vm324, %v1903, 0
    %1909 = vmatprep.subr.bf16.mxu0 %v1402
    %1910 = vmatpush1.bf16.msra.mxu0 %v1401
    %1911 = vmatprep.subr.bf16.mxu0 %v1404
    %1912 = vmatpush1.bf16.msra.mxu0 %v1403
    %1913 = vmatprep.subr.bf16.mxu0 %v1406
    %1914 = vmatpush1.bf16.msra.mxu0 %v1405
    %1915 = vmatprep.subr.bf16.mxu0 %v1408
    %1916 = vmatpush1.bf16.msra.mxu0 %v1407
    %1917 = vmatprep.subr.bf16.mxu0 0
    %1918 = vmatpush1.bf16.msra.mxu0 0
    %1919 = vmatprep.subr.bf16.mxu0 0
    %1920 = vmatpush1.bf16.msra.mxu0 0
    %1921 = vmatprep.subr.bf16.mxu0 0
    %1922 = vmatpush1.bf16.msra.mxu0 0
    %1923 = vmatprep.subr.bf16.mxu0 0
    %1924 = vmatpush1.bf16.msra.mxu0 0
    %1925 = vmatprep.subr.bf16.mxu0 0
    %1926 = vmatpush1.bf16.msra.mxu0 0
    %1927 = vmatprep.subr.bf16.mxu0 0
    %1928 = vmatpush1.bf16.msra.mxu0 0
    %1929 = vmatprep.subr.bf16.mxu0 0
    %1930 = vmatpush1.bf16.msra.mxu0 0
    %1931 = vmatprep.subr.bf16.mxu0 0
    %1932 = vmatpush1.bf16.msra.mxu0 0
    %1933 = vmatprep.subr.bf16.mxu0 0
    %1934 = vmatpush1.bf16.msra.mxu0 0
    %1935 = vmatprep.subr.bf16.mxu0 0
    %1936 = vmatpush1.bf16.msra.mxu0 0
    %1937 = vmatprep.subr.bf16.mxu0 0
    %1938 = vmatpush1.bf16.msra.mxu0 0
    %1939 = vmatprep.subr.bf16.mxu0 0
    %1940 = vmatpush1.bf16.msra.mxu0 0
    %1941 = vmatprep.mubr.bf16.mxu0 0
    %1942 = vmatmul.mubr.bf16.gmra.mrb[0].mxu0 %v1907
    %v1943 = vpop.f32.mrb[0].mxu0
    %v1944 = vadd.f32 %v1904, %v1943
    %v1945 = vpop.f32.mrb[0].mxu0
    %v1946 = vadd.f32 %v1905, %v1945
    %v1947 = vpop.f32.mrb[0].mxu0
    %v1948 = vpop.f32.mrb[0].mxu0
    %1949 = vdwg.mxu0
    %v1950 = vxor.u32 %v1944, 2147483648
    %v1951 = vxor.u32 %v1946, 2147483648
    %v1952 = vmul.f32 %v1950, 1.442695
    %v1953 = vpow.pop %v1952
    %v1954 = vmul.f32 %v1951, 1.442695
    %v1955 = vpow.pop %v1954
    %v1956 = vadd.f32 %v1953, 1.0
    %v1957 = vadd.f32 %v1955, 1.0
    %v1958 = vrcp.pop %v1956
    %v1959 = vmul.f32 1.0, %v1958
    %v1960 = vrcp.pop %v1957
    %v1961 = vmul.f32 1.0, %v1960
    %v1962 = vtanh.pop %v1946
    %v1963 = vmul.f32 %v1959, %v1892
    %1965 = vrot.lane.b32.xlu0 %v1962, 64
    %v1966 = vpop.permute.xlu0 %1965
    %v1968 = vmul.f32 %v1959, %v1966
    %1970 = vrot.lane.b32.xlu0 %v1968, 64
    %v1971 = vpop.permute.xlu0 %1970
    %v1973 = vadd.f32 %v1963, %v1971
    %v1974 = vtanh.pop %v1973
    %1976 = vrot.lane.b32.xlu0 %v1974, 64
    %v1977 = vpop.permute.xlu0 %1976
    %v1979 = vmul.f32 %v1961, %v1977
    %s1980 = scalar_lea.vmem [#allocation5], 48
    %1981 = vst.msk [vmem:[%s1980] sm:$0xff] %vm324, %v1979
    %s1982 = scalar_lea.vmem [#allocation6], 8
    %1983 = vst.msk [vmem:[%s1982] sm:$0xff] %vm324, %v1979
    %v1984 = vpack.c.bf16 %v1979, %v1979
    %v1985 = vld [vmem:[%s913] sm:$0xff]
    %v1986 = vld [vmem:[%s913 + $0x8] sm:$0xff]
    %v1988 = vsel %vm324, %v1984, 0
    %1990 = vmatprep.subr.bf16.mxu0 %v1402
    %1991 = vmatpush1.bf16.msra.mxu0 %v1401
    %1992 = vmatprep.subr.bf16.mxu0 %v1404
    %1993 = vmatpush1.bf16.msra.mxu0 %v1403
    %1994 = vmatprep.subr.bf16.mxu0 %v1406
    %1995 = vmatpush1.bf16.msra.mxu0 %v1405
    %1996 = vmatprep.subr.bf16.mxu0 %v1408
    %1997 = vmatpush1.bf16.msra.mxu0 %v1407
    %1998 = vmatprep.subr.bf16.mxu0 0
    %1999 = vmatpush1.bf16.msra.mxu0 0
    %2000 = vmatprep.subr.bf16.mxu0 0
    %2001 = vmatpush1.bf16.msra.mxu0 0
    %2002 = vmatprep.subr.bf16.mxu0 0
    %2003 = vmatpush1.bf16.msra.mxu0 0
    %2004 = vmatprep.subr.bf16.mxu0 0
    %2005 = vmatpush1.bf16.msra.mxu0 0
    %2006 = vmatprep.subr.bf16.mxu0 0
    %2007 = vmatpush1.bf16.msra.mxu0 0
    %2008 = vmatprep.subr.bf16.mxu0 0
    %2009 = vmatpush1.bf16.msra.mxu0 0
    %2010 = vmatprep.subr.bf16.mxu0 0
    %2011 = vmatpush1.bf16.msra.mxu0 0
    %2012 = vmatprep.subr.bf16.mxu0 0
    %2013 = vmatpush1.bf16.msra.mxu0 0
    %2014 = vmatprep.subr.bf16.mxu0 0
    %2015 = vmatpush1.bf16.msra.mxu0 0
    %2016 = vmatprep.subr.bf16.mxu0 0
    %2017 = vmatpush1.bf16.msra.mxu0 0
    %2018 = vmatprep.subr.bf16.mxu0 0
    %2019 = vmatpush1.bf16.msra.mxu0 0
    %2020 = vmatprep.subr.bf16.mxu0 0
    %2021 = vmatpush1.bf16.msra.mxu0 0
    %2022 = vmatprep.mubr.bf16.mxu0 0
    %2023 = vmatmul.mubr.bf16.gmra.mrb[0].mxu0 %v1988
    %v2024 = vpop.f32.mrb[0].mxu0
    %v2025 = vadd.f32 %v1985, %v2024
    %v2026 = vpop.f32.mrb[0].mxu0
    %v2027 = vadd.f32 %v1986, %v2026
    %v2028 = vpop.f32.mrb[0].mxu0
    %v2029 = vpop.f32.mrb[0].mxu0
    %2030 = vdwg.mxu0
    %v2031 = vxor.u32 %v2025, 2147483648
    %v2032 = vxor.u32 %v2027, 2147483648
    %v2033 = vmul.f32 %v2031, 1.442695
    %v2034 = vpow.pop %v2033
    %v2035 = vmul.f32 %v2032, 1.442695
    %v2036 = vpow.pop %v2035
    %v2037 = vadd.f32 %v2034, 1.0
    %v2038 = vadd.f32 %v2036, 1.0
    %v2039 = vrcp.pop %v2037
    %v2040 = vmul.f32 1.0, %v2039
    %v2041 = vrcp.pop %v2038
    %v2042 = vmul.f32 1.0, %v2041
    %v2043 = vtanh.pop %v2027
    %v2044 = vmul.f32 %v2040, %v1973
    %2046 = vrot.lane.b32.xlu0 %v2043, 64
    %v2047 = vpop.permute.xlu0 %2046
    %v2049 = vmul.f32 %v2040, %v2047
    %2051 = vrot.lane.b32.xlu0 %v2049, 64
    %v2052 = vpop.permute.xlu0 %2051
    %v2054 = vadd.f32 %v2044, %v2052
    %v2055 = vtanh.pop %v2054
    %2057 = vrot.lane.b32.xlu0 %v2055, 64
    %v2058 = vpop.permute.xlu0 %2057
    %v2060 = vmul.f32 %v2042, %v2058
    %s2061 = scalar_lea.vmem [#allocation5], 56
    %2062 = vst.msk [vmem:[%s2061] sm:$0xff] %vm324, %v2060
    %2063 = vst.msk [vmem:[#allocation6] sm:$0xff] %vm324, %v2060
    %v2064 = vlaneseq
    %v2065 = vand.u32 %v2064, 127
    %vm2066 = vcmp.lt.s32.totalorder %v2065, 32
    %v2067 = vld [vmem:[#allocation5] sm:$0xff]
    %v2068 = vld [vmem:[#allocation5 + $0x8] sm:$0xff]
    %v2069 = vld [vmem:[#allocation5 + $0x10] sm:$0xff]
    %v2070 = vld [vmem:[#allocation5 + $0x18] sm:$0xff]
    %v2071 = vld [vmem:[#allocation5 + $0x20] sm:$0xff]
    %v2072 = vld [vmem:[#allocation5 + $0x28] sm:$0xff]
    %v2073 = vld [vmem:[#allocation5 + $0x30] sm:$0xff]
    %v2074 = vld [vmem:[#allocation5 + $0x38] sm:$0xff]
    %v2075 = vld [vmem:[#allocation6] sm:$0xff]
    %v2076 = vld [vmem:[#allocation6 + $0x8] sm:$0xff]
    %v2077 = vld [vmem:[#allocation6 + $0x10] sm:$0xff]
    %v2078 = vld [vmem:[#allocation6 + $0x18] sm:$0xff]
    %v2079 = vld [vmem:[#allocation6 + $0x20] sm:$0xff]
    %v2080 = vld [vmem:[#allocation6 + $0x28] sm:$0xff]
    %v2081 = vld [vmem:[#allocation6 + $0x30] sm:$0xff]
    %v2082 = vld [vmem:[#allocation6 + $0x38] sm:$0xff]
    %v2083 = vsel %vm2066, %v2067, %v2075
    %v2084 = vsel %vm2066, %v2068, %v2076
    %v2085 = vsel %vm2066, %v2069, %v2077
    %v2086 = vsel %vm2066, %v2070, %v2078
    %v2087 = vsel %vm2066, %v2071, %v2079
    %v2088 = vsel %vm2066, %v2072, %v2080
    %v2089 = vsel %vm2066, %v2073, %v2081
    %v2090 = vsel %vm2066, %v2074, %v2082
    %2091 = vst.msk [vmem:[#allocation11] sm:$0xff] %vm324, %v2083
    %2092 = vst.msk [vmem:[#allocation11 + $0x8] sm:$0xff] %vm324, %v2084
    %2093 = vst.msk [vmem:[#allocation11 + $0x10] sm:$0xff] %vm324, %v2085
    %2094 = vst.msk [vmem:[#allocation11 + $0x18] sm:$0xff] %vm324, %v2086
    %2095 = vst.msk [vmem:[#allocation11 + $0x20] sm:$0xff] %vm324, %v2087
    %2096 = vst.msk [vmem:[#allocation11 + $0x28] sm:$0xff] %vm324, %v2088
    %2097 = vst.msk [vmem:[#allocation11 + $0x30] sm:$0xff] %vm324, %v2089
    %2098 = vst.msk [vmem:[#allocation11 + $0x38] sm:$0xff] %vm324, %v2090
    %v2099 = vld [vmem:[%s8] sm:$0xff]
    %v2100 = vld [vmem:[%s8 + $0x8] sm:$0xff]
    %v2101 = vld [vmem:[%s8 + $0x10] sm:$0xff]
    %v2102 = vld [vmem:[%s8 + $0x18] sm:$0xff]
    %v2103 = vld [vmem:[%s8 + $0x20] sm:$0xff]
    %v2104 = vld [vmem:[%s8 + $0x28] sm:$0xff]
    %v2105 = vld [vmem:[%s8 + $0x30] sm:$0xff]
    %v2106 = vld [vmem:[%s8 + $0x38] sm:$0xff]
    %v2107 = vld [vmem:[#allocation7] sm:$0x1]
    %v2109 = vlaneseq
    %v2110 = vshrl.u32 %v2109, 7
    %v2111 = vsub.s32 0, %v2110
    %v2112 = vrot.slane %v2107, %v2111
    %v2115 = vsel %vm324, %v2083, 0
    %v2118 = vsel %vm324, %v2084, 0
    %v2121 = vsel %vm324, %v2085, 0
    %v2124 = vsel %vm324, %v2086, 0
    %v2127 = vsel %vm324, %v2087, 0
    %v2130 = vsel %vm324, %v2088, 0
    %v2133 = vsel %vm324, %v2089, 0
    %v2136 = vsel %vm324, %v2090, 0
    %2138 = vmatprep.subr.mxu0 0.0
    %2139 = vmatpush1.msra.mxu0 %v2099
    %2140 = vmatprep.subr.mxu0 0.0
    %2141 = vmatpush1.msra.mxu0 %v2100
    %2142 = vmatprep.subr.mxu0 0.0
    %2143 = vmatpush1.msra.mxu0 %v2101
    %2144 = vmatprep.subr.mxu0 0.0
    %2145 = vmatpush1.msra.mxu0 %v2102
    %2146 = vmatprep.subr.mxu0 0.0
    %2147 = vmatpush1.msra.mxu0 %v2103
    %2148 = vmatprep.subr.mxu0 0.0
    %2149 = vmatpush1.msra.mxu0 %v2104
    %2150 = vmatprep.subr.mxu0 0.0
    %2151 = vmatpush1.msra.mxu0 %v2105
    %2152 = vmatprep.subr.mxu0 0.0
    %2153 = vmatpush1.msra.mxu0 %v2106
    %2154 = vmatprep.subr.mxu0 0.0
    %2155 = vmatpush1.msra.mxu0 0.0
    %2156 = vmatprep.subr.mxu0 0.0
    %2157 = vmatpush1.msra.mxu0 0.0
    %2158 = vmatprep.subr.mxu0 0.0
    %2159 = vmatpush1.msra.mxu0 0.0
    %2160 = vmatprep.subr.mxu0 0.0
    %2161 = vmatpush1.msra.mxu0 0.0
    %2162 = vmatprep.subr.mxu0 0.0
    %2163 = vmatpush1.msra.mxu0 0.0
    %2164 = vmatprep.subr.mxu0 0.0
    %2165 = vmatpush1.msra.mxu0 0.0
    %2166 = vmatprep.subr.mxu0 0.0
    %2167 = vmatpush1.msra.mxu0 0.0
    %2168 = vmatprep.subr.mxu0 0.0
    %2169 = vmatpush1.msra.mxu0 0.0
    %2170 = vmatprep.subr.mxu0 0.0
    %2171 = vmatpush1.msra.mxu0 0.0
    %2172 = vmatprep.subr.mxu0 0.0
    %2173 = vmatpush1.msra.mxu0 0.0
    %2174 = vmatprep.subr.mxu0 0.0
    %2175 = vmatpush1.msra.mxu0 0.0
    %2176 = vmatprep.subr.mxu0 0.0
    %2177 = vmatpush1.msra.mxu0 0.0
    %2178 = vmatprep.subr.mxu0 0.0
    %2179 = vmatpush1.msra.mxu0 0.0
    %2180 = vmatprep.subr.mxu0 0.0
    %2181 = vmatpush1.msra.mxu0 0.0
    %2182 = vmatprep.subr.mxu0 0.0
    %2183 = vmatpush1.msra.mxu0 0.0
    %2184 = vmatprep.subr.mxu0 0.0
    %2185 = vmatpush1.msra.mxu0 0.0
    %2186 = vmatprep.subr.mxu0 0.0
    %2187 = vmatpush1.msra.mxu0 0.0
    %2188 = vmatprep.subr.mxu0 0.0
    %2189 = vmatpush1.msra.mxu0 0.0
    %2190 = vmatprep.subr.mxu0 0.0
    %2191 = vmatpush1.msra.mxu0 0.0
    %2192 = vmatprep.subr.mxu0 0.0
    %2193 = vmatpush1.msra.mxu0 0.0
    %2194 = vmatprep.subr.mxu0 0.0
    %2195 = vmatpush1.msra.mxu0 0.0
    %2196 = vmatprep.subr.mxu0 0.0
    %2197 = vmatpush1.msra.mxu0 0.0
    %2198 = vmatprep.subr.mxu0 0.0
    %2199 = vmatpush1.msra.mxu0 0.0
    %2200 = vmatprep.subr.mxu0 0.0
    %2201 = vmatpush1.msra.mxu0 0.0
    %2202 = vmatprep.mubr.f32.mxu0 0.0
    %2203 = vmatmul.mubr.f32.gmra.mrb[0].mxu0 %v2115
    %v2204 = vpop.f32.mrb[0].mxu0
    %v2205 = vadd.f32 %v2112, %v2204
    %v2206 = vpop.f32.mrb[0].mxu0
    %2207 = vmatprep.mubr.f32.mxu0 0.0
    %2208 = vmatmul.mubr.f32.gmra.mrb[0].mxu0 %v2118
    %v2209 = vpop.f32.mrb[0].mxu0
    %v2210 = vadd.f32 %v2112, %v2209
    %v2211 = vpop.f32.mrb[0].mxu0
    %2212 = vmatprep.mubr.f32.mxu0 0.0
    %2213 = vmatmul.mubr.f32.gmra.mrb[0].mxu0 %v2121
    %v2214 = vpop.f32.mrb[0].mxu0
    %v2215 = vadd.f32 %v2112, %v2214
    %v2216 = vpop.f32.mrb[0].mxu0
    %2217 = vmatprep.mubr.f32.mxu0 0.0
    %2218 = vmatmul.mubr.f32.gmra.mrb[0].mxu0 %v2124
    %v2219 = vpop.f32.mrb[0].mxu0
    %v2220 = vadd.f32 %v2112, %v2219
    %v2221 = vpop.f32.mrb[0].mxu0
    %2222 = vmatprep.mubr.f32.mxu0 0.0
    %2223 = vmatmul.mubr.f32.gmra.mrb[0].mxu0 %v2127
    %v2224 = vpop.f32.mrb[0].mxu0
    %v2225 = vadd.f32 %v2112, %v2224
    %v2226 = vpop.f32.mrb[0].mxu0
    %2227 = vmatprep.mubr.f32.mxu0 0.0
    %2228 = vmatmul.mubr.f32.gmra.mrb[0].mxu0 %v2130
    %v2229 = vpop.f32.mrb[0].mxu0
    %v2230 = vadd.f32 %v2112, %v2229
    %v2231 = vpop.f32.mrb[0].mxu0
    %2232 = vmatprep.mubr.f32.mxu0 0.0
    %2233 = vmatmul.mubr.f32.gmra.mrb[0].mxu0 %v2133
    %v2234 = vpop.f32.mrb[0].mxu0
    %v2235 = vadd.f32 %v2112, %v2234
    %v2236 = vpop.f32.mrb[0].mxu0
    %2237 = vmatprep.mubr.f32.mxu0 0.0
    %2238 = vmatmul.mubr.f32.gmra.mrb[0].mxu0 %v2136
    %v2239 = vpop.f32.mrb[0].mxu0
    %v2240 = vadd.f32 %v2112, %v2239
    %v2241 = vpop.f32.mrb[0].mxu0
    %2242 = vdwg.mxu0
    %v2243 = vxor.u32 %v2205, 2147483648
    %v2244 = vxor.u32 %v2210, 2147483648
    %v2245 = vxor.u32 %v2215, 2147483648
    %v2246 = vxor.u32 %v2220, 2147483648
    %v2247 = vxor.u32 %v2225, 2147483648
    %v2248 = vxor.u32 %v2230, 2147483648
    %v2249 = vxor.u32 %v2235, 2147483648
    %v2250 = vxor.u32 %v2240, 2147483648
    %v2251 = vmul.f32 %v2243, 1.442695
    %v2252 = vpow.pop %v2251
    %v2253 = vmul.f32 %v2244, 1.442695
    %v2254 = vpow.pop %v2253
    %v2255 = vmul.f32 %v2245, 1.442695
    %v2256 = vpow.pop %v2255
    %v2257 = vmul.f32 %v2246, 1.442695
    %v2258 = vpow.pop %v2257
    %v2259 = vmul.f32 %v2247, 1.442695
    %v2260 = vpow.pop %v2259
    %v2261 = vmul.f32 %v2248, 1.442695
    %v2262 = vpow.pop %v2261
    %v2263 = vmul.f32 %v2249, 1.442695
    %v2264 = vpow.pop %v2263
    %v2265 = vmul.f32 %v2250, 1.442695
    %v2266 = vpow.pop %v2265
    %v2267 = vadd.f32 %v2252, 1.0
    %v2268 = vadd.f32 %v2254, 1.0
    %v2269 = vadd.f32 %v2256, 1.0
    %v2270 = vadd.f32 %v2258, 1.0
    %v2271 = vadd.f32 %v2260, 1.0
    %v2272 = vadd.f32 %v2262, 1.0
    %v2273 = vadd.f32 %v2264, 1.0
    %v2274 = vadd.f32 %v2266, 1.0
    %v2275 = vrcp.pop %v2267
    %v2276 = vmul.f32 1.0, %v2275
    %v2277 = vrcp.pop %v2268
    %v2278 = vmul.f32 1.0, %v2277
    %v2279 = vrcp.pop %v2269
    %v2280 = vmul.f32 1.0, %v2279
    %v2281 = vrcp.pop %v2270
    %v2282 = vmul.f32 1.0, %v2281
    %v2283 = vrcp.pop %v2271
    %v2284 = vmul.f32 1.0, %v2283
    %v2285 = vrcp.pop %v2272
    %v2286 = vmul.f32 1.0, %v2285
    %v2287 = vrcp.pop %v2273
    %v2288 = vmul.f32 1.0, %v2287
    %v2289 = vrcp.pop %v2274
    %v2290 = vmul.f32 1.0, %v2289
    %vm2291 = vcmask 7168
    %v2292 = vsel %vm2291, %v2276, 0.0
    %v2293 = vsel %vm2291, %v2278, 0.0
    %v2294 = vadd.f32 %v2292, %v2293
    %v2295 = vsel %vm2291, %v2280, 0.0
    %v2296 = vadd.f32 %v2294, %v2295
    %v2297 = vsel %vm2291, %v2282, 0.0
    %v2298 = vadd.f32 %v2296, %v2297
    %v2299 = vsel %vm2291, %v2284, 0.0
    %v2300 = vadd.f32 %v2298, %v2299
    %v2301 = vsel %vm2291, %v2286, 0.0
    %v2302 = vadd.f32 %v2300, %v2301
    %v2303 = vsel %vm2291, %v2288, 0.0
    %v2304 = vadd.f32 %v2302, %v2303
    %v2305 = vsel %vm2291, %v2290, 0.0
    %v2306 = vadd.f32 %v2304, %v2305
    %v2307 = vrcp.pop 8.0
    %v2308 = vmul.f32 %v2306, %v2307
    %2309 = vst.msk [vmem:[%s11] sm:$0xff] %vm2291, %v2308
    // Predicated region
    $region46: #{tpu_custom_call.1} parent=1 // pred_check
      _
    $region47: #{tpu_custom_call.1} parent=1 // pred_check_branch
      %2311 = sbr.rel (0) target = $region49
    $region48: #{tpu_custom_call.1} parent=1 // pred_region
      %s2313 = ssub.s32 1024, 1024
      %2314 = vsyncadd [#allocation10], %s2313
      %s2315 = sshll.u32 [#allocation11], 4
      %s2316 = int_to_ptr.vmem [resolvable:$true] %s2315
      %2321 = dma.vmem_to_hbm [thread:$0]  %s2316, 1024, %s10, [#allocation10], 128, 128, 8
    $region49: #{tpu_custom_call.1} parent=1 // pred_fallthru
      _
    // Predicated region
    $region50: #{tpu_custom_call.1} parent=1 // pred_check
      _
    $region51: #{tpu_custom_call.1} parent=1 // pred_check_branch
      %2323 = sbr.rel (0) target = $region53
    $region52: #{tpu_custom_call.1} parent=1 // pred_region
      _
    $region53: #{tpu_custom_call.1} parent=1 // pred_fallthru
      _
    // Predicated region
    $region54: #{tpu_custom_call.1} parent=1 // pred_check
      _
    $region55: #{tpu_custom_call.1} parent=1 // pred_check_branch
      %2325 = sbr.rel (0) target = $region57
    $region56: #{tpu_custom_call.1} parent=1 // pred_region
      %2326 = dma.done [#allocation10], 1024
    $region57: #{tpu_custom_call.1} parent=1 // pred_fallthru
      _
    // Predicated region
    $region58: #{tpu_custom_call.1} parent=1 // pred_check
      _
    $region59: #{tpu_custom_call.1} parent=1 // pred_check_branch
      %2328 = sbr.rel (0) target = $region61
    $region60: #{tpu_custom_call.1} parent=1 // pred_region
      _
    $region61: #{tpu_custom_call.1} parent=1 // pred_fallthru
      _
    %2329 = vsyncpa [#allocation9], 1
    %2330 = vsyncpa [#allocation10], 1

</llo_original>
